<compile_context>
chip_gen: v6e
topology: v6e:2x2x1
jax: 0.10.0
libtpu: 0.0.40
codegen_flags: <defaults>
</compile_context>

<pallas_src>
import functools

import jax
import jax.numpy as jnp
from jax import lax
from jax.experimental import pallas as pl
from jax.experimental.pallas import tpu as pltpu

C = 64          # ResidualBlock channel count is fixed to 64 by the module
BN_EPS = 1e-5
NC_PAD = 128    # lane-dense padded logits width (sliced to num_classes outside)


# ----------------------------------------------------------------------------
# Fused Pallas kernel: n_blocks x ResidualBlock -> global avg pool -> Linear
# ----------------------------------------------------------------------------
def decoder_kernel(x_ref, w_ref, s_ref, b_ref, lw_ref, lb_ref, o_ref,
                   *, H, W, n_blocks):
    HW = H * W

    def conv3x3_bn(x_flat, p):
        """x_flat: (H*W, C) f32 -> conv3x3(SAME, no bias) + folded BN, f32 output."""
        xs = x_flat.reshape(H, W, C)
        # Build the 1-px zero halo in-register (no jnp.pad, no scratch round trip).
        zrow = jnp.zeros((1, W, C), jnp.float32)
        xp = jnp.concatenate([zrow, xs, zrow], axis=0)             # (H+2, W, C)
        zcol = jnp.zeros((H + 2, 1, C), jnp.float32)
        xp = jnp.concatenate([zcol, xp, zcol], axis=1)             # (H+2, W+2, C)
        # im2col: one (H*W, 9*C) x (9*C, C) MXU matmul, bf16 operands, f32 accum.
        pmat = jnp.concatenate(
            [xp[dy:dy + H, dx:dx + W, :].reshape(HW, C)
             for dy in range(3) for dx in range(3)], axis=1)        # (HW, 9*C)
        acc = jnp.dot(pmat.astype(jnp.bfloat16), w_ref[p],
                      preferred_element_type=jnp.float32)           # (HW, C) f32
        return acc * s_ref[p:p + 1, :] + b_ref[p:p + 1, :]          # folded BN (f32)

    x = x_ref[0].reshape(HW, C)                                     # (HW, C) f32
    for blk in range(n_blocks):
        h = jnp.maximum(conv3x3_bn(x, 2 * blk), 0.0)                # conv1 + BN1 + ReLU
        h = conv3x3_bn(h, 2 * blk + 1)                              # conv2 + BN2
        x = jnp.maximum(h + x, 0.0)                                 # identity + ReLU

    # Global average pool as an MXU matmul, then Linear into a 128-lane padded output.
    pool = jnp.full((1, HW), 1.0 / HW, jnp.float32)
    pooled = jnp.dot(pool, x, preferred_element_type=jnp.float32)   # (1, C)
    o_ref[0] = (jnp.dot(pooled, lw_ref[...],
                        preferred_element_type=jnp.float32) + lb_ref[...])


# ----------------------------------------------------------------------------
# Wrapper / parameter glue
# ----------------------------------------------------------------------------
def bn_fold(gamma, beta, mean, var):
    scale = gamma / jnp.sqrt(var + BN_EPS)
    return scale, beta - mean * scale


def conv_oihw_to_im2col(w_oihw):
    # (C_out, C_in, 3, 3) -> (9*C_in, C_out), rows ordered [ky*3+kx, ci]
    return jnp.transpose(w_oihw, (2, 3, 1, 0)).reshape(9 * C, C)


def resnet_decoder_forward(x_nchw, block_params, lin_w_t, lin_b):
    """Full ResNetDecoder forward.  x_nchw: (B, 64, H, W) float32."""
    B, _, H, W = x_nchw.shape
    n_blocks = len(block_params)
    nc = lin_w_t.shape[1]

    x = jnp.transpose(x_nchw, (0, 2, 3, 1)).astype(jnp.float32)     # NCHW -> NHWC

    ws, ss, bs = [], [], []
    for p in block_params:
        ws.append(conv_oihw_to_im2col(p["w1"]))
        s, b = bn_fold(p["g1"], p["be1"], p["m1"], p["v1"]); ss.append(s); bs.append(b)
        ws.append(conv_oihw_to_im2col(p["w2"]))
        s, b = bn_fold(p["g2"], p["be2"], p["m2"], p["v2"]); ss.append(s); bs.append(b)
    conv_w = jnp.stack(ws).astype(jnp.bfloat16)                     # (2*nb, 9*C, C) bf16
    bn_s = jnp.stack(ss).astype(jnp.float32)                        # (2*nb, C) f32
    bn_b = jnp.stack(bs).astype(jnp.float32)                        # (2*nb, C) f32

    lw = jnp.zeros((C, NC_PAD), jnp.float32).at[:, :nc].set(lin_w_t)
    lb = jnp.zeros((1, NC_PAD), jnp.float32).at[0, :nc].set(lin_b)

    out = pl.pallas_call(
        functools.partial(decoder_kernel, H=H, W=W, n_blocks=n_blocks),
        out_shape=jax.ShapeDtypeStruct((B, 1, NC_PAD), jnp.float32),
        grid_spec=pltpu.PrefetchScalarGridSpec(
            num_scalar_prefetch=0,
            grid=(B,),
            in_specs=[
                pl.BlockSpec((1, H, W, C), lambda b: (b, 0, 0, 0)),
                pl.BlockSpec((2 * n_blocks, 9 * C, C), lambda b: (0, 0, 0)),
                pl.BlockSpec((2 * n_blocks, C), lambda b: (0, 0)),
                pl.BlockSpec((2 * n_blocks, C), lambda b: (0, 0)),
                pl.BlockSpec((C, NC_PAD), lambda b: (0, 0)),
                pl.BlockSpec((1, NC_PAD), lambda b: (0, 0)),
            ],
            out_specs=pl.BlockSpec((1, 1, NC_PAD), lambda b: (b, 0, 0)),
        ),
        compiler_params=pltpu.CompilerParams(
            dimension_semantics=("parallel",)),
    )(x, conv_w, bn_s, bn_b, lw, lb)
    return out[:, 0, :nc]


# ----------------------------------------------------------------------------
# Pure-JAX reference (f32 convs) for correctness check
# ----------------------------------------------------------------------------
def _conv3x3_ref(x_nhwc, w_oihw):
    w_hwio = jnp.transpose(w_oihw, (2, 3, 1, 0))
    return lax.conv_general_dilated(
        x_nhwc, w_hwio, window_strides=(1, 1), padding="SAME",
        dimension_numbers=("NHWC", "HWIO", "NHWC"))


def _ref_forward(x_nchw, block_params, lin_w_t, lin_b):
    x = jnp.transpose(x_nchw, (0, 2, 3, 1)).astype(jnp.float32)
    for p in block_params:
        s1, b1 = bn_fold(p["g1"], p["be1"], p["m1"], p["v1"])
        s2, b2 = bn_fold(p["g2"], p["be2"], p["m2"], p["v2"])
        h = jnp.maximum(_conv3x3_ref(x, p["w1"]) * s1 + b1, 0.0)
        h = _conv3x3_ref(h, p["w2"]) * s2 + b2
        x = jnp.maximum(h + x, 0.0)
    m = jnp.mean(x, axis=(1, 2))
    return m @ lin_w_t + lin_b


# ----------------------------------------------------------------------------
# Main
# ----------------------------------------------------------------------------
if __name__ == "__main__":
    key = jax.random.PRNGKey(0)
    B, H, W = 2, 8, 8
    n, num_classes = 3, 10          # variant='alpha' -> n-1 = 2 residual blocks
    n_blocks = n - 1

    key, kx = jax.random.split(key)
    x = jax.random.normal(kx, (B, C, H, W), jnp.float32)      # PyTorch-style NCHW input

    block_params = []
    for _ in range(n_blocks):
        ks = jax.random.split(key, 11)
        key = ks[0]
        block_params.append(dict(
            w1=0.05 * jax.random.normal(ks[1], (C, C, 3, 3), jnp.float32),
            g1=1.0 + 0.1 * jax.random.normal(ks[2], (C,), jnp.float32),
            be1=0.1 * jax.random.normal(ks[3], (C,), jnp.float32),
            m1=0.1 * jax.random.normal(ks[4], (C,), jnp.float32),
            v1=1.0 + 0.1 * jnp.abs(jax.random.normal(ks[5], (C,), jnp.float32)),
            w2=0.05 * jax.random.normal(ks[6], (C, C, 3, 3), jnp.float32),
            g2=1.0 + 0.1 * jax.random.normal(ks[7], (C,), jnp.float32),
            be2=0.1 * jax.random.normal(ks[8], (C,), jnp.float32),
            m2=0.1 * jax.random.normal(ks[9], (C,), jnp.float32),
            v2=1.0 + 0.1 * jnp.abs(jax.random.normal(ks[10], (C,), jnp.float32)),
        ))

    key, kw, kb = jax.random.split(key, 3)
    lin_w_t = 0.1 * jax.random.normal(kw, (C, num_classes), jnp.float32)  # (64, nc) = W.T
    lin_b = 0.1 * jax.random.normal(kb, (num_classes,), jnp.float32)

    out = resnet_decoder_forward(x, block_params, lin_w_t, lin_b)
    out = jax.block_until_ready(out)

    ref = jax.block_until_ready(_ref_forward(x, block_params, lin_w_t, lin_b))
    assert out.shape == (B, num_classes)
    # bf16 conv operands (f32 accumulation) -> looser tolerance than the pure-f32 version.
    assert jnp.allclose(out, ref, rtol=2e-2, atol=2e-2), (
        f"mismatch: max abs err = {jnp.max(jnp.abs(out - ref))}")

    print("KERNEL_OK")
</pallas_src>

<mosaic_0001>
module attributes {stable_mosaic.version = 11 : i64} {
  func.func @decoder_kernel(%arg0: i32, %arg1: memref<1x8x8x64xf32, #tpu.memory_space<vmem>>, %arg2: memref<4x576x64xbf16, #tpu.memory_space<vmem>>, %arg3: memref<4x64xf32, #tpu.memory_space<vmem>>, %arg4: memref<4x64xf32, #tpu.memory_space<vmem>>, %arg5: memref<64x128xf32, #tpu.memory_space<vmem>>, %arg6: memref<1x128xf32, #tpu.memory_space<vmem>>, %arg7: memref<1x1x128xf32, #tpu.memory_space<vmem>>) attributes {dimension_semantics = [#tpu.dimension_semantics<parallel>], iteration_bounds = array<i64: 2>, scalar_prefetch = 0 : i64, scratch_operands = 0 : i64, tpu.core_type = #tpu.core_type<tc>, window_params = [{transform_indices = @transform_0, window_bounds = array<i64: 1, 8, 8, 64>}, {pipeline_mode = #tpu.pipeline_mode<synchronous>, transform_indices = @transform_1, window_bounds = array<i64: 4, 576, 64>}, {pipeline_mode = #tpu.pipeline_mode<synchronous>, transform_indices = @transform_2, window_bounds = array<i64: 4, 64>}, {pipeline_mode = #tpu.pipeline_mode<synchronous>, transform_indices = @transform_3, window_bounds = array<i64: 4, 64>}, {pipeline_mode = #tpu.pipeline_mode<synchronous>, transform_indices = @transform_4, window_bounds = array<i64: 64, 128>}, {pipeline_mode = #tpu.pipeline_mode<synchronous>, transform_indices = @transform_5, window_bounds = array<i64: 1, 128>}, {transform_indices = @transform_6, window_bounds = array<i64: 1, 1, 128>}]} {
    %c0 = arith.constant 0 : index
    %c0_0 = arith.constant 0 : index
    %c0_1 = arith.constant 0 : index
    %c0_2 = arith.constant 0 : index
    %0 = vector.load %arg1[%c0, %c0_0, %c0_1, %c0_2] : memref<1x8x8x64xf32, #tpu.memory_space<vmem>>, vector<1x8x8x64xf32>
    %1 = vector.shape_cast %0 : vector<1x8x8x64xf32> to vector<8x8x64xf32>
    %2 = vector.shape_cast %1 : vector<8x8x64xf32> to vector<64x64xf32>
    %3 = vector.shape_cast %2 : vector<64x64xf32> to vector<8x8x64xf32>
    %cst = arith.constant 0.000000e+00 : f32
    %4 = vector.broadcast %cst : f32 to vector<1x8x64xf32>
    %5 = tpu.concatenate %4, %3, %4 in 0 : vector<1x8x64xf32>, vector<8x8x64xf32>, vector<1x8x64xf32> -> vector<10x8x64xf32>
    %cst_3 = arith.constant 0.000000e+00 : f32
    %6 = vector.broadcast %cst_3 : f32 to vector<10x1x64xf32>
    %7 = tpu.concatenate %6, %5, %6 in 1 : vector<10x1x64xf32>, vector<10x8x64xf32>, vector<10x1x64xf32> -> vector<10x10x64xf32>
    %8 = vector.extract_strided_slice %7 {offsets = [0, 0, 0], sizes = [8, 8, 64], strides = [1, 1, 1]} : vector<10x10x64xf32> to vector<8x8x64xf32>
    %9 = vector.shape_cast %8 : vector<8x8x64xf32> to vector<64x64xf32>
    %10 = vector.extract_strided_slice %7 {offsets = [0, 1, 0], sizes = [8, 8, 64], strides = [1, 1, 1]} : vector<10x10x64xf32> to vector<8x8x64xf32>
    %11 = vector.shape_cast %10 : vector<8x8x64xf32> to vector<64x64xf32>
    %12 = vector.extract_strided_slice %7 {offsets = [0, 2, 0], sizes = [8, 8, 64], strides = [1, 1, 1]} : vector<10x10x64xf32> to vector<8x8x64xf32>
    %13 = vector.shape_cast %12 : vector<8x8x64xf32> to vector<64x64xf32>
    %14 = vector.extract_strided_slice %7 {offsets = [1, 0, 0], sizes = [8, 8, 64], strides = [1, 1, 1]} : vector<10x10x64xf32> to vector<8x8x64xf32>
    %15 = vector.shape_cast %14 : vector<8x8x64xf32> to vector<64x64xf32>
    %16 = vector.extract_strided_slice %7 {offsets = [1, 1, 0], sizes = [8, 8, 64], strides = [1, 1, 1]} : vector<10x10x64xf32> to vector<8x8x64xf32>
    %17 = vector.shape_cast %16 : vector<8x8x64xf32> to vector<64x64xf32>
    %18 = vector.extract_strided_slice %7 {offsets = [1, 2, 0], sizes = [8, 8, 64], strides = [1, 1, 1]} : vector<10x10x64xf32> to vector<8x8x64xf32>
    %19 = vector.shape_cast %18 : vector<8x8x64xf32> to vector<64x64xf32>
    %20 = vector.extract_strided_slice %7 {offsets = [2, 0, 0], sizes = [8, 8, 64], strides = [1, 1, 1]} : vector<10x10x64xf32> to vector<8x8x64xf32>
    %21 = vector.shape_cast %20 : vector<8x8x64xf32> to vector<64x64xf32>
    %22 = vector.extract_strided_slice %7 {offsets = [2, 1, 0], sizes = [8, 8, 64], strides = [1, 1, 1]} : vector<10x10x64xf32> to vector<8x8x64xf32>
    %23 = vector.shape_cast %22 : vector<8x8x64xf32> to vector<64x64xf32>
    %24 = vector.extract_strided_slice %7 {offsets = [2, 2, 0], sizes = [8, 8, 64], strides = [1, 1, 1]} : vector<10x10x64xf32> to vector<8x8x64xf32>
    %25 = vector.shape_cast %24 : vector<8x8x64xf32> to vector<64x64xf32>
    %26 = tpu.concatenate %9, %11, %13, %15, %17, %19, %21, %23, %25 in 1 : vector<64x64xf32>, vector<64x64xf32>, vector<64x64xf32>, vector<64x64xf32>, vector<64x64xf32>, vector<64x64xf32>, vector<64x64xf32>, vector<64x64xf32>, vector<64x64xf32> -> vector<64x576xf32>
    %27 = arith.truncf %26 : vector<64x576xf32> to vector<64x576xbf16>
    %c0_4 = arith.constant 0 : index
    %c0_5 = arith.constant 0 : index
    %c0_6 = arith.constant 0 : index
    %28 = vector.load %arg2[%c0_4, %c0_5, %c0_6] : memref<4x576x64xbf16, #tpu.memory_space<vmem>>, vector<1x576x64xbf16>
    %29 = vector.shape_cast %28 : vector<1x576x64xbf16> to vector<576x64xbf16>
    %cst_7 = arith.constant dense<0.000000e+00> : vector<64x64xf32>
    %30 = tpu.matmul %27, %29, %cst_7 {dimension_numbers = #tpu.dot_dimension_numbers<[1], [0], [0], [1], [0, 0, 1, 1], [], []>} : vector<64x576xbf16>, vector<576x64xbf16>, vector<64x64xf32> -> vector<64x64xf32>
    %c0_8 = arith.constant 0 : index
    %c0_9 = arith.constant 0 : index
    %31 = vector.load %arg3[%c0_8, %c0_9] : memref<4x64xf32, #tpu.memory_space<vmem>>, vector<1x64xf32>
    %32 = vector.broadcast %31 : vector<1x64xf32> to vector<64x64xf32>
    %33 = arith.mulf %30, %32 : vector<64x64xf32>
    %c0_10 = arith.constant 0 : index
    %c0_11 = arith.constant 0 : index
    %34 = vector.load %arg4[%c0_10, %c0_11] : memref<4x64xf32, #tpu.memory_space<vmem>>, vector<1x64xf32>
    %35 = vector.broadcast %34 : vector<1x64xf32> to vector<64x64xf32>
    %36 = arith.addf %33, %35 : vector<64x64xf32>
    %cst_12 = arith.constant 0.000000e+00 : f32
    %37 = vector.broadcast %cst_12 : f32 to vector<64x64xf32>
    %38 = arith.maximumf %36, %37 : vector<64x64xf32>
    %39 = vector.shape_cast %38 : vector<64x64xf32> to vector<8x8x64xf32>
    %cst_13 = arith.constant 0.000000e+00 : f32
    %40 = vector.broadcast %cst_13 : f32 to vector<1x8x64xf32>
    %41 = tpu.concatenate %40, %39, %40 in 0 : vector<1x8x64xf32>, vector<8x8x64xf32>, vector<1x8x64xf32> -> vector<10x8x64xf32>
    %cst_14 = arith.constant 0.000000e+00 : f32
    %42 = vector.broadcast %cst_14 : f32 to vector<10x1x64xf32>
    %43 = tpu.concatenate %42, %41, %42 in 1 : vector<10x1x64xf32>, vector<10x8x64xf32>, vector<10x1x64xf32> -> vector<10x10x64xf32>
    %44 = vector.extract_strided_slice %43 {offsets = [0, 0, 0], sizes = [8, 8, 64], strides = [1, 1, 1]} : vector<10x10x64xf32> to vector<8x8x64xf32>
    %45 = vector.shape_cast %44 : vector<8x8x64xf32> to vector<64x64xf32>
    %46 = vector.extract_strided_slice %43 {offsets = [0, 1, 0], sizes = [8, 8, 64], strides = [1, 1, 1]} : vector<10x10x64xf32> to vector<8x8x64xf32>
    %47 = vector.shape_cast %46 : vector<8x8x64xf32> to vector<64x64xf32>
    %48 = vector.extract_strided_slice %43 {offsets = [0, 2, 0], sizes = [8, 8, 64], strides = [1, 1, 1]} : vector<10x10x64xf32> to vector<8x8x64xf32>
    %49 = vector.shape_cast %48 : vector<8x8x64xf32> to vector<64x64xf32>
    %50 = vector.extract_strided_slice %43 {offsets = [1, 0, 0], sizes = [8, 8, 64], strides = [1, 1, 1]} : vector<10x10x64xf32> to vector<8x8x64xf32>
    %51 = vector.shape_cast %50 : vector<8x8x64xf32> to vector<64x64xf32>
    %52 = vector.extract_strided_slice %43 {offsets = [1, 1, 0], sizes = [8, 8, 64], strides = [1, 1, 1]} : vector<10x10x64xf32> to vector<8x8x64xf32>
    %53 = vector.shape_cast %52 : vector<8x8x64xf32> to vector<64x64xf32>
    %54 = vector.extract_strided_slice %43 {offsets = [1, 2, 0], sizes = [8, 8, 64], strides = [1, 1, 1]} : vector<10x10x64xf32> to vector<8x8x64xf32>
    %55 = vector.shape_cast %54 : vector<8x8x64xf32> to vector<64x64xf32>
    %56 = vector.extract_strided_slice %43 {offsets = [2, 0, 0], sizes = [8, 8, 64], strides = [1, 1, 1]} : vector<10x10x64xf32> to vector<8x8x64xf32>
    %57 = vector.shape_cast %56 : vector<8x8x64xf32> to vector<64x64xf32>
    %58 = vector.extract_strided_slice %43 {offsets = [2, 1, 0], sizes = [8, 8, 64], strides = [1, 1, 1]} : vector<10x10x64xf32> to vector<8x8x64xf32>
    %59 = vector.shape_cast %58 : vector<8x8x64xf32> to vector<64x64xf32>
    %60 = vector.extract_strided_slice %43 {offsets = [2, 2, 0], sizes = [8, 8, 64], strides = [1, 1, 1]} : vector<10x10x64xf32> to vector<8x8x64xf32>
    %61 = vector.shape_cast %60 : vector<8x8x64xf32> to vector<64x64xf32>
    %62 = tpu.concatenate %45, %47, %49, %51, %53, %55, %57, %59, %61 in 1 : vector<64x64xf32>, vector<64x64xf32>, vector<64x64xf32>, vector<64x64xf32>, vector<64x64xf32>, vector<64x64xf32>, vector<64x64xf32>, vector<64x64xf32>, vector<64x64xf32> -> vector<64x576xf32>
    %63 = arith.truncf %62 : vector<64x576xf32> to vector<64x576xbf16>
    %c1 = arith.constant 1 : index
    %c0_15 = arith.constant 0 : index
    %c0_16 = arith.constant 0 : index
    %64 = vector.load %arg2[%c1, %c0_15, %c0_16] : memref<4x576x64xbf16, #tpu.memory_space<vmem>>, vector<1x576x64xbf16>
    %65 = vector.shape_cast %64 : vector<1x576x64xbf16> to vector<576x64xbf16>
    %cst_17 = arith.constant dense<0.000000e+00> : vector<64x64xf32>
    %66 = tpu.matmul %63, %65, %cst_17 {dimension_numbers = #tpu.dot_dimension_numbers<[1], [0], [0], [1], [0, 0, 1, 1], [], []>} : vector<64x576xbf16>, vector<576x64xbf16>, vector<64x64xf32> -> vector<64x64xf32>
    %c1_18 = arith.constant 1 : index
    %c0_19 = arith.constant 0 : index
    %67 = vector.load %arg3[%c1_18, %c0_19] : memref<4x64xf32, #tpu.memory_space<vmem>>, vector<1x64xf32>
    %68 = vector.broadcast %67 : vector<1x64xf32> to vector<64x64xf32>
    %69 = arith.mulf %66, %68 : vector<64x64xf32>
    %c1_20 = arith.constant 1 : index
    %c0_21 = arith.constant 0 : index
    %70 = vector.load %arg4[%c1_20, %c0_21] : memref<4x64xf32, #tpu.memory_space<vmem>>, vector<1x64xf32>
    %71 = vector.broadcast %70 : vector<1x64xf32> to vector<64x64xf32>
    %72 = arith.addf %69, %71 : vector<64x64xf32>
    %73 = arith.addf %72, %2 : vector<64x64xf32>
    %cst_22 = arith.constant 0.000000e+00 : f32
    %74 = vector.broadcast %cst_22 : f32 to vector<64x64xf32>
    %75 = arith.maximumf %73, %74 : vector<64x64xf32>
    %76 = vector.shape_cast %75 : vector<64x64xf32> to vector<8x8x64xf32>
    %cst_23 = arith.constant 0.000000e+00 : f32
    %77 = vector.broadcast %cst_23 : f32 to vector<1x8x64xf32>
    %78 = tpu.concatenate %77, %76, %77 in 0 : vector<1x8x64xf32>, vector<8x8x64xf32>, vector<1x8x64xf32> -> vector<10x8x64xf32>
    %cst_24 = arith.constant 0.000000e+00 : f32
    %79 = vector.broadcast %cst_24 : f32 to vector<10x1x64xf32>
    %80 = tpu.concatenate %79, %78, %79 in 1 : vector<10x1x64xf32>, vector<10x8x64xf32>, vector<10x1x64xf32> -> vector<10x10x64xf32>
    %81 = vector.extract_strided_slice %80 {offsets = [0, 0, 0], sizes = [8, 8, 64], strides = [1, 1, 1]} : vector<10x10x64xf32> to vector<8x8x64xf32>
    %82 = vector.shape_cast %81 : vector<8x8x64xf32> to vector<64x64xf32>
    %83 = vector.extract_strided_slice %80 {offsets = [0, 1, 0], sizes = [8, 8, 64], strides = [1, 1, 1]} : vector<10x10x64xf32> to vector<8x8x64xf32>
    %84 = vector.shape_cast %83 : vector<8x8x64xf32> to vector<64x64xf32>
    %85 = vector.extract_strided_slice %80 {offsets = [0, 2, 0], sizes = [8, 8, 64], strides = [1, 1, 1]} : vector<10x10x64xf32> to vector<8x8x64xf32>
    %86 = vector.shape_cast %85 : vector<8x8x64xf32> to vector<64x64xf32>
    %87 = vector.extract_strided_slice %80 {offsets = [1, 0, 0], sizes = [8, 8, 64], strides = [1, 1, 1]} : vector<10x10x64xf32> to vector<8x8x64xf32>
    %88 = vector.shape_cast %87 : vector<8x8x64xf32> to vector<64x64xf32>
    %89 = vector.extract_strided_slice %80 {offsets = [1, 1, 0], sizes = [8, 8, 64], strides = [1, 1, 1]} : vector<10x10x64xf32> to vector<8x8x64xf32>
    %90 = vector.shape_cast %89 : vector<8x8x64xf32> to vector<64x64xf32>
    %91 = vector.extract_strided_slice %80 {offsets = [1, 2, 0], sizes = [8, 8, 64], strides = [1, 1, 1]} : vector<10x10x64xf32> to vector<8x8x64xf32>
    %92 = vector.shape_cast %91 : vector<8x8x64xf32> to vector<64x64xf32>
    %93 = vector.extract_strided_slice %80 {offsets = [2, 0, 0], sizes = [8, 8, 64], strides = [1, 1, 1]} : vector<10x10x64xf32> to vector<8x8x64xf32>
    %94 = vector.shape_cast %93 : vector<8x8x64xf32> to vector<64x64xf32>
    %95 = vector.extract_strided_slice %80 {offsets = [2, 1, 0], sizes = [8, 8, 64], strides = [1, 1, 1]} : vector<10x10x64xf32> to vector<8x8x64xf32>
    %96 = vector.shape_cast %95 : vector<8x8x64xf32> to vector<64x64xf32>
    %97 = vector.extract_strided_slice %80 {offsets = [2, 2, 0], sizes = [8, 8, 64], strides = [1, 1, 1]} : vector<10x10x64xf32> to vector<8x8x64xf32>
    %98 = vector.shape_cast %97 : vector<8x8x64xf32> to vector<64x64xf32>
    %99 = tpu.concatenate %82, %84, %86, %88, %90, %92, %94, %96, %98 in 1 : vector<64x64xf32>, vector<64x64xf32>, vector<64x64xf32>, vector<64x64xf32>, vector<64x64xf32>, vector<64x64xf32>, vector<64x64xf32>, vector<64x64xf32>, vector<64x64xf32> -> vector<64x576xf32>
    %100 = arith.truncf %99 : vector<64x576xf32> to vector<64x576xbf16>
    %c2 = arith.constant 2 : index
    %c0_25 = arith.constant 0 : index
    %c0_26 = arith.constant 0 : index
    %101 = vector.load %arg2[%c2, %c0_25, %c0_26] : memref<4x576x64xbf16, #tpu.memory_space<vmem>>, vector<1x576x64xbf16>
    %102 = vector.shape_cast %101 : vector<1x576x64xbf16> to vector<576x64xbf16>
    %cst_27 = arith.constant dense<0.000000e+00> : vector<64x64xf32>
    %103 = tpu.matmul %100, %102, %cst_27 {dimension_numbers = #tpu.dot_dimension_numbers<[1], [0], [0], [1], [0, 0, 1, 1], [], []>} : vector<64x576xbf16>, vector<576x64xbf16>, vector<64x64xf32> -> vector<64x64xf32>
    %c2_28 = arith.constant 2 : index
    %c0_29 = arith.constant 0 : index
    %104 = vector.load %arg3[%c2_28, %c0_29] : memref<4x64xf32, #tpu.memory_space<vmem>>, vector<1x64xf32>
    %105 = vector.broadcast %104 : vector<1x64xf32> to vector<64x64xf32>
    %106 = arith.mulf %103, %105 : vector<64x64xf32>
    %c2_30 = arith.constant 2 : index
    %c0_31 = arith.constant 0 : index
    %107 = vector.load %arg4[%c2_30, %c0_31] : memref<4x64xf32, #tpu.memory_space<vmem>>, vector<1x64xf32>
    %108 = vector.broadcast %107 : vector<1x64xf32> to vector<64x64xf32>
    %109 = arith.addf %106, %108 : vector<64x64xf32>
    %cst_32 = arith.constant 0.000000e+00 : f32
    %110 = vector.broadcast %cst_32 : f32 to vector<64x64xf32>
    %111 = arith.maximumf %109, %110 : vector<64x64xf32>
    %112 = vector.shape_cast %111 : vector<64x64xf32> to vector<8x8x64xf32>
    %cst_33 = arith.constant 0.000000e+00 : f32
    %113 = vector.broadcast %cst_33 : f32 to vector<1x8x64xf32>
    %114 = tpu.concatenate %113, %112, %113 in 0 : vector<1x8x64xf32>, vector<8x8x64xf32>, vector<1x8x64xf32> -> vector<10x8x64xf32>
    %cst_34 = arith.constant 0.000000e+00 : f32
    %115 = vector.broadcast %cst_34 : f32 to vector<10x1x64xf32>
    %116 = tpu.concatenate %115, %114, %115 in 1 : vector<10x1x64xf32>, vector<10x8x64xf32>, vector<10x1x64xf32> -> vector<10x10x64xf32>
    %117 = vector.extract_strided_slice %116 {offsets = [0, 0, 0], sizes = [8, 8, 64], strides = [1, 1, 1]} : vector<10x10x64xf32> to vector<8x8x64xf32>
    %118 = vector.shape_cast %117 : vector<8x8x64xf32> to vector<64x64xf32>
    %119 = vector.extract_strided_slice %116 {offsets = [0, 1, 0], sizes = [8, 8, 64], strides = [1, 1, 1]} : vector<10x10x64xf32> to vector<8x8x64xf32>
    %120 = vector.shape_cast %119 : vector<8x8x64xf32> to vector<64x64xf32>
    %121 = vector.extract_strided_slice %116 {offsets = [0, 2, 0], sizes = [8, 8, 64], strides = [1, 1, 1]} : vector<10x10x64xf32> to vector<8x8x64xf32>
    %122 = vector.shape_cast %121 : vector<8x8x64xf32> to vector<64x64xf32>
    %123 = vector.extract_strided_slice %116 {offsets = [1, 0, 0], sizes = [8, 8, 64], strides = [1, 1, 1]} : vector<10x10x64xf32> to vector<8x8x64xf32>
    %124 = vector.shape_cast %123 : vector<8x8x64xf32> to vector<64x64xf32>
    %125 = vector.extract_strided_slice %116 {offsets = [1, 1, 0], sizes = [8, 8, 64], strides = [1, 1, 1]} : vector<10x10x64xf32> to vector<8x8x64xf32>
    %126 = vector.shape_cast %125 : vector<8x8x64xf32> to vector<64x64xf32>
    %127 = vector.extract_strided_slice %116 {offsets = [1, 2, 0], sizes = [8, 8, 64], strides = [1, 1, 1]} : vector<10x10x64xf32> to vector<8x8x64xf32>
    %128 = vector.shape_cast %127 : vector<8x8x64xf32> to vector<64x64xf32>
    %129 = vector.extract_strided_slice %116 {offsets = [2, 0, 0], sizes = [8, 8, 64], strides = [1, 1, 1]} : vector<10x10x64xf32> to vector<8x8x64xf32>
    %130 = vector.shape_cast %129 : vector<8x8x64xf32> to vector<64x64xf32>
    %131 = vector.extract_strided_slice %116 {offsets = [2, 1, 0], sizes = [8, 8, 64], strides = [1, 1, 1]} : vector<10x10x64xf32> to vector<8x8x64xf32>
    %132 = vector.shape_cast %131 : vector<8x8x64xf32> to vector<64x64xf32>
    %133 = vector.extract_strided_slice %116 {offsets = [2, 2, 0], sizes = [8, 8, 64], strides = [1, 1, 1]} : vector<10x10x64xf32> to vector<8x8x64xf32>
    %134 = vector.shape_cast %133 : vector<8x8x64xf32> to vector<64x64xf32>
    %135 = tpu.concatenate %118, %120, %122, %124, %126, %128, %130, %132, %134 in 1 : vector<64x64xf32>, vector<64x64xf32>, vector<64x64xf32>, vector<64x64xf32>, vector<64x64xf32>, vector<64x64xf32>, vector<64x64xf32>, vector<64x64xf32>, vector<64x64xf32> -> vector<64x576xf32>
    %136 = arith.truncf %135 : vector<64x576xf32> to vector<64x576xbf16>
    %c3 = arith.constant 3 : index
    %c0_35 = arith.constant 0 : index
    %c0_36 = arith.constant 0 : index
    %137 = vector.load %arg2[%c3, %c0_35, %c0_36] : memref<4x576x64xbf16, #tpu.memory_space<vmem>>, vector<1x576x64xbf16>
    %138 = vector.shape_cast %137 : vector<1x576x64xbf16> to vector<576x64xbf16>
    %cst_37 = arith.constant dense<0.000000e+00> : vector<64x64xf32>
    %139 = tpu.matmul %136, %138, %cst_37 {dimension_numbers = #tpu.dot_dimension_numbers<[1], [0], [0], [1], [0, 0, 1, 1], [], []>} : vector<64x576xbf16>, vector<576x64xbf16>, vector<64x64xf32> -> vector<64x64xf32>
    %c3_38 = arith.constant 3 : index
    %c0_39 = arith.constant 0 : index
    %140 = vector.load %arg3[%c3_38, %c0_39] : memref<4x64xf32, #tpu.memory_space<vmem>>, vector<1x64xf32>
    %141 = vector.broadcast %140 : vector<1x64xf32> to vector<64x64xf32>
    %142 = arith.mulf %139, %141 : vector<64x64xf32>
    %c3_40 = arith.constant 3 : index
    %c0_41 = arith.constant 0 : index
    %143 = vector.load %arg4[%c3_40, %c0_41] : memref<4x64xf32, #tpu.memory_space<vmem>>, vector<1x64xf32>
    %144 = vector.broadcast %143 : vector<1x64xf32> to vector<64x64xf32>
    %145 = arith.addf %142, %144 : vector<64x64xf32>
    %146 = arith.addf %145, %75 : vector<64x64xf32>
    %cst_42 = arith.constant 0.000000e+00 : f32
    %147 = vector.broadcast %cst_42 : f32 to vector<64x64xf32>
    %148 = arith.maximumf %146, %147 : vector<64x64xf32>
    %cst_43 = arith.constant 1.562500e-02 : f32
    %149 = vector.broadcast %cst_43 : f32 to vector<1x64xf32>
    %cst_44 = arith.constant dense<0.000000e+00> : vector<1x64xf32>
    %150 = tpu.matmul %149, %148, %cst_44 {dimension_numbers = #tpu.dot_dimension_numbers<[1], [0], [0], [1], [0, 0, 1, 1], [], []>} : vector<1x64xf32>, vector<64x64xf32>, vector<1x64xf32> -> vector<1x64xf32>
    %c0_45 = arith.constant 0 : index
    %c0_46 = arith.constant 0 : index
    %151 = vector.load %arg5[%c0_45, %c0_46] : memref<64x128xf32, #tpu.memory_space<vmem>>, vector<64x128xf32>
    %cst_47 = arith.constant dense<0.000000e+00> : vector<1x128xf32>
    %152 = tpu.matmul %150, %151, %cst_47 {dimension_numbers = #tpu.dot_dimension_numbers<[1], [0], [0], [1], [0, 0, 1, 1], [], []>} : vector<1x64xf32>, vector<64x128xf32>, vector<1x128xf32> -> vector<1x128xf32>
    %c0_48 = arith.constant 0 : index
    %c0_49 = arith.constant 0 : index
    %153 = vector.load %arg6[%c0_48, %c0_49] : memref<1x128xf32, #tpu.memory_space<vmem>>, vector<1x128xf32>
    %154 = arith.addf %152, %153 : vector<1x128xf32>
    %c0_50 = arith.constant 0 : index
    %c0_51 = arith.constant 0 : index
    %c0_52 = arith.constant 0 : index
    %155 = vector.load %arg7[%c0_50, %c0_51, %c0_52] : memref<1x1x128xf32, #tpu.memory_space<vmem>>, vector<1x1x128xf32>
    %156 = vector.shape_cast %155 : vector<1x1x128xf32> to vector<1x128xf32>
    %157 = vector.shape_cast %154 : vector<1x128xf32> to vector<1x1x128xf32>
    tpu.vector_store %arg7[%c0_50, %c0_51, %c0_52], %157 {strides = array<i32>} : memref<1x1x128xf32, #tpu.memory_space<vmem>>, vector<1x1x128xf32>,
    return
  }
  func.func @transform_0(%arg0: i32) -> (i32, i32, i32, i32) {
    %c0_i32 = arith.constant 0 : i32
    %c0_i32_0 = arith.constant 0 : i32
    %c0_i32_1 = arith.constant 0 : i32
    %c0_i32_2 = arith.constant 0 : i32
    return %arg0, %c0_i32, %c0_i32_0, %c0_i32_1 : i32, i32, i32, i32
  }
  func.func @transform_1(%arg0: i32) -> (i32, i32, i32) {
    %c0_i32 = arith.constant 0 : i32
    %c0_i32_0 = arith.constant 0 : i32
    %c0_i32_1 = arith.constant 0 : i32
    %c0_i32_2 = arith.constant 0 : i32
    return %c0_i32, %c0_i32_0, %c0_i32_1 : i32, i32, i32
  }
  func.func @transform_2(%arg0: i32) -> (i32, i32) {
    %c0_i32 = arith.constant 0 : i32
    %c0_i32_0 = arith.constant 0 : i32
    %c0_i32_1 = arith.constant 0 : i32
    return %c0_i32, %c0_i32_0 : i32, i32
  }
  func.func @transform_3(%arg0: i32) -> (i32, i32) {
    %c0_i32 = arith.constant 0 : i32
    %c0_i32_0 = arith.constant 0 : i32
    %c0_i32_1 = arith.constant 0 : i32
    return %c0_i32, %c0_i32_0 : i32, i32
  }
  func.func @transform_4(%arg0: i32) -> (i32, i32) {
    %c0_i32 = arith.constant 0 : i32
    %c0_i32_0 = arith.constant 0 : i32
    %c0_i32_1 = arith.constant 0 : i32
    return %c0_i32, %c0_i32_0 : i32, i32
  }
  func.func @transform_5(%arg0: i32) -> (i32, i32) {
    %c0_i32 = arith.constant 0 : i32
    %c0_i32_0 = arith.constant 0 : i32
    %c0_i32_1 = arith.constant 0 : i32
    return %c0_i32, %c0_i32_0 : i32, i32
  }
  func.func @transform_6(%arg0: i32) -> (i32, i32, i32) {
    %c0_i32 = arith.constant 0 : i32
    %c0_i32_0 = arith.constant 0 : i32
    %c0_i32_1 = arith.constant 0 : i32
    return %arg0, %c0_i32, %c0_i32_0 : i32, i32, i32
  }
}

</mosaic_0001>

<llo_original>
// kernel: tpu_custom_call.1
$region0: #{tpu_custom_call.1}
  #allocation0 [shape = 'u32[]', space=smem, size = 0x4, offset = 0x4, fixed_abs, tag = 'smem constant byte address 0x4 - core index']
  #allocation1 [shape = 'u32[144,128]{1,0:T(1,128)}', space=vmem, size = 0x12000, scoped, tag = 'internal scratch']
  %s0 = inlined_call_operand.vmem [shape: f32[2,8,8,64], index: 0, kind: input, shape index: {}]
  %s1 = inlined_call_operand.vmem [shape: bf16[4,576,64], index: 1, kind: input, shape index: {}]
  %s2 = inlined_call_operand.vmem [shape: f32[4,64], index: 2, kind: input, shape index: {}]
  %s3 = inlined_call_operand.vmem [shape: f32[4,64], index: 3, kind: input, shape index: {}]
  %s4 = inlined_call_operand.vmem [shape: f32[64,128], index: 4, kind: input, shape index: {}]
  %s5 = inlined_call_operand.vmem [shape: f32[1,128], index: 5, kind: input, shape index: {}]
  %s6 = inlined_call_operand.hbm [shape: f32[2,1,128], index: 6, kind: output, shape index: {}]
  %s7 = sld [smem:[#allocation0]]
  $region57: #{tpu_custom_call.1} parent=0
    _
  %s9 = ssub.s32 1, %s7
  %s10 = scalar_select 0, %s9, %s7
  $region1: #{tpu_custom_call.1} parent=0
    #allocation2 [shape = 'u8[1024]{0}', space=vmem, size = 0x400, scoped, tag = 'output window, operand 0']
    #allocation3 [shape = 's32[2]{0}', space=sflag, size = 0x8, scoped, tag = 'scoped memory for tpu_custom_call.1']
    %11 = vsyncpa [#allocation3], 0
    %s12 = scalar_lea.sflag [#allocation3], 1
    %13 = vsyncpa %s12, 0
    loop: start=0, step=1, limit=4
    $region2: #{tpu_custom_call.1} parent=1 // loop_pre_header
      _
    $region3: #{tpu_custom_call.1} parent=1 // loop_header
      %s15 = sphi 0, %s19
      %p16 = scmp.ge.s32.totalorder %s15, 4
      %s25 = sphi 0, %s27
      %s28 = sphi 0, %s25
      %s29 = sphi 0, %s28
      %s45 = sphi 0, %s29
      %s49 = sphi 0, %s49
      %s51 = sphi 0, %s49
      %s52 = sphi 0, %s51
      %s66 = sphi 0, %s52
      %s70 = sphi 0, %s70
      %s72 = sphi 0, %s70
      %s73 = sphi 0, %s72
      %s87 = sphi 0, %s73
      %s91 = sphi 0, %s91
      %s93 = sphi 0, %s91
      %s94 = sphi 0, %s93
      %s108 = sphi 0, %s94
      %s112 = sphi 0, %s112
      %s114 = sphi 0, %s112
      %s115 = sphi 0, %s114
      %s129 = sphi 0, %s115
      %s133 = sphi 0, %s133
      %s135 = sphi 0, %s133
      %s136 = sphi 0, %s135
      %s150 = sphi 0, %s136
      %s156 = sphi 0, %s158
      %s159 = sphi 0, %s156
      %s160 = sphi 0, %s159
      %s176 = sphi 0, %s160
    $region4: #{tpu_custom_call.1} parent=1 // loop_header_branch
      %18 = sbr.rel (%p16) target = $region8
    $region5: #{tpu_custom_call.1} parent=1 // loop_body
      %s20 = ssub.s32 %s15, 1
      %s21 = ssub.s32 %s15, 2
      %s22 = sadd.s32 %s15, 1
      %s23 = ssub.s32 %s15, %s22
      %p24 = scmp.eq.s32.totalorder %s23, 0
      %s26 = sadd.s32 %s25, 1
      %s27 = scalar_select %p24, %s25, %s26
      %p30 = pneg %p24
      %p31 = scmp.eq.s32.totalorder %s15, 1
      %p32 = por %p30, %p31
      %p33 = scmp.ne.s32.totalorder %s25, %s28
      %p34 = scmp.eq.s32.totalorder %s15, 0
      %p35 = por %p33, %p34
      %p36 = scmp.ne.s32.totalorder %s25, %s28
      %p37 = scmp.eq.s32.totalorder %s20, 1
      %p38 = por %p36, %p37
      %p39 = scmp.ne.s32.totalorder %s28, %s29
      %p40 = scmp.eq.s32.totalorder %s20, 0
      %p41 = por %p39, %p40
      %p42 = scmp.ne.s32.totalorder %s28, %s29
      %p43 = scmp.eq.s32.totalorder %s21, 1
      %p44 = por %p42, %p43
      %p46 = scmp.ne.s32.totalorder %s29, %s45
      %p47 = scmp.eq.s32.totalorder %s21, 0
      %p48 = por %p46, %p47
      %s50 = sadd.s32 %s49, 1
      %p53 = scmp.eq.s32.totalorder %s15, 1
      %p54 = scmp.ne.s32.totalorder %s49, %s51
      %p55 = scmp.eq.s32.totalorder %s15, 0
      %p56 = por %p54, %p55
      %p57 = scmp.ne.s32.totalorder %s49, %s51
      %p58 = scmp.eq.s32.totalorder %s20, 1
      %p59 = por %p57, %p58
      %p60 = scmp.ne.s32.totalorder %s51, %s52
      %p61 = scmp.eq.s32.totalorder %s20, 0
      %p62 = por %p60, %p61
      %p63 = scmp.ne.s32.totalorder %s51, %s52
      %p64 = scmp.eq.s32.totalorder %s21, 1
      %p65 = por %p63, %p64
      %p67 = scmp.ne.s32.totalorder %s52, %s66
      %p68 = scmp.eq.s32.totalorder %s21, 0
      %p69 = por %p67, %p68
      %s71 = sadd.s32 %s70, 1
      %p74 = scmp.eq.s32.totalorder %s15, 1
      %p75 = scmp.ne.s32.totalorder %s70, %s72
      %p76 = scmp.eq.s32.totalorder %s15, 0
      %p77 = por %p75, %p76
      %p78 = scmp.ne.s32.totalorder %s70, %s72
      %p79 = scmp.eq.s32.totalorder %s20, 1
      %p80 = por %p78, %p79
      %p81 = scmp.ne.s32.totalorder %s72, %s73
      %p82 = scmp.eq.s32.totalorder %s20, 0
      %p83 = por %p81, %p82
      %p84 = scmp.ne.s32.totalorder %s72, %s73
      %p85 = scmp.eq.s32.totalorder %s21, 1
      %p86 = por %p84, %p85
      %p88 = scmp.ne.s32.totalorder %s73, %s87
      %p89 = scmp.eq.s32.totalorder %s21, 0
      %p90 = por %p88, %p89
      %s92 = sadd.s32 %s91, 1
      %p95 = scmp.eq.s32.totalorder %s15, 1
      %p96 = scmp.ne.s32.totalorder %s91, %s93
      %p97 = scmp.eq.s32.totalorder %s15, 0
      %p98 = por %p96, %p97
      %p99 = scmp.ne.s32.totalorder %s91, %s93
      %p100 = scmp.eq.s32.totalorder %s20, 1
      %p101 = por %p99, %p100
      %p102 = scmp.ne.s32.totalorder %s93, %s94
      %p103 = scmp.eq.s32.totalorder %s20, 0
      %p104 = por %p102, %p103
      %p105 = scmp.ne.s32.totalorder %s93, %s94
      %p106 = scmp.eq.s32.totalorder %s21, 1
      %p107 = por %p105, %p106
      %p109 = scmp.ne.s32.totalorder %s94, %s108
      %p110 = scmp.eq.s32.totalorder %s21, 0
      %p111 = por %p109, %p110
      %s113 = sadd.s32 %s112, 1
      %p116 = scmp.eq.s32.totalorder %s15, 1
      %p117 = scmp.ne.s32.totalorder %s112, %s114
      %p118 = scmp.eq.s32.totalorder %s15, 0
      %p119 = por %p117, %p118
      %p120 = scmp.ne.s32.totalorder %s112, %s114
      %p121 = scmp.eq.s32.totalorder %s20, 1
      %p122 = por %p120, %p121
      %p123 = scmp.ne.s32.totalorder %s114, %s115
      %p124 = scmp.eq.s32.totalorder %s20, 0
      %p125 = por %p123, %p124
      %p126 = scmp.ne.s32.totalorder %s114, %s115
      %p127 = scmp.eq.s32.totalorder %s21, 1
      %p128 = por %p126, %p127
      %p130 = scmp.ne.s32.totalorder %s115, %s129
      %p131 = scmp.eq.s32.totalorder %s21, 0
      %p132 = por %p130, %p131
      %s134 = sadd.s32 %s133, 1
      %p137 = scmp.eq.s32.totalorder %s15, 1
      %p138 = scmp.ne.s32.totalorder %s133, %s135
      %p139 = scmp.eq.s32.totalorder %s15, 0
      %p140 = por %p138, %p139
      %p141 = scmp.ne.s32.totalorder %s133, %s135
      %p142 = scmp.eq.s32.totalorder %s20, 1
      %p143 = por %p141, %p142
      %p144 = scmp.ne.s32.totalorder %s135, %s136
      %p145 = scmp.eq.s32.totalorder %s20, 0
      %p146 = por %p144, %p145
      %p147 = scmp.ne.s32.totalorder %s135, %s136
      %p148 = scmp.eq.s32.totalorder %s21, 1
      %p149 = por %p147, %p148
      %p151 = scmp.ne.s32.totalorder %s136, %s150
      %p152 = scmp.eq.s32.totalorder %s21, 0
      %p153 = por %p151, %p152
      %s154 = ssub.s32 %s15, %s22
      %p155 = scmp.eq.s32.totalorder %s154, 0
      %s157 = sadd.s32 %s156, 1
      %s158 = scalar_select %p155, %s156, %s157
      %p161 = pneg %p155
      %p162 = scmp.eq.s32.totalorder %s15, 1
      %p163 = por %p161, %p162
      %p164 = scmp.ne.s32.totalorder %s156, %s159
      %p165 = scmp.eq.s32.totalorder %s15, 0
      %p166 = por %p164, %p165
      %p167 = scmp.ne.s32.totalorder %s156, %s159
      %p168 = scmp.eq.s32.totalorder %s20, 1
      %p169 = por %p167, %p168
      %p170 = scmp.ne.s32.totalorder %s159, %s160
      %p171 = scmp.eq.s32.totalorder %s20, 0
      %p172 = por %p170, %p171
      %p173 = scmp.ne.s32.totalorder %s159, %s160
      %p174 = scmp.eq.s32.totalorder %s21, 1
      %p175 = por %p173, %p174
      %p177 = scmp.ne.s32.totalorder %s160, %s176
      %p178 = scmp.eq.s32.totalorder %s21, 0
      %p179 = por %p177, %p178
      %p180 = scmp.le.s32.totalorder 1, %s15
      %p181 = scmp.lt.s32.totalorder %s15, 3
      %p182 = pnand %p180, %p181
      %p183 = pneg %p182
      // Predicated region
      $region9: #{tpu_custom_call.1} parent=5 // pred_check
        _
      $region10: #{tpu_custom_call.1} parent=5 // pred_check_branch
        %185 = sbr.rel (%p182) target = $region12
      $region11: #{tpu_custom_call.1} parent=5 // pred_region
        %s186 = ssub.s32 %s15, 1
        // Predicated region
        $region13: #{tpu_custom_call.1} parent=11 // pred_check
          %p187 = pneg %p62
        $region14: #{tpu_custom_call.1} parent=11 // pred_check_branch
          %189 = sbr.rel (%p187) target = $region16
        $region15: #{tpu_custom_call.1} parent=11 // pred_region
          _
        $region16: #{tpu_custom_call.1} parent=11 // pred_fallthru
          _
        // Predicated region
        $region17: #{tpu_custom_call.1} parent=11 // pred_check
          %p190 = pneg %p83
        $region18: #{tpu_custom_call.1} parent=11 // pred_check_branch
          %192 = sbr.rel (%p190) target = $region20
        $region19: #{tpu_custom_call.1} parent=11 // pred_region
          _
        $region20: #{tpu_custom_call.1} parent=11 // pred_fallthru
          _
        // Predicated region
        $region21: #{tpu_custom_call.1} parent=11 // pred_check
          %p193 = pneg %p104
        $region22: #{tpu_custom_call.1} parent=11 // pred_check_branch
          %195 = sbr.rel (%p193) target = $region24
        $region23: #{tpu_custom_call.1} parent=11 // pred_region
          _
        $region24: #{tpu_custom_call.1} parent=11 // pred_fallthru
          _
        // Predicated region
        $region25: #{tpu_custom_call.1} parent=11 // pred_check
          %p196 = pneg %p125
        $region26: #{tpu_custom_call.1} parent=11 // pred_check_branch
          %198 = sbr.rel (%p196) target = $region28
        $region27: #{tpu_custom_call.1} parent=11 // pred_region
          _
        $region28: #{tpu_custom_call.1} parent=11 // pred_fallthru
          _
        // Predicated region
        $region29: #{tpu_custom_call.1} parent=11 // pred_check
          %p199 = pneg %p146
        $region30: #{tpu_custom_call.1} parent=11 // pred_check_branch
          %201 = sbr.rel (%p199) target = $region32
        $region31: #{tpu_custom_call.1} parent=11 // pred_region
          _
        $region32: #{tpu_custom_call.1} parent=11 // pred_fallthru
          _
      $region12: #{tpu_custom_call.1} parent=5 // pred_fallthru
        _
      %p202 = scmp.lt.s32.totalorder %s15, 2
      // Predicated region
      $region33: #{tpu_custom_call.1} parent=5 // pred_check
        %p203 = pneg %p202
      $region34: #{tpu_custom_call.1} parent=5 // pred_check_branch
        %205 = sbr.rel (%p203) target = $region36
      $region35: #{tpu_custom_call.1} parent=5 // pred_region
        // Predicated region
        $region37: #{tpu_custom_call.1} parent=35 // pred_check
          %p206 = pneg %p35
        $region38: #{tpu_custom_call.1} parent=35 // pred_check_branch
          %208 = sbr.rel (%p206) target = $region40
        $region39: #{tpu_custom_call.1} parent=35 // pred_region
          %p209 = scmp.lt.s32.totalorder %s15, 1
          %s210 = scalar_select %p209, %s15, 1
          %s211 = smul.addr %s210, 8
          %s212 = smul.addr %s211, 8
          %s213 = scalar_lea.vmem %s0, %s212
        $region40: #{tpu_custom_call.1} parent=35 // pred_fallthru
          _
      $region36: #{tpu_custom_call.1} parent=5 // pred_fallthru
        _
      %p214 = scmp.le.s32.totalorder 1, %s15
      %p215 = scmp.lt.s32.totalorder %s15, 3
      %p216 = pnand %p214, %p215
      %p217 = pneg %p216
      // Predicated region
      $region41: #{tpu_custom_call.1} parent=5 // pred_check
        _
      $region42: #{tpu_custom_call.1} parent=5 // pred_check_branch
        %219 = sbr.rel (%p216) target = $region44
      $region43: #{tpu_custom_call.1} parent=5 // pred_region
        %s220 = ssub.s32 %s15, 1
        %p221 = scmp.lt.s32.totalorder %s20, 1
        %s222 = scalar_select %p221, %s20, 1
        %s223 = smul.addr %s222, 8
        %s224 = smul.addr %s223, 8
        %s225 = scalar_lea.vmem %s0, %s224
        %p226 = pneg %p41
        %p227 = pneg %p38
        %p228 = pneg %p62
        %p229 = pneg %p59
        %p230 = pneg %p83
        %p231 = pneg %p80
        %p232 = pneg %p104
        %p233 = pneg %p101
        %p234 = pneg %p125
        %p235 = pneg %p122
        %p236 = pneg %p146
        %p237 = pneg %p143
        %p238 = pneg %p172
        %p239 = pneg %p169
        %s240 = sand.u32 %s159, 1
        %s241 = scalar_lea.sflag [#allocation3], %s240
        %s242 = sand.u32 %s159, 1
        %s243 = scalar_lea.vmem [#allocation2], %s242
        %p244 = scmp.lt.s32.totalorder %s20, 1
        %s245 = scalar_select %p244, %s20, 1
        %s246 = smul.addr %s245, 8
        %s247 = smul.addr %s246, 8
        %s248 = scalar_lea.vmem %s0, %s247
        %v250 = vld [vmem:[%s248] sm:$0xff]
        %v251 = vld [vmem:[%s248 + $0x8] sm:$0xff]
        %v252 = vld [vmem:[%s248 + $0x10] sm:$0xff]
        %v253 = vld [vmem:[%s248 + $0x18] sm:$0xff]
        %v254 = vld [vmem:[%s248 + $0x20] sm:$0xff]
        %v255 = vld [vmem:[%s248 + $0x28] sm:$0xff]
        %v256 = vld [vmem:[%s248 + $0x30] sm:$0xff]
        %v257 = vld [vmem:[%s248 + $0x38] sm:$0xff]
        %v267 = vrot.slane 0.0, 7
        %v268 = vrot.slane %v250, 7
        %v269 = vrot.slane %v251, 7
        %v270 = vrot.slane %v252, 7
        %v271 = vrot.slane %v253, 7
        %v272 = vrot.slane %v254, 7
        %v273 = vrot.slane %v255, 7
        %v274 = vrot.slane %v256, 7
        %v275 = vrot.slane %v257, 7
        %vm285 = vcmask 1040384
        %v286 = vsel %vm285, 0.0, %v267
        %v287 = vsel %vm285, 0.0, %v268
        %v288 = vsel %vm285, 0.0, %v269
        %v289 = vsel %vm285, 0.0, %v270
        %v290 = vsel %vm285, 0.0, %v271
        %v291 = vsel %vm285, 0.0, %v272
        %v292 = vsel %vm285, 0.0, %v273
        %v293 = vsel %vm285, 0.0, %v274
        %v294 = vsel %vm285, 0.0, %v275
        %v295 = vsel %vm285, %v267, 0.0
        %v296 = vsel %vm285, %v268, 0.0
        %v297 = vsel %vm285, %v269, 0.0
        %v298 = vsel %vm285, %v270, 0.0
        %v299 = vsel %vm285, %v271, 0.0
        %v300 = vsel %vm285, %v272, 0.0
        %v301 = vsel %vm285, %v273, 0.0
        %v302 = vsel %vm285, %v274, 0.0
        %v303 = vsel %vm285, %v275, 0.0
        %vm320 = vcmask 1046528
        %v321 = vrot.slane %v286, 1
        %v322 = vrot.slane %v295, 1
        %v323 = vsel %vm320, %v321, %v322
        %v324 = vrot.slane %v287, 1
        %v325 = vrot.slane %v296, 1
        %v326 = vsel %vm320, %v324, %v325
        %v327 = vrot.slane %v288, 1
        %v328 = vrot.slane %v297, 1
        %v329 = vsel %vm320, %v327, %v328
        %v330 = vrot.slane %v289, 1
        %v331 = vrot.slane %v298, 1
        %v332 = vsel %vm320, %v330, %v331
        %v333 = vrot.slane %v290, 1
        %v334 = vrot.slane %v299, 1
        %v335 = vsel %vm320, %v333, %v334
        %v336 = vrot.slane %v291, 1
        %v337 = vrot.slane %v300, 1
        %v338 = vsel %vm320, %v336, %v337
        %v339 = vrot.slane %v292, 1
        %v340 = vrot.slane %v301, 1
        %v341 = vsel %vm320, %v339, %v340
        %v342 = vrot.slane %v293, 1
        %v343 = vrot.slane %v302, 1
        %v344 = vsel %vm320, %v342, %v343
        %vm345 = vcmask 1045504
        %v346 = vrot.slane %v286, 2
        %v347 = vrot.slane %v295, 2
        %v348 = vsel %vm345, %v346, %v347
        %v349 = vrot.slane %v287, 2
        %v350 = vrot.slane %v296, 2
        %v351 = vsel %vm345, %v349, %v350
        %v352 = vrot.slane %v288, 2
        %v353 = vrot.slane %v297, 2
        %v354 = vsel %vm345, %v352, %v353
        %v355 = vrot.slane %v289, 2
        %v356 = vrot.slane %v298, 2
        %v357 = vsel %vm345, %v355, %v356
        %v358 = vrot.slane %v290, 2
        %v359 = vrot.slane %v299, 2
        %v360 = vsel %vm345, %v358, %v359
        %v361 = vrot.slane %v291, 2
        %v362 = vrot.slane %v300, 2
        %v363 = vsel %vm345, %v361, %v362
        %v364 = vrot.slane %v292, 2
        %v365 = vrot.slane %v301, 2
        %v366 = vsel %vm345, %v364, %v365
        %v367 = vrot.slane %v293, 2
        %v368 = vrot.slane %v302, 2
        %v369 = vsel %vm345, %v367, %v368
        %v380 = vrot.slane %v294, 1
        %v381 = vrot.slane %v303, 1
        %v382 = vsel %vm320, %v380, %v381
        %v391 = vrot.slane %v294, 2
        %v392 = vrot.slane %v303, 2
        %v393 = vsel %vm345, %v391, %v392
        %395 = vrot.lane.b32.xlu0 %v323, 64
        %v396 = vpop.permute.xlu0 %395
        %397 = vrot.lane.b32.xlu0 %v326, 64
        %v398 = vpop.permute.xlu0 %397
        %399 = vrot.lane.b32.xlu0 %v329, 64
        %v400 = vpop.permute.xlu0 %399
        %401 = vrot.lane.b32.xlu0 %v332, 64
        %v402 = vpop.permute.xlu0 %401
        %403 = vrot.lane.b32.xlu0 %v335, 64
        %v404 = vpop.permute.xlu0 %403
        %405 = vrot.lane.b32.xlu0 %v338, 64
        %v406 = vpop.permute.xlu0 %405
        %407 = vrot.lane.b32.xlu0 %v341, 64
        %v408 = vpop.permute.xlu0 %407
        %409 = vrot.lane.b32.xlu0 %v344, 64
        %v410 = vpop.permute.xlu0 %409
        %419 = vrot.lane.b32.xlu0 %v287, 64
        %v420 = vpop.permute.xlu0 %419
        %421 = vrot.lane.b32.xlu0 %v288, 64
        %v422 = vpop.permute.xlu0 %421
        %423 = vrot.lane.b32.xlu0 %v289, 64
        %v424 = vpop.permute.xlu0 %423
        %425 = vrot.lane.b32.xlu0 %v290, 64
        %v426 = vpop.permute.xlu0 %425
        %427 = vrot.lane.b32.xlu0 %v291, 64
        %v428 = vpop.permute.xlu0 %427
        %429 = vrot.lane.b32.xlu0 %v292, 64
        %v430 = vpop.permute.xlu0 %429
        %431 = vrot.lane.b32.xlu0 %v293, 64
        %v432 = vpop.permute.xlu0 %431
        %433 = vrot.lane.b32.xlu0 %v294, 64
        %v434 = vpop.permute.xlu0 %433
        %443 = vrot.lane.b32.xlu0 %v351, 64
        %v444 = vpop.permute.xlu0 %443
        %445 = vrot.lane.b32.xlu0 %v354, 64
        %v446 = vpop.permute.xlu0 %445
        %447 = vrot.lane.b32.xlu0 %v357, 64
        %v448 = vpop.permute.xlu0 %447
        %449 = vrot.lane.b32.xlu0 %v360, 64
        %v450 = vpop.permute.xlu0 %449
        %451 = vrot.lane.b32.xlu0 %v363, 64
        %v452 = vpop.permute.xlu0 %451
        %453 = vrot.lane.b32.xlu0 %v366, 64
        %v454 = vpop.permute.xlu0 %453
        %455 = vrot.lane.b32.xlu0 %v369, 64
        %v456 = vpop.permute.xlu0 %455
        %457 = vrot.lane.b32.xlu0 %v393, 64
        %v458 = vpop.permute.xlu0 %457
        %467 = vrot.lane.b32.xlu0 %v382, 64
        %v468 = vpop.permute.xlu0 %467
        %vm470 = vcmask 523264
        %v471 = vsel %vm470, %v286, %v396
        %v472 = vsel %vm470, %v287, %v398
        %v473 = vsel %vm470, %v288, %v400
        %v474 = vsel %vm470, %v289, %v402
        %v475 = vsel %vm470, %v290, %v404
        %v476 = vsel %vm470, %v291, %v406
        %v477 = vsel %vm470, %v292, %v408
        %v478 = vsel %vm470, %v293, %v410
        %v479 = vsel %vm470, %v348, %v420
        %v480 = vsel %vm470, %v351, %v422
        %v481 = vsel %vm470, %v354, %v424
        %v482 = vsel %vm470, %v357, %v426
        %v483 = vsel %vm470, %v360, %v428
        %v484 = vsel %vm470, %v363, %v430
        %v485 = vsel %vm470, %v366, %v432
        %v486 = vsel %vm470, %v369, %v434
        %v487 = vsel %vm470, %v326, %v444
        %v488 = vsel %vm470, %v329, %v446
        %v489 = vsel %vm470, %v332, %v448
        %v490 = vsel %vm470, %v335, %v450
        %v491 = vsel %vm470, %v338, %v452
        %v492 = vsel %vm470, %v341, %v454
        %v493 = vsel %vm470, %v344, %v456
        %v494 = vsel %vm470, %v382, %v458
        %v495 = vsel %vm470, %v294, %v468
        %v496 = vpack.c.bf16 %v472, %v471
        %v497 = vpack.c.bf16 %v480, %v479
        %v498 = vpack.c.bf16 %v488, %v487
        %v499 = vpack.c.bf16 %v474, %v473
        %v500 = vpack.c.bf16 %v357, %v354
        %v501 = vpack.c.bf16 %v482, %v481
        %v502 = vpack.c.bf16 %v490, %v489
        %v503 = vpack.c.bf16 %v476, %v475
        %v504 = vpack.c.bf16 %v363, %v360
        %v505 = vpack.c.bf16 %v484, %v483
        %v506 = vpack.c.bf16 %v492, %v491
        %v507 = vpack.c.bf16 %v478, %v477
        %v508 = vpack.c.bf16 %v369, %v366
        %v509 = vpack.c.bf16 %v486, %v485
        %v510 = vpack.c.bf16 %v494, %v493
        %v511 = vpack.c.bf16 %v471, %v495
        %v512 = vpack.c.bf16 %v348, %v393
        %v513 = vld [vmem:[%s1] sm:$0xf]
        %v514 = vld [vmem:[%s1 + $0x4] sm:$0xf]
        %v515 = vld [vmem:[%s1 + $0x8] sm:$0xf]
        %v516 = vld [vmem:[%s1 + $0xc] sm:$0xf]
        %v517 = vld [vmem:[%s1 + $0x10] sm:$0xf]
        %v518 = vld [vmem:[%s1 + $0x14] sm:$0xf]
        %v519 = vld [vmem:[%s1 + $0x18] sm:$0xf]
        %v520 = vld [vmem:[%s1 + $0x1c] sm:$0xf]
        %v521 = vld [vmem:[%s1 + $0x20] sm:$0xf]
        %v522 = vld [vmem:[%s1 + $0x24] sm:$0xf]
        %v523 = vld [vmem:[%s1 + $0x28] sm:$0xf]
        %v524 = vld [vmem:[%s1 + $0x2c] sm:$0xf]
        %v525 = vld [vmem:[%s1 + $0x30] sm:$0xf]
        %v526 = vld [vmem:[%s1 + $0x34] sm:$0xf]
        %v527 = vld [vmem:[%s1 + $0x38] sm:$0xf]
        %v528 = vld [vmem:[%s1 + $0x3c] sm:$0xf]
        %v529 = vld [vmem:[%s1 + $0x40] sm:$0xf]
        %v530 = vld [vmem:[%s1 + $0x44] sm:$0xf]
        %v531 = vld [vmem:[%s1 + $0x48] sm:$0xf]
        %v532 = vld [vmem:[%s1 + $0x4c] sm:$0xf]
        %v533 = vld [vmem:[%s1 + $0x50] sm:$0xf]
        %v534 = vld [vmem:[%s1 + $0x54] sm:$0xf]
        %v535 = vld [vmem:[%s1 + $0x58] sm:$0xf]
        %v536 = vld [vmem:[%s1 + $0x5c] sm:$0xf]
        %v537 = vld [vmem:[%s1 + $0x60] sm:$0xf]
        %v538 = vld [vmem:[%s1 + $0x64] sm:$0xf]
        %v539 = vld [vmem:[%s1 + $0x68] sm:$0xf]
        %v540 = vld [vmem:[%s1 + $0x6c] sm:$0xf]
        %v541 = vld [vmem:[%s1 + $0x70] sm:$0xf]
        %v542 = vld [vmem:[%s1 + $0x74] sm:$0xf]
        %v543 = vld [vmem:[%s1 + $0x78] sm:$0xf]
        %v544 = vld [vmem:[%s1 + $0x7c] sm:$0xf]
        %v545 = vld [vmem:[%s1 + $0x80] sm:$0xf]
        %v546 = vld [vmem:[%s1 + $0x84] sm:$0xf]
        %v547 = vld [vmem:[%s1 + $0x88] sm:$0xf]
        %v548 = vld [vmem:[%s1 + $0x8c] sm:$0xf]
        %v549 = vld [vmem:[%s1 + $0x90] sm:$0xf]
        %v550 = vld [vmem:[%s1 + $0x94] sm:$0xf]
        %v551 = vld [vmem:[%s1 + $0x98] sm:$0xf]
        %v552 = vld [vmem:[%s1 + $0x9c] sm:$0xf]
        %v553 = vld [vmem:[%s1 + $0xa0] sm:$0xf]
        %v554 = vld [vmem:[%s1 + $0xa4] sm:$0xf]
        %v555 = vld [vmem:[%s1 + $0xa8] sm:$0xf]
        %v556 = vld [vmem:[%s1 + $0xac] sm:$0xf]
        %v557 = vld [vmem:[%s1 + $0xb0] sm:$0xf]
        %v558 = vld [vmem:[%s1 + $0xb4] sm:$0xf]
        %v559 = vld [vmem:[%s1 + $0xb8] sm:$0xf]
        %v560 = vld [vmem:[%s1 + $0xbc] sm:$0xf]
        %v561 = vld [vmem:[%s1 + $0xc0] sm:$0xf]
        %v562 = vld [vmem:[%s1 + $0xc4] sm:$0xf]
        %v563 = vld [vmem:[%s1 + $0xc8] sm:$0xf]
        %v564 = vld [vmem:[%s1 + $0xcc] sm:$0xf]
        %v565 = vld [vmem:[%s1 + $0xd0] sm:$0xf]
        %v566 = vld [vmem:[%s1 + $0xd4] sm:$0xf]
        %v567 = vld [vmem:[%s1 + $0xd8] sm:$0xf]
        %v568 = vld [vmem:[%s1 + $0xdc] sm:$0xf]
        %v569 = vld [vmem:[%s1 + $0xe0] sm:$0xf]
        %v570 = vld [vmem:[%s1 + $0xe4] sm:$0xf]
        %v571 = vld [vmem:[%s1 + $0xe8] sm:$0xf]
        %v572 = vld [vmem:[%s1 + $0xec] sm:$0xf]
        %v573 = vld [vmem:[%s1 + $0xf0] sm:$0xf]
        %v574 = vld [vmem:[%s1 + $0xf4] sm:$0xf]
        %v575 = vld [vmem:[%s1 + $0xf8] sm:$0xf]
        %v576 = vld [vmem:[%s1 + $0xfc] sm:$0xf]
        %v577 = vld [vmem:[%s1 + $0x100] sm:$0xf]
        %v578 = vld [vmem:[%s1 + $0x104] sm:$0xf]
        %v579 = vld [vmem:[%s1 + $0x108] sm:$0xf]
        %v580 = vld [vmem:[%s1 + $0x10c] sm:$0xf]
        %v581 = vld [vmem:[%s1 + $0x110] sm:$0xf]
        %v582 = vld [vmem:[%s1 + $0x114] sm:$0xf]
        %v583 = vld [vmem:[%s1 + $0x118] sm:$0xf]
        %v584 = vld [vmem:[%s1 + $0x11c] sm:$0xf]
        %v657 = vunpack.c.l.b16 %v513
        %v658 = vunpack.c.l.b16 %v514
        %v659 = vunpack.c.l.b16 %v515
        %v660 = vunpack.c.l.b16 %v516
        %v661 = vunpack.c.l.b16 %v517
        %v662 = vunpack.c.l.b16 %v518
        %v663 = vunpack.c.l.b16 %v519
        %v664 = vunpack.c.l.b16 %v520
        %v665 = vunpack.c.l.b16 %v521
        %v666 = vunpack.c.l.b16 %v522
        %v667 = vunpack.c.l.b16 %v523
        %v668 = vunpack.c.l.b16 %v524
        %v669 = vunpack.c.l.b16 %v525
        %v670 = vunpack.c.l.b16 %v526
        %v671 = vunpack.c.l.b16 %v527
        %v672 = vunpack.c.l.b16 %v528
        %v673 = vunpack.c.l.b16 %v529
        %v674 = vunpack.c.l.b16 %v530
        %v675 = vunpack.c.l.b16 %v531
        %v676 = vunpack.c.l.b16 %v532
        %v677 = vunpack.c.l.b16 %v533
        %v678 = vunpack.c.l.b16 %v534
        %v679 = vunpack.c.l.b16 %v535
        %v680 = vunpack.c.l.b16 %v536
        %v681 = vunpack.c.l.b16 %v537
        %v682 = vunpack.c.l.b16 %v538
        %v683 = vunpack.c.l.b16 %v539
        %v684 = vunpack.c.l.b16 %v540
        %v685 = vunpack.c.l.b16 %v541
        %v686 = vunpack.c.l.b16 %v542
        %v687 = vunpack.c.l.b16 %v543
        %v688 = vunpack.c.l.b16 %v544
        %v689 = vunpack.c.l.b16 %v545
        %v690 = vunpack.c.l.b16 %v546
        %v691 = vunpack.c.l.b16 %v547
        %v692 = vunpack.c.l.b16 %v548
        %v693 = vunpack.c.l.b16 %v549
        %v694 = vunpack.c.l.b16 %v550
        %v695 = vunpack.c.l.b16 %v551
        %v696 = vunpack.c.l.b16 %v552
        %v697 = vunpack.c.l.b16 %v553
        %v698 = vunpack.c.l.b16 %v554
        %v699 = vunpack.c.l.b16 %v555
        %v700 = vunpack.c.l.b16 %v556
        %v701 = vunpack.c.l.b16 %v557
        %v702 = vunpack.c.l.b16 %v558
        %v703 = vunpack.c.l.b16 %v559
        %v704 = vunpack.c.l.b16 %v560
        %v705 = vunpack.c.l.b16 %v561
        %v706 = vunpack.c.l.b16 %v562
        %v707 = vunpack.c.l.b16 %v563
        %v708 = vunpack.c.l.b16 %v564
        %v709 = vunpack.c.l.b16 %v565
        %v710 = vunpack.c.l.b16 %v566
        %v711 = vunpack.c.l.b16 %v567
        %v712 = vunpack.c.l.b16 %v568
        %v713 = vunpack.c.l.b16 %v569
        %v714 = vunpack.c.l.b16 %v570
        %v715 = vunpack.c.l.b16 %v571
        %v716 = vunpack.c.l.b16 %v572
        %v717 = vunpack.c.l.b16 %v573
        %v718 = vunpack.c.l.b16 %v574
        %v719 = vunpack.c.l.b16 %v575
        %v720 = vunpack.c.l.b16 %v576
        %v721 = vunpack.c.l.b16 %v577
        %v722 = vunpack.c.l.b16 %v578
        %v723 = vunpack.c.l.b16 %v579
        %v724 = vunpack.c.l.b16 %v580
        %v725 = vunpack.c.l.b16 %v581
        %v726 = vunpack.c.l.b16 %v582
        %v727 = vunpack.c.l.b16 %v583
        %v728 = vunpack.c.l.b16 %v584
        %v729 = vpack.c.b16 %v658, %v657
        %v730 = vpack.c.b16 %v660, %v659
        %v731 = vpack.c.b16 %v662, %v661
        %v732 = vpack.c.b16 %v664, %v663
        %v733 = vpack.c.b16 %v666, %v665
        %v734 = vpack.c.b16 %v668, %v667
        %v735 = vpack.c.b16 %v670, %v669
        %v736 = vpack.c.b16 %v672, %v671
        %v737 = vpack.c.b16 %v674, %v673
        %v738 = vpack.c.b16 %v676, %v675
        %v739 = vpack.c.b16 %v678, %v677
        %v740 = vpack.c.b16 %v680, %v679
        %v741 = vpack.c.b16 %v682, %v681
        %v742 = vpack.c.b16 %v684, %v683
        %v743 = vpack.c.b16 %v686, %v685
        %v744 = vpack.c.b16 %v688, %v687
        %v745 = vpack.c.b16 %v690, %v689
        %v746 = vpack.c.b16 %v692, %v691
        %v747 = vpack.c.b16 %v694, %v693
        %v748 = vpack.c.b16 %v696, %v695
        %v749 = vpack.c.b16 %v698, %v697
        %v750 = vpack.c.b16 %v700, %v699
        %v751 = vpack.c.b16 %v702, %v701
        %v752 = vpack.c.b16 %v704, %v703
        %v753 = vpack.c.b16 %v706, %v705
        %v754 = vpack.c.b16 %v708, %v707
        %v755 = vpack.c.b16 %v710, %v709
        %v756 = vpack.c.b16 %v712, %v711
        %v757 = vpack.c.b16 %v714, %v713
        %v758 = vpack.c.b16 %v716, %v715
        %v759 = vpack.c.b16 %v718, %v717
        %v760 = vpack.c.b16 %v720, %v719
        %v761 = vpack.c.b16 %v722, %v721
        %v762 = vpack.c.b16 %v724, %v723
        %v763 = vpack.c.b16 %v726, %v725
        %v764 = vpack.c.b16 %v728, %v727
        %v802 = vsel %vm470, %v500, 0
        %v805 = vsel %vm470, %v504, 0
        %v808 = vsel %vm470, %v508, 0
        %v811 = vsel %vm470, %v512, 0
        %813 = vmatprep.subr.bf16.mxu0 0
        %814 = vmatpush1.bf16.msra.mxu0 %v736
        %815 = vmatprep.subr.bf16.mxu0 0
        %816 = vmatpush1.bf16.msra.mxu0 %v735
        %817 = vmatprep.subr.bf16.mxu0 0
        %818 = vmatpush1.bf16.msra.mxu0 %v734
        %819 = vmatprep.subr.bf16.mxu0 0
        %820 = vmatpush1.bf16.msra.mxu0 %v733
        %821 = vmatprep.subr.bf16.mxu0 0
        %822 = vmatpush1.bf16.msra.mxu0 %v732
        %823 = vmatprep.subr.bf16.mxu0 0
        %824 = vmatpush1.bf16.msra.mxu0 %v731
        %825 = vmatprep.subr.bf16.mxu0 0
        %826 = vmatpush1.bf16.msra.mxu0 %v730
        %827 = vmatprep.subr.bf16.mxu0 0
        %828 = vmatpush1.bf16.msra.mxu0 %v729
        %829 = vmatprep.subr.bf16.mxu0 0
        %830 = vmatpush2.bf16.msra.mxu0 %v744
        %831 = vmatprep.subr.bf16.mxu0 0
        %832 = vmatpush2.bf16.msra.mxu0 %v743
        %833 = vmatprep.subr.bf16.mxu0 0
        %834 = vmatpush2.bf16.msra.mxu0 %v742
        %835 = vmatprep.subr.bf16.mxu0 0
        %836 = vmatpush2.bf16.msra.mxu0 %v741
        %837 = vmatprep.subr.bf16.mxu0 0
        %838 = vmatpush2.bf16.msra.mxu0 %v740
        %839 = vmatprep.subr.bf16.mxu0 0
        %840 = vmatpush2.bf16.msra.mxu0 %v739
        %841 = vmatprep.subr.bf16.mxu0 0
        %842 = vmatpush2.bf16.msra.mxu0 %v738
        %843 = vmatprep.subr.bf16.mxu0 0
        %844 = vmatpush2.bf16.msra.mxu0 %v737
        %845 = vmatprep.mubr.bf16.mxu0 %v497
        %846 = vmatmul.mubr.bf16.gmra.mxu0 %v496
        %v847 = vpop.f32.mrf.mxu0
        %v848 = vadd.f32 0.0, %v847
        %v849 = vpop.f32.mrf.mxu0
        %v850 = vpop.f32.mrf.mxu0
        %v851 = vadd.f32 0.0, %v850
        %v852 = vpop.f32.mrf.mxu0
        %853 = vmatprep.mubr.bf16.mxu0 %v501
        %854 = vmatmul.mubr.bf16.gmra.mxu0 %v499
        %v855 = vpop.f32.mrf.mxu0
        %v856 = vadd.f32 0.0, %v855
        %v857 = vpop.f32.mrf.mxu0
        %v858 = vpop.f32.mrf.mxu0
        %v859 = vadd.f32 0.0, %v858
        %v860 = vpop.f32.mrf.mxu0
        %861 = vmatprep.mubr.bf16.mxu0 %v505
        %862 = vmatmul.mubr.bf16.gmra.mxu0 %v503
        %v863 = vpop.f32.mrf.mxu0
        %v864 = vadd.f32 0.0, %v863
        %v865 = vpop.f32.mrf.mxu0
        %v866 = vpop.f32.mrf.mxu0
        %v867 = vadd.f32 0.0, %v866
        %v868 = vpop.f32.mrf.mxu0
        %869 = vmatprep.mubr.bf16.mxu0 %v509
        %870 = vmatmul.mubr.bf16.gmra.mxu0 %v507
        %v871 = vpop.f32.mrf.mxu0
        %v872 = vadd.f32 0.0, %v871
        %v873 = vpop.f32.mrf.mxu0
        %v874 = vpop.f32.mrf.mxu0
        %v875 = vadd.f32 0.0, %v874
        %v876 = vpop.f32.mrf.mxu0
        %877 = vdwg.mxu0
        %878 = vmatprep.subr.bf16.mxu0 0
        %879 = vmatpush1.bf16.msra.mxu0 %v752
        %880 = vmatprep.subr.bf16.mxu0 0
        %881 = vmatpush1.bf16.msra.mxu0 %v751
        %882 = vmatprep.subr.bf16.mxu0 0
        %883 = vmatpush1.bf16.msra.mxu0 %v750
        %884 = vmatprep.subr.bf16.mxu0 0
        %885 = vmatpush1.bf16.msra.mxu0 %v749
        %886 = vmatprep.subr.bf16.mxu0 0
        %887 = vmatpush1.bf16.msra.mxu0 %v748
        %888 = vmatprep.subr.bf16.mxu0 0
        %889 = vmatpush1.bf16.msra.mxu0 %v747
        %890 = vmatprep.subr.bf16.mxu0 0
        %891 = vmatpush1.bf16.msra.mxu0 %v746
        %892 = vmatprep.subr.bf16.mxu0 0
        %893 = vmatpush1.bf16.msra.mxu0 %v745
        %894 = vmatprep.subr.bf16.mxu0 0
        %895 = vmatpush2.bf16.msra.mxu0 %v760
        %896 = vmatprep.subr.bf16.mxu0 0
        %897 = vmatpush2.bf16.msra.mxu0 %v759
        %898 = vmatprep.subr.bf16.mxu0 0
        %899 = vmatpush2.bf16.msra.mxu0 %v758
        %900 = vmatprep.subr.bf16.mxu0 0
        %901 = vmatpush2.bf16.msra.mxu0 %v757
        %902 = vmatprep.subr.bf16.mxu0 0
        %903 = vmatpush2.bf16.msra.mxu0 %v756
        %904 = vmatprep.subr.bf16.mxu0 0
        %905 = vmatpush2.bf16.msra.mxu0 %v755
        %906 = vmatprep.subr.bf16.mxu0 0
        %907 = vmatpush2.bf16.msra.mxu0 %v754
        %908 = vmatprep.subr.bf16.mxu0 0
        %909 = vmatpush2.bf16.msra.mxu0 %v753
        %910 = vmatprep.mubr.bf16.mxu0 %v499
        %911 = vmatmul.mubr.bf16.gmra.mxu0 %v498
        %v912 = vpop.f32.mrf.mxu0
        %v913 = vadd.f32 %v848, %v912
        %v914 = vpop.f32.mrf.mxu0
        %v915 = vpop.f32.mrf.mxu0
        %v916 = vadd.f32 %v851, %v915
        %v917 = vpop.f32.mrf.mxu0
        %918 = vmatprep.mubr.bf16.mxu0 %v503
        %919 = vmatmul.mubr.bf16.gmra.mxu0 %v502
        %v920 = vpop.f32.mrf.mxu0
        %v921 = vadd.f32 %v856, %v920
        %v922 = vpop.f32.mrf.mxu0
        %v923 = vpop.f32.mrf.mxu0
        %v924 = vadd.f32 %v859, %v923
        %v925 = vpop.f32.mrf.mxu0
        %926 = vmatprep.mubr.bf16.mxu0 %v507
        %927 = vmatmul.mubr.bf16.gmra.mxu0 %v506
        %v928 = vpop.f32.mrf.mxu0
        %v929 = vadd.f32 %v864, %v928
        %v930 = vpop.f32.mrf.mxu0
        %v931 = vpop.f32.mrf.mxu0
        %v932 = vadd.f32 %v867, %v931
        %v933 = vpop.f32.mrf.mxu0
        %934 = vmatprep.mubr.bf16.mxu0 %v511
        %935 = vmatmul.mubr.bf16.gmra.mxu0 %v510
        %v936 = vpop.f32.mrf.mxu0
        %v937 = vadd.f32 %v872, %v936
        %v938 = vpop.f32.mrf.mxu0
        %v939 = vpop.f32.mrf.mxu0
        %v940 = vadd.f32 %v875, %v939
        %v941 = vpop.f32.mrf.mxu0
        %942 = vdwg.mxu0
        %943 = vmatprep.subr.bf16.mxu0 0
        %944 = vmatpush1.bf16.msra.mxu0 0
        %945 = vmatprep.subr.bf16.mxu0 0
        %946 = vmatpush1.bf16.msra.mxu0 0
        %947 = vmatprep.subr.bf16.mxu0 0
        %948 = vmatpush1.bf16.msra.mxu0 0
        %949 = vmatprep.subr.bf16.mxu0 0
        %950 = vmatpush1.bf16.msra.mxu0 0
        %951 = vmatprep.subr.bf16.mxu0 0
        %952 = vmatpush1.bf16.msra.mxu0 %v764
        %953 = vmatprep.subr.bf16.mxu0 0
        %954 = vmatpush1.bf16.msra.mxu0 %v763
        %955 = vmatprep.subr.bf16.mxu0 0
        %956 = vmatpush1.bf16.msra.mxu0 %v762
        %957 = vmatprep.subr.bf16.mxu0 0
        %958 = vmatpush1.bf16.msra.mxu0 %v761
        %959 = vmatprep.subr.bf16.mxu0 0
        %960 = vmatpush2.bf16.msra.mxu0 0
        %961 = vmatprep.subr.bf16.mxu0 0
        %962 = vmatpush2.bf16.msra.mxu0 0
        %963 = vmatprep.subr.bf16.mxu0 0
        %964 = vmatpush2.bf16.msra.mxu0 0
        %965 = vmatprep.subr.bf16.mxu0 0
        %966 = vmatpush2.bf16.msra.mxu0 0
        %967 = vmatprep.subr.bf16.mxu0 0
        %968 = vmatpush2.bf16.msra.mxu0 0
        %969 = vmatprep.subr.bf16.mxu0 0
        %970 = vmatpush2.bf16.msra.mxu0 0
        %971 = vmatprep.subr.bf16.mxu0 0
        %972 = vmatpush2.bf16.msra.mxu0 0
        %973 = vmatprep.subr.bf16.mxu0 0
        %974 = vmatpush2.bf16.msra.mxu0 0
        %975 = vmatprep.mubr.bf16.mxu0 0
        %976 = vmatmul.mubr.bf16.gmra.mxu0 %v802
        %v977 = vpop.f32.mrf.mxu0
        %v978 = vadd.f32 %v913, %v977
        %v979 = vpop.f32.mrf.mxu0
        %v980 = vpop.f32.mrf.mxu0
        %v981 = vadd.f32 %v916, %v980
        %v982 = vpop.f32.mrf.mxu0
        %983 = vmatprep.mubr.bf16.mxu0 0
        %984 = vmatmul.mubr.bf16.gmra.mxu0 %v805
        %v985 = vpop.f32.mrf.mxu0
        %v986 = vadd.f32 %v921, %v985
        %v987 = vpop.f32.mrf.mxu0
        %v988 = vpop.f32.mrf.mxu0
        %v989 = vadd.f32 %v924, %v988
        %v990 = vpop.f32.mrf.mxu0
        %991 = vmatprep.mubr.bf16.mxu0 0
        %992 = vmatmul.mubr.bf16.gmra.mxu0 %v808
        %v993 = vpop.f32.mrf.mxu0
        %v994 = vadd.f32 %v929, %v993
        %v995 = vpop.f32.mrf.mxu0
        %v996 = vpop.f32.mrf.mxu0
        %v997 = vadd.f32 %v932, %v996
        %v998 = vpop.f32.mrf.mxu0
        %999 = vmatprep.mubr.bf16.mxu0 0
        %1000 = vmatmul.mubr.bf16.gmra.mxu0 %v811
        %v1001 = vpop.f32.mrf.mxu0
        %v1002 = vadd.f32 %v937, %v1001
        %v1003 = vpop.f32.mrf.mxu0
        %v1004 = vpop.f32.mrf.mxu0
        %v1005 = vadd.f32 %v940, %v1004
        %v1006 = vpop.f32.mrf.mxu0
        %1007 = vdwg.mxu0
        %v1008 = vld [vmem:[%s2] sm:$0x1]
        %v1009 = vlaneseq
        %v1010 = vshrl.u32 %v1009, 7
        %v1011 = vsub.s32 0, %v1010
        %v1012 = vrot.slane %v1008, %v1011
        %v1013 = vmul.f32 %v978, %v1012
        %v1014 = vmul.f32 %v981, %v1012
        %v1015 = vmul.f32 %v986, %v1012
        %v1016 = vmul.f32 %v989, %v1012
        %v1017 = vmul.f32 %v994, %v1012
        %v1018 = vmul.f32 %v997, %v1012
        %v1019 = vmul.f32 %v1002, %v1012
        %v1020 = vmul.f32 %v1005, %v1012
        %v1021 = vld [vmem:[%s3] sm:$0x1]
        %v1022 = vlaneseq
        %v1023 = vshrl.u32 %v1022, 7
        %v1024 = vsub.s32 0, %v1023
        %v1025 = vrot.slane %v1021, %v1024
        %v1026 = vadd.f32 %v1013, %v1025
        %v1027 = vadd.f32 %v1014, %v1025
        %v1028 = vadd.f32 %v1015, %v1025
        %v1029 = vadd.f32 %v1016, %v1025
        %v1030 = vadd.f32 %v1017, %v1025
        %v1031 = vadd.f32 %v1018, %v1025
        %v1032 = vadd.f32 %v1019, %v1025
        %v1033 = vadd.f32 %v1020, %v1025
        %v1034 = vmax.f32 %v1026, 0.0
        %v1035 = vmax.f32 %v1027, 0.0
        %v1036 = vmax.f32 %v1028, 0.0
        %v1037 = vmax.f32 %v1029, 0.0
        %v1038 = vmax.f32 %v1030, 0.0
        %v1039 = vmax.f32 %v1031, 0.0
        %v1040 = vmax.f32 %v1032, 0.0
        %v1041 = vmax.f32 %v1033, 0.0
        %v1050 = vrot.slane %v1034, 7
        %v1051 = vrot.slane %v1035, 7
        %v1052 = vrot.slane %v1036, 7
        %v1053 = vrot.slane %v1037, 7
        %v1054 = vrot.slane %v1038, 7
        %v1055 = vrot.slane %v1039, 7
        %v1056 = vrot.slane %v1040, 7
        %v1057 = vrot.slane %v1041, 7
        %v1066 = vsel %vm285, 0.0, %v1050
        %v1067 = vsel %vm285, 0.0, %v1051
        %v1068 = vsel %vm285, 0.0, %v1052
        %v1069 = vsel %vm285, 0.0, %v1053
        %v1070 = vsel %vm285, 0.0, %v1054
        %v1071 = vsel %vm285, 0.0, %v1055
        %v1072 = vsel %vm285, 0.0, %v1056
        %v1073 = vsel %vm285, 0.0, %v1057
        %v1074 = vsel %vm285, %v1050, 0.0
        %v1075 = vsel %vm285, %v1051, 0.0
        %v1076 = vsel %vm285, %v1052, 0.0
        %v1077 = vsel %vm285, %v1053, 0.0
        %v1078 = vsel %vm285, %v1054, 0.0
        %v1079 = vsel %vm285, %v1055, 0.0
        %v1080 = vsel %vm285, %v1056, 0.0
        %v1081 = vsel %vm285, %v1057, 0.0
        %v1096 = vrot.slane %v1066, 1
        %v1097 = vrot.slane %v1074, 1
        %v1098 = vsel %vm320, %v1096, %v1097
        %v1099 = vrot.slane %v1067, 1
        %v1100 = vrot.slane %v1075, 1
        %v1101 = vsel %vm320, %v1099, %v1100
        %v1102 = vrot.slane %v1068, 1
        %v1103 = vrot.slane %v1076, 1
        %v1104 = vsel %vm320, %v1102, %v1103
        %v1105 = vrot.slane %v1069, 1
        %v1106 = vrot.slane %v1077, 1
        %v1107 = vsel %vm320, %v1105, %v1106
        %v1108 = vrot.slane %v1070, 1
        %v1109 = vrot.slane %v1078, 1
        %v1110 = vsel %vm320, %v1108, %v1109
        %v1111 = vrot.slane %v1071, 1
        %v1112 = vrot.slane %v1079, 1
        %v1113 = vsel %vm320, %v1111, %v1112
        %v1114 = vrot.slane %v1072, 1
        %v1115 = vrot.slane %v1080, 1
        %v1116 = vsel %vm320, %v1114, %v1115
        %v1117 = vrot.slane %v1066, 2
        %v1118 = vrot.slane %v1074, 2
        %v1119 = vsel %vm345, %v1117, %v1118
        %v1120 = vrot.slane %v1067, 2
        %v1121 = vrot.slane %v1075, 2
        %v1122 = vsel %vm345, %v1120, %v1121
        %v1123 = vrot.slane %v1068, 2
        %v1124 = vrot.slane %v1076, 2
        %v1125 = vsel %vm345, %v1123, %v1124
        %v1126 = vrot.slane %v1069, 2
        %v1127 = vrot.slane %v1077, 2
        %v1128 = vsel %vm345, %v1126, %v1127
        %v1129 = vrot.slane %v1070, 2
        %v1130 = vrot.slane %v1078, 2
        %v1131 = vsel %vm345, %v1129, %v1130
        %v1132 = vrot.slane %v1071, 2
        %v1133 = vrot.slane %v1079, 2
        %v1134 = vsel %vm345, %v1132, %v1133
        %v1135 = vrot.slane %v1072, 2
        %v1136 = vrot.slane %v1080, 2
        %v1137 = vsel %vm345, %v1135, %v1136
        %v1147 = vrot.slane %v1073, 1
        %v1148 = vrot.slane %v1081, 1
        %v1149 = vsel %vm320, %v1147, %v1148
        %v1158 = vrot.slane %v1073, 2
        %v1159 = vrot.slane %v1081, 2
        %v1160 = vsel %vm345, %v1158, %v1159
        %1162 = vrot.lane.b32.xlu0 %v1098, 64
        %v1163 = vpop.permute.xlu0 %1162
        %1164 = vrot.lane.b32.xlu0 %v1101, 64
        %v1165 = vpop.permute.xlu0 %1164
        %1166 = vrot.lane.b32.xlu0 %v1104, 64
        %v1167 = vpop.permute.xlu0 %1166
        %1168 = vrot.lane.b32.xlu0 %v1107, 64
        %v1169 = vpop.permute.xlu0 %1168
        %1170 = vrot.lane.b32.xlu0 %v1110, 64
        %v1171 = vpop.permute.xlu0 %1170
        %1172 = vrot.lane.b32.xlu0 %v1113, 64
        %v1173 = vpop.permute.xlu0 %1172
        %1174 = vrot.lane.b32.xlu0 %v1116, 64
        %v1175 = vpop.permute.xlu0 %1174
        %1183 = vrot.lane.b32.xlu0 %v1066, 64
        %v1184 = vpop.permute.xlu0 %1183
        %1185 = vrot.lane.b32.xlu0 %v1067, 64
        %v1186 = vpop.permute.xlu0 %1185
        %1187 = vrot.lane.b32.xlu0 %v1068, 64
        %v1188 = vpop.permute.xlu0 %1187
        %1189 = vrot.lane.b32.xlu0 %v1069, 64
        %v1190 = vpop.permute.xlu0 %1189
        %1191 = vrot.lane.b32.xlu0 %v1070, 64
        %v1192 = vpop.permute.xlu0 %1191
        %1193 = vrot.lane.b32.xlu0 %v1071, 64
        %v1194 = vpop.permute.xlu0 %1193
        %1195 = vrot.lane.b32.xlu0 %v1072, 64
        %v1196 = vpop.permute.xlu0 %1195
        %1197 = vrot.lane.b32.xlu0 %v1073, 64
        %v1198 = vpop.permute.xlu0 %1197
        %1207 = vrot.lane.b32.xlu0 %v1119, 64
        %v1208 = vpop.permute.xlu0 %1207
        %1209 = vrot.lane.b32.xlu0 %v1122, 64
        %v1210 = vpop.permute.xlu0 %1209
        %1211 = vrot.lane.b32.xlu0 %v1125, 64
        %v1212 = vpop.permute.xlu0 %1211
        %1213 = vrot.lane.b32.xlu0 %v1128, 64
        %v1214 = vpop.permute.xlu0 %1213
        %1215 = vrot.lane.b32.xlu0 %v1131, 64
        %v1216 = vpop.permute.xlu0 %1215
        %1217 = vrot.lane.b32.xlu0 %v1134, 64
        %v1218 = vpop.permute.xlu0 %1217
        %1219 = vrot.lane.b32.xlu0 %v1137, 64
        %v1220 = vpop.permute.xlu0 %1219
        %1221 = vrot.lane.b32.xlu0 %v1160, 64
        %v1222 = vpop.permute.xlu0 %1221
        %1231 = vrot.lane.b32.xlu0 %v1149, 64
        %v1232 = vpop.permute.xlu0 %1231
        %v1234 = vsel %vm470, %v1066, %v1163
        %v1235 = vsel %vm470, %v1067, %v1165
        %v1236 = vsel %vm470, %v1068, %v1167
        %v1237 = vsel %vm470, %v1069, %v1169
        %v1238 = vsel %vm470, %v1070, %v1171
        %v1239 = vsel %vm470, %v1071, %v1173
        %v1240 = vsel %vm470, %v1072, %v1175
        %v1241 = vsel %vm470, %v348, %v1184
        %v1242 = vsel %vm470, %v1119, %v1186
        %v1243 = vsel %vm470, %v1122, %v1188
        %v1244 = vsel %vm470, %v1125, %v1190
        %v1245 = vsel %vm470, %v1128, %v1192
        %v1246 = vsel %vm470, %v1131, %v1194
        %v1247 = vsel %vm470, %v1134, %v1196
        %v1248 = vsel %vm470, %v1137, %v1198
        %v1249 = vsel %vm470, %v1098, %v1208
        %v1250 = vsel %vm470, %v1101, %v1210
        %v1251 = vsel %vm470, %v1104, %v1212
        %v1252 = vsel %vm470, %v1107, %v1214
        %v1253 = vsel %vm470, %v1110, %v1216
        %v1254 = vsel %vm470, %v1113, %v1218
        %v1255 = vsel %vm470, %v1116, %v1220
        %v1256 = vsel %vm470, %v1149, %v1222
        %v1257 = vsel %vm470, %v1073, %v1232
        %v1258 = vpack.c.bf16 %v1234, %v471
        %v1259 = vpack.c.bf16 %v1242, %v1241
        %v1260 = vpack.c.bf16 %v1250, %v1249
        %v1261 = vpack.c.bf16 %v1236, %v1235
        %v1262 = vpack.c.bf16 %v1125, %v1122
        %v1263 = vpack.c.bf16 %v1244, %v1243
        %v1264 = vpack.c.bf16 %v1252, %v1251
        %v1265 = vpack.c.bf16 %v1238, %v1237
        %v1266 = vpack.c.bf16 %v1131, %v1128
        %v1267 = vpack.c.bf16 %v1246, %v1245
        %v1268 = vpack.c.bf16 %v1254, %v1253
        %v1269 = vpack.c.bf16 %v1240, %v1239
        %v1270 = vpack.c.bf16 %v1137, %v1134
        %v1271 = vpack.c.bf16 %v1248, %v1247
        %v1272 = vpack.c.bf16 %v1256, %v1255
        %v1273 = vpack.c.bf16 %v471, %v1257
        %v1274 = vpack.c.bf16 %v348, %v1160
        %s1275 = scalar_lea.vmem %s1, 288
        %v1276 = vld [vmem:[%s1275] sm:$0xf]
        %v1277 = vld [vmem:[%s1275 + $0x4] sm:$0xf]
        %v1278 = vld [vmem:[%s1275 + $0x8] sm:$0xf]
        %v1279 = vld [vmem:[%s1275 + $0xc] sm:$0xf]
        %v1280 = vld [vmem:[%s1275 + $0x10] sm:$0xf]
        %v1281 = vld [vmem:[%s1275 + $0x14] sm:$0xf]
        %v1282 = vld [vmem:[%s1275 + $0x18] sm:$0xf]
        %v1283 = vld [vmem:[%s1275 + $0x1c] sm:$0xf]
        %v1284 = vld [vmem:[%s1275 + $0x20] sm:$0xf]
        %v1285 = vld [vmem:[%s1275 + $0x24] sm:$0xf]
        %v1286 = vld [vmem:[%s1275 + $0x28] sm:$0xf]
        %v1287 = vld [vmem:[%s1275 + $0x2c] sm:$0xf]
        %v1288 = vld [vmem:[%s1275 + $0x30] sm:$0xf]
        %v1289 = vld [vmem:[%s1275 + $0x34] sm:$0xf]
        %v1290 = vld [vmem:[%s1275 + $0x38] sm:$0xf]
        %v1291 = vld [vmem:[%s1275 + $0x3c] sm:$0xf]
        %v1292 = vld [vmem:[%s1275 + $0x40] sm:$0xf]
        %v1293 = vld [vmem:[%s1275 + $0x44] sm:$0xf]
        %v1294 = vld [vmem:[%s1275 + $0x48] sm:$0xf]
        %v1295 = vld [vmem:[%s1275 + $0x4c] sm:$0xf]
        %v1296 = vld [vmem:[%s1275 + $0x50] sm:$0xf]
        %v1297 = vld [vmem:[%s1275 + $0x54] sm:$0xf]
        %v1298 = vld [vmem:[%s1275 + $0x58] sm:$0xf]
        %v1299 = vld [vmem:[%s1275 + $0x5c] sm:$0xf]
        %v1300 = vld [vmem:[%s1275 + $0x60] sm:$0xf]
        %v1301 = vld [vmem:[%s1275 + $0x64] sm:$0xf]
        %v1302 = vld [vmem:[%s1275 + $0x68] sm:$0xf]
        %v1303 = vld [vmem:[%s1275 + $0x6c] sm:$0xf]
        %v1304 = vld [vmem:[%s1275 + $0x70] sm:$0xf]
        %v1305 = vld [vmem:[%s1275 + $0x74] sm:$0xf]
        %v1306 = vld [vmem:[%s1275 + $0x78] sm:$0xf]
        %v1307 = vld [vmem:[%s1275 + $0x7c] sm:$0xf]
        %v1308 = vld [vmem:[%s1275 + $0x80] sm:$0xf]
        %v1309 = vld [vmem:[%s1275 + $0x84] sm:$0xf]
        %v1310 = vld [vmem:[%s1275 + $0x88] sm:$0xf]
        %v1311 = vld [vmem:[%s1275 + $0x8c] sm:$0xf]
        %v1312 = vld [vmem:[%s1275 + $0x90] sm:$0xf]
        %v1313 = vld [vmem:[%s1275 + $0x94] sm:$0xf]
        %v1314 = vld [vmem:[%s1275 + $0x98] sm:$0xf]
        %v1315 = vld [vmem:[%s1275 + $0x9c] sm:$0xf]
        %v1316 = vld [vmem:[%s1275 + $0xa0] sm:$0xf]
        %v1317 = vld [vmem:[%s1275 + $0xa4] sm:$0xf]
        %v1318 = vld [vmem:[%s1275 + $0xa8] sm:$0xf]
        %v1319 = vld [vmem:[%s1275 + $0xac] sm:$0xf]
        %v1320 = vld [vmem:[%s1275 + $0xb0] sm:$0xf]
        %v1321 = vld [vmem:[%s1275 + $0xb4] sm:$0xf]
        %v1322 = vld [vmem:[%s1275 + $0xb8] sm:$0xf]
        %v1323 = vld [vmem:[%s1275 + $0xbc] sm:$0xf]
        %v1324 = vld [vmem:[%s1275 + $0xc0] sm:$0xf]
        %v1325 = vld [vmem:[%s1275 + $0xc4] sm:$0xf]
        %v1326 = vld [vmem:[%s1275 + $0xc8] sm:$0xf]
        %v1327 = vld [vmem:[%s1275 + $0xcc] sm:$0xf]
        %v1328 = vld [vmem:[%s1275 + $0xd0] sm:$0xf]
        %v1329 = vld [vmem:[%s1275 + $0xd4] sm:$0xf]
        %v1330 = vld [vmem:[%s1275 + $0xd8] sm:$0xf]
        %v1331 = vld [vmem:[%s1275 + $0xdc] sm:$0xf]
        %v1332 = vld [vmem:[%s1275 + $0xe0] sm:$0xf]
        %v1333 = vld [vmem:[%s1275 + $0xe4] sm:$0xf]
        %v1334 = vld [vmem:[%s1275 + $0xe8] sm:$0xf]
        %v1335 = vld [vmem:[%s1275 + $0xec] sm:$0xf]
        %v1336 = vld [vmem:[%s1275 + $0xf0] sm:$0xf]
        %v1337 = vld [vmem:[%s1275 + $0xf4] sm:$0xf]
        %v1338 = vld [vmem:[%s1275 + $0xf8] sm:$0xf]
        %v1339 = vld [vmem:[%s1275 + $0xfc] sm:$0xf]
        %v1340 = vld [vmem:[%s1275 + $0x100] sm:$0xf]
        %v1341 = vld [vmem:[%s1275 + $0x104] sm:$0xf]
        %v1342 = vld [vmem:[%s1275 + $0x108] sm:$0xf]
        %v1343 = vld [vmem:[%s1275 + $0x10c] sm:$0xf]
        %v1344 = vld [vmem:[%s1275 + $0x110] sm:$0xf]
        %v1345 = vld [vmem:[%s1275 + $0x114] sm:$0xf]
        %v1346 = vld [vmem:[%s1275 + $0x118] sm:$0xf]
        %v1347 = vld [vmem:[%s1275 + $0x11c] sm:$0xf]
        %v1420 = vunpack.c.l.b16 %v1276
        %v1421 = vunpack.c.l.b16 %v1277
        %v1422 = vunpack.c.l.b16 %v1278
        %v1423 = vunpack.c.l.b16 %v1279
        %v1424 = vunpack.c.l.b16 %v1280
        %v1425 = vunpack.c.l.b16 %v1281
        %v1426 = vunpack.c.l.b16 %v1282
        %v1427 = vunpack.c.l.b16 %v1283
        %v1428 = vunpack.c.l.b16 %v1284
        %v1429 = vunpack.c.l.b16 %v1285
        %v1430 = vunpack.c.l.b16 %v1286
        %v1431 = vunpack.c.l.b16 %v1287
        %v1432 = vunpack.c.l.b16 %v1288
        %v1433 = vunpack.c.l.b16 %v1289
        %v1434 = vunpack.c.l.b16 %v1290
        %v1435 = vunpack.c.l.b16 %v1291
        %v1436 = vunpack.c.l.b16 %v1292
        %v1437 = vunpack.c.l.b16 %v1293
        %v1438 = vunpack.c.l.b16 %v1294
        %v1439 = vunpack.c.l.b16 %v1295
        %v1440 = vunpack.c.l.b16 %v1296
        %v1441 = vunpack.c.l.b16 %v1297
        %v1442 = vunpack.c.l.b16 %v1298
        %v1443 = vunpack.c.l.b16 %v1299
        %v1444 = vunpack.c.l.b16 %v1300
        %v1445 = vunpack.c.l.b16 %v1301
        %v1446 = vunpack.c.l.b16 %v1302
        %v1447 = vunpack.c.l.b16 %v1303
        %v1448 = vunpack.c.l.b16 %v1304
        %v1449 = vunpack.c.l.b16 %v1305
        %v1450 = vunpack.c.l.b16 %v1306
        %v1451 = vunpack.c.l.b16 %v1307
        %v1452 = vunpack.c.l.b16 %v1308
        %v1453 = vunpack.c.l.b16 %v1309
        %v1454 = vunpack.c.l.b16 %v1310
        %v1455 = vunpack.c.l.b16 %v1311
        %v1456 = vunpack.c.l.b16 %v1312
        %v1457 = vunpack.c.l.b16 %v1313
        %v1458 = vunpack.c.l.b16 %v1314
        %v1459 = vunpack.c.l.b16 %v1315
        %v1460 = vunpack.c.l.b16 %v1316
        %v1461 = vunpack.c.l.b16 %v1317
        %v1462 = vunpack.c.l.b16 %v1318
        %v1463 = vunpack.c.l.b16 %v1319
        %v1464 = vunpack.c.l.b16 %v1320
        %v1465 = vunpack.c.l.b16 %v1321
        %v1466 = vunpack.c.l.b16 %v1322
        %v1467 = vunpack.c.l.b16 %v1323
        %v1468 = vunpack.c.l.b16 %v1324
        %v1469 = vunpack.c.l.b16 %v1325
        %v1470 = vunpack.c.l.b16 %v1326
        %v1471 = vunpack.c.l.b16 %v1327
        %v1472 = vunpack.c.l.b16 %v1328
        %v1473 = vunpack.c.l.b16 %v1329
        %v1474 = vunpack.c.l.b16 %v1330
        %v1475 = vunpack.c.l.b16 %v1331
        %v1476 = vunpack.c.l.b16 %v1332
        %v1477 = vunpack.c.l.b16 %v1333
        %v1478 = vunpack.c.l.b16 %v1334
        %v1479 = vunpack.c.l.b16 %v1335
        %v1480 = vunpack.c.l.b16 %v1336
        %v1481 = vunpack.c.l.b16 %v1337
        %v1482 = vunpack.c.l.b16 %v1338
        %v1483 = vunpack.c.l.b16 %v1339
        %v1484 = vunpack.c.l.b16 %v1340
        %v1485 = vunpack.c.l.b16 %v1341
        %v1486 = vunpack.c.l.b16 %v1342
        %v1487 = vunpack.c.l.b16 %v1343
        %v1488 = vunpack.c.l.b16 %v1344
        %v1489 = vunpack.c.l.b16 %v1345
        %v1490 = vunpack.c.l.b16 %v1346
        %v1491 = vunpack.c.l.b16 %v1347
        %v1492 = vpack.c.b16 %v1421, %v1420
        %v1493 = vpack.c.b16 %v1423, %v1422
        %v1494 = vpack.c.b16 %v1425, %v1424
        %v1495 = vpack.c.b16 %v1427, %v1426
        %v1496 = vpack.c.b16 %v1429, %v1428
        %v1497 = vpack.c.b16 %v1431, %v1430
        %v1498 = vpack.c.b16 %v1433, %v1432
        %v1499 = vpack.c.b16 %v1435, %v1434
        %v1500 = vpack.c.b16 %v1437, %v1436
        %v1501 = vpack.c.b16 %v1439, %v1438
        %v1502 = vpack.c.b16 %v1441, %v1440
        %v1503 = vpack.c.b16 %v1443, %v1442
        %v1504 = vpack.c.b16 %v1445, %v1444
        %v1505 = vpack.c.b16 %v1447, %v1446
        %v1506 = vpack.c.b16 %v1449, %v1448
        %v1507 = vpack.c.b16 %v1451, %v1450
        %v1508 = vpack.c.b16 %v1453, %v1452
        %v1509 = vpack.c.b16 %v1455, %v1454
        %v1510 = vpack.c.b16 %v1457, %v1456
        %v1511 = vpack.c.b16 %v1459, %v1458
        %v1512 = vpack.c.b16 %v1461, %v1460
        %v1513 = vpack.c.b16 %v1463, %v1462
        %v1514 = vpack.c.b16 %v1465, %v1464
        %v1515 = vpack.c.b16 %v1467, %v1466
        %v1516 = vpack.c.b16 %v1469, %v1468
        %v1517 = vpack.c.b16 %v1471, %v1470
        %v1518 = vpack.c.b16 %v1473, %v1472
        %v1519 = vpack.c.b16 %v1475, %v1474
        %v1520 = vpack.c.b16 %v1477, %v1476
        %v1521 = vpack.c.b16 %v1479, %v1478
        %v1522 = vpack.c.b16 %v1481, %v1480
        %v1523 = vpack.c.b16 %v1483, %v1482
        %v1524 = vpack.c.b16 %v1485, %v1484
        %v1525 = vpack.c.b16 %v1487, %v1486
        %v1526 = vpack.c.b16 %v1489, %v1488
        %v1527 = vpack.c.b16 %v1491, %v1490
        %v1565 = vsel %vm470, %v1262, 0
        %v1568 = vsel %vm470, %v1266, 0
        %v1571 = vsel %vm470, %v1270, 0
        %v1574 = vsel %vm470, %v1274, 0
        %1576 = vmatprep.subr.bf16.mxu0 0
        %1577 = vmatpush1.bf16.msra.mxu0 %v1499
        %1578 = vmatprep.subr.bf16.mxu0 0
        %1579 = vmatpush1.bf16.msra.mxu0 %v1498
        %1580 = vmatprep.subr.bf16.mxu0 0
        %1581 = vmatpush1.bf16.msra.mxu0 %v1497
        %1582 = vmatprep.subr.bf16.mxu0 0
        %1583 = vmatpush1.bf16.msra.mxu0 %v1496
        %1584 = vmatprep.subr.bf16.mxu0 0
        %1585 = vmatpush1.bf16.msra.mxu0 %v1495
        %1586 = vmatprep.subr.bf16.mxu0 0
        %1587 = vmatpush1.bf16.msra.mxu0 %v1494
        %1588 = vmatprep.subr.bf16.mxu0 0
        %1589 = vmatpush1.bf16.msra.mxu0 %v1493
        %1590 = vmatprep.subr.bf16.mxu0 0
        %1591 = vmatpush1.bf16.msra.mxu0 %v1492
        %1592 = vmatprep.subr.bf16.mxu0 0
        %1593 = vmatpush2.bf16.msra.mxu0 %v1507
        %1594 = vmatprep.subr.bf16.mxu0 0
        %1595 = vmatpush2.bf16.msra.mxu0 %v1506
        %1596 = vmatprep.subr.bf16.mxu0 0
        %1597 = vmatpush2.bf16.msra.mxu0 %v1505
        %1598 = vmatprep.subr.bf16.mxu0 0
        %1599 = vmatpush2.bf16.msra.mxu0 %v1504
        %1600 = vmatprep.subr.bf16.mxu0 0
        %1601 = vmatpush2.bf16.msra.mxu0 %v1503
        %1602 = vmatprep.subr.bf16.mxu0 0
        %1603 = vmatpush2.bf16.msra.mxu0 %v1502
        %1604 = vmatprep.subr.bf16.mxu0 0
        %1605 = vmatpush2.bf16.msra.mxu0 %v1501
        %1606 = vmatprep.subr.bf16.mxu0 0
        %1607 = vmatpush2.bf16.msra.mxu0 %v1500
        %1608 = vmatprep.mubr.bf16.mxu0 %v1259
        %1609 = vmatmul.mubr.bf16.gmra.mxu0 %v1258
        %v1610 = vpop.f32.mrf.mxu0
        %v1611 = vadd.f32 0.0, %v1610
        %v1612 = vpop.f32.mrf.mxu0
        %v1613 = vpop.f32.mrf.mxu0
        %v1614 = vadd.f32 0.0, %v1613
        %v1615 = vpop.f32.mrf.mxu0
        %1616 = vmatprep.mubr.bf16.mxu0 %v1263
        %1617 = vmatmul.mubr.bf16.gmra.mxu0 %v1261
        %v1618 = vpop.f32.mrf.mxu0
        %v1619 = vadd.f32 0.0, %v1618
        %v1620 = vpop.f32.mrf.mxu0
        %v1621 = vpop.f32.mrf.mxu0
        %v1622 = vadd.f32 0.0, %v1621
        %v1623 = vpop.f32.mrf.mxu0
        %1624 = vmatprep.mubr.bf16.mxu0 %v1267
        %1625 = vmatmul.mubr.bf16.gmra.mxu0 %v1265
        %v1626 = vpop.f32.mrf.mxu0
        %v1627 = vadd.f32 0.0, %v1626
        %v1628 = vpop.f32.mrf.mxu0
        %v1629 = vpop.f32.mrf.mxu0
        %v1630 = vadd.f32 0.0, %v1629
        %v1631 = vpop.f32.mrf.mxu0
        %1632 = vmatprep.mubr.bf16.mxu0 %v1271
        %1633 = vmatmul.mubr.bf16.gmra.mxu0 %v1269
        %v1634 = vpop.f32.mrf.mxu0
        %v1635 = vadd.f32 0.0, %v1634
        %v1636 = vpop.f32.mrf.mxu0
        %v1637 = vpop.f32.mrf.mxu0
        %v1638 = vadd.f32 0.0, %v1637
        %v1639 = vpop.f32.mrf.mxu0
        %1640 = vdwg.mxu0
        %1641 = vmatprep.subr.bf16.mxu0 0
        %1642 = vmatpush1.bf16.msra.mxu0 %v1515
        %1643 = vmatprep.subr.bf16.mxu0 0
        %1644 = vmatpush1.bf16.msra.mxu0 %v1514
        %1645 = vmatprep.subr.bf16.mxu0 0
        %1646 = vmatpush1.bf16.msra.mxu0 %v1513
        %1647 = vmatprep.subr.bf16.mxu0 0
        %1648 = vmatpush1.bf16.msra.mxu0 %v1512
        %1649 = vmatprep.subr.bf16.mxu0 0
        %1650 = vmatpush1.bf16.msra.mxu0 %v1511
        %1651 = vmatprep.subr.bf16.mxu0 0
        %1652 = vmatpush1.bf16.msra.mxu0 %v1510
        %1653 = vmatprep.subr.bf16.mxu0 0
        %1654 = vmatpush1.bf16.msra.mxu0 %v1509
        %1655 = vmatprep.subr.bf16.mxu0 0
        %1656 = vmatpush1.bf16.msra.mxu0 %v1508
        %1657 = vmatprep.subr.bf16.mxu0 0
        %1658 = vmatpush2.bf16.msra.mxu0 %v1523
        %1659 = vmatprep.subr.bf16.mxu0 0
        %1660 = vmatpush2.bf16.msra.mxu0 %v1522
        %1661 = vmatprep.subr.bf16.mxu0 0
        %1662 = vmatpush2.bf16.msra.mxu0 %v1521
        %1663 = vmatprep.subr.bf16.mxu0 0
        %1664 = vmatpush2.bf16.msra.mxu0 %v1520
        %1665 = vmatprep.subr.bf16.mxu0 0
        %1666 = vmatpush2.bf16.msra.mxu0 %v1519
        %1667 = vmatprep.subr.bf16.mxu0 0
        %1668 = vmatpush2.bf16.msra.mxu0 %v1518
        %1669 = vmatprep.subr.bf16.mxu0 0
        %1670 = vmatpush2.bf16.msra.mxu0 %v1517
        %1671 = vmatprep.subr.bf16.mxu0 0
        %1672 = vmatpush2.bf16.msra.mxu0 %v1516
        %1673 = vmatprep.mubr.bf16.mxu0 %v1261
        %1674 = vmatmul.mubr.bf16.gmra.mxu0 %v1260
        %v1675 = vpop.f32.mrf.mxu0
        %v1676 = vadd.f32 %v1611, %v1675
        %v1677 = vpop.f32.mrf.mxu0
        %v1678 = vpop.f32.mrf.mxu0
        %v1679 = vadd.f32 %v1614, %v1678
        %v1680 = vpop.f32.mrf.mxu0
        %1681 = vmatprep.mubr.bf16.mxu0 %v1265
        %1682 = vmatmul.mubr.bf16.gmra.mxu0 %v1264
        %v1683 = vpop.f32.mrf.mxu0
        %v1684 = vadd.f32 %v1619, %v1683
        %v1685 = vpop.f32.mrf.mxu0
        %v1686 = vpop.f32.mrf.mxu0
        %v1687 = vadd.f32 %v1622, %v1686
        %v1688 = vpop.f32.mrf.mxu0
        %1689 = vmatprep.mubr.bf16.mxu0 %v1269
        %1690 = vmatmul.mubr.bf16.gmra.mxu0 %v1268
        %v1691 = vpop.f32.mrf.mxu0
        %v1692 = vadd.f32 %v1627, %v1691
        %v1693 = vpop.f32.mrf.mxu0
        %v1694 = vpop.f32.mrf.mxu0
        %v1695 = vadd.f32 %v1630, %v1694
        %v1696 = vpop.f32.mrf.mxu0
        %1697 = vmatprep.mubr.bf16.mxu0 %v1273
        %1698 = vmatmul.mubr.bf16.gmra.mxu0 %v1272
        %v1699 = vpop.f32.mrf.mxu0
        %v1700 = vadd.f32 %v1635, %v1699
        %v1701 = vpop.f32.mrf.mxu0
        %v1702 = vpop.f32.mrf.mxu0
        %v1703 = vadd.f32 %v1638, %v1702
        %v1704 = vpop.f32.mrf.mxu0
        %1705 = vdwg.mxu0
        %1706 = vmatprep.subr.bf16.mxu0 0
        %1707 = vmatpush1.bf16.msra.mxu0 0
        %1708 = vmatprep.subr.bf16.mxu0 0
        %1709 = vmatpush1.bf16.msra.mxu0 0
        %1710 = vmatprep.subr.bf16.mxu0 0
        %1711 = vmatpush1.bf16.msra.mxu0 0
        %1712 = vmatprep.subr.bf16.mxu0 0
        %1713 = vmatpush1.bf16.msra.mxu0 0
        %1714 = vmatprep.subr.bf16.mxu0 0
        %1715 = vmatpush1.bf16.msra.mxu0 %v1527
        %1716 = vmatprep.subr.bf16.mxu0 0
        %1717 = vmatpush1.bf16.msra.mxu0 %v1526
        %1718 = vmatprep.subr.bf16.mxu0 0
        %1719 = vmatpush1.bf16.msra.mxu0 %v1525
        %1720 = vmatprep.subr.bf16.mxu0 0
        %1721 = vmatpush1.bf16.msra.mxu0 %v1524
        %1722 = vmatprep.subr.bf16.mxu0 0
        %1723 = vmatpush2.bf16.msra.mxu0 0
        %1724 = vmatprep.subr.bf16.mxu0 0
        %1725 = vmatpush2.bf16.msra.mxu0 0
        %1726 = vmatprep.subr.bf16.mxu0 0
        %1727 = vmatpush2.bf16.msra.mxu0 0
        %1728 = vmatprep.subr.bf16.mxu0 0
        %1729 = vmatpush2.bf16.msra.mxu0 0
        %1730 = vmatprep.subr.bf16.mxu0 0
        %1731 = vmatpush2.bf16.msra.mxu0 0
        %1732 = vmatprep.subr.bf16.mxu0 0
        %1733 = vmatpush2.bf16.msra.mxu0 0
        %1734 = vmatprep.subr.bf16.mxu0 0
        %1735 = vmatpush2.bf16.msra.mxu0 0
        %1736 = vmatprep.subr.bf16.mxu0 0
        %1737 = vmatpush2.bf16.msra.mxu0 0
        %1738 = vmatprep.mubr.bf16.mxu0 0
        %1739 = vmatmul.mubr.bf16.gmra.mxu0 %v1565
        %v1740 = vpop.f32.mrf.mxu0
        %v1741 = vadd.f32 %v1676, %v1740
        %v1742 = vpop.f32.mrf.mxu0
        %v1743 = vpop.f32.mrf.mxu0
        %v1744 = vadd.f32 %v1679, %v1743
        %v1745 = vpop.f32.mrf.mxu0
        %1746 = vmatprep.mubr.bf16.mxu0 0
        %1747 = vmatmul.mubr.bf16.gmra.mxu0 %v1568
        %v1748 = vpop.f32.mrf.mxu0
        %v1749 = vadd.f32 %v1684, %v1748
        %v1750 = vpop.f32.mrf.mxu0
        %v1751 = vpop.f32.mrf.mxu0
        %v1752 = vadd.f32 %v1687, %v1751
        %v1753 = vpop.f32.mrf.mxu0
        %1754 = vmatprep.mubr.bf16.mxu0 0
        %1755 = vmatmul.mubr.bf16.gmra.mxu0 %v1571
        %v1756 = vpop.f32.mrf.mxu0
        %v1757 = vadd.f32 %v1692, %v1756
        %v1758 = vpop.f32.mrf.mxu0
        %v1759 = vpop.f32.mrf.mxu0
        %v1760 = vadd.f32 %v1695, %v1759
        %v1761 = vpop.f32.mrf.mxu0
        %1762 = vmatprep.mubr.bf16.mxu0 0
        %1763 = vmatmul.mubr.bf16.gmra.mxu0 %v1574
        %v1764 = vpop.f32.mrf.mxu0
        %v1765 = vadd.f32 %v1700, %v1764
        %v1766 = vpop.f32.mrf.mxu0
        %v1767 = vpop.f32.mrf.mxu0
        %v1768 = vadd.f32 %v1703, %v1767
        %v1769 = vpop.f32.mrf.mxu0
        %1770 = vdwg.mxu0
        %v1771 = vld [vmem:[%s2 + $0x1] sm:$0x1]
        %v1772 = vlaneseq
        %v1773 = vshrl.u32 %v1772, 7
        %v1774 = vsub.s32 0, %v1773
        %v1775 = vrot.slane %v1771, %v1774
        %v1776 = vmul.f32 %v1741, %v1775
        %v1777 = vmul.f32 %v1744, %v1775
        %v1778 = vmul.f32 %v1749, %v1775
        %v1779 = vmul.f32 %v1752, %v1775
        %v1780 = vmul.f32 %v1757, %v1775
        %v1781 = vmul.f32 %v1760, %v1775
        %v1782 = vmul.f32 %v1765, %v1775
        %v1783 = vmul.f32 %v1768, %v1775
        %v1784 = vld [vmem:[%s3 + $0x1] sm:$0x1]
        %v1785 = vlaneseq
        %v1786 = vshrl.u32 %v1785, 7
        %v1787 = vsub.s32 0, %v1786
        %v1788 = vrot.slane %v1784, %v1787
        %v1789 = vadd.f32 %v1776, %v1788
        %v1790 = vadd.f32 %v1777, %v1788
        %v1791 = vadd.f32 %v1778, %v1788
        %v1792 = vadd.f32 %v1779, %v1788
        %v1793 = vadd.f32 %v1780, %v1788
        %v1794 = vadd.f32 %v1781, %v1788
        %v1795 = vadd.f32 %v1782, %v1788
        %v1796 = vadd.f32 %v1783, %v1788
        %v1797 = vadd.f32 %v1789, %v250
        %v1798 = vadd.f32 %v1790, %v251
        %v1799 = vadd.f32 %v1791, %v252
        %v1800 = vadd.f32 %v1792, %v253
        %v1801 = vadd.f32 %v1793, %v254
        %v1802 = vadd.f32 %v1794, %v255
        %v1803 = vadd.f32 %v1795, %v256
        %v1804 = vadd.f32 %v1796, %v257
        %v1805 = vmax.f32 %v1797, 0.0
        %v1806 = vmax.f32 %v1798, 0.0
        %v1807 = vmax.f32 %v1799, 0.0
        %v1808 = vmax.f32 %v1800, 0.0
        %v1809 = vmax.f32 %v1801, 0.0
        %v1810 = vmax.f32 %v1802, 0.0
        %v1811 = vmax.f32 %v1803, 0.0
        %v1812 = vmax.f32 %v1804, 0.0
        %v1821 = vrot.slane %v1805, 7
        %v1822 = vrot.slane %v1806, 7
        %v1823 = vrot.slane %v1807, 7
        %v1824 = vrot.slane %v1808, 7
        %v1825 = vrot.slane %v1809, 7
        %v1826 = vrot.slane %v1810, 7
        %v1827 = vrot.slane %v1811, 7
        %v1828 = vrot.slane %v1812, 7
        %v1837 = vsel %vm285, 0.0, %v1821
        %v1838 = vsel %vm285, 0.0, %v1822
        %v1839 = vsel %vm285, 0.0, %v1823
        %v1840 = vsel %vm285, 0.0, %v1824
        %v1841 = vsel %vm285, 0.0, %v1825
        %v1842 = vsel %vm285, 0.0, %v1826
        %v1843 = vsel %vm285, 0.0, %v1827
        %v1844 = vsel %vm285, 0.0, %v1828
        %v1845 = vsel %vm285, %v1821, 0.0
        %v1846 = vsel %vm285, %v1822, 0.0
        %v1847 = vsel %vm285, %v1823, 0.0
        %v1848 = vsel %vm285, %v1824, 0.0
        %v1849 = vsel %vm285, %v1825, 0.0
        %v1850 = vsel %vm285, %v1826, 0.0
        %v1851 = vsel %vm285, %v1827, 0.0
        %v1852 = vsel %vm285, %v1828, 0.0
        %v1867 = vrot.slane %v1837, 1
        %v1868 = vrot.slane %v1845, 1
        %v1869 = vsel %vm320, %v1867, %v1868
        %v1870 = vrot.slane %v1838, 1
        %v1871 = vrot.slane %v1846, 1
        %v1872 = vsel %vm320, %v1870, %v1871
        %v1873 = vrot.slane %v1839, 1
        %v1874 = vrot.slane %v1847, 1
        %v1875 = vsel %vm320, %v1873, %v1874
        %v1876 = vrot.slane %v1840, 1
        %v1877 = vrot.slane %v1848, 1
        %v1878 = vsel %vm320, %v1876, %v1877
        %v1879 = vrot.slane %v1841, 1
        %v1880 = vrot.slane %v1849, 1
        %v1881 = vsel %vm320, %v1879, %v1880
        %v1882 = vrot.slane %v1842, 1
        %v1883 = vrot.slane %v1850, 1
        %v1884 = vsel %vm320, %v1882, %v1883
        %v1885 = vrot.slane %v1843, 1
        %v1886 = vrot.slane %v1851, 1
        %v1887 = vsel %vm320, %v1885, %v1886
        %v1888 = vrot.slane %v1837, 2
        %v1889 = vrot.slane %v1845, 2
        %v1890 = vsel %vm345, %v1888, %v1889
        %v1891 = vrot.slane %v1838, 2
        %v1892 = vrot.slane %v1846, 2
        %v1893 = vsel %vm345, %v1891, %v1892
        %v1894 = vrot.slane %v1839, 2
        %v1895 = vrot.slane %v1847, 2
        %v1896 = vsel %vm345, %v1894, %v1895
        %v1897 = vrot.slane %v1840, 2
        %v1898 = vrot.slane %v1848, 2
        %v1899 = vsel %vm345, %v1897, %v1898
        %v1900 = vrot.slane %v1841, 2
        %v1901 = vrot.slane %v1849, 2
        %v1902 = vsel %vm345, %v1900, %v1901
        %v1903 = vrot.slane %v1842, 2
        %v1904 = vrot.slane %v1850, 2
        %v1905 = vsel %vm345, %v1903, %v1904
        %v1906 = vrot.slane %v1843, 2
        %v1907 = vrot.slane %v1851, 2
        %v1908 = vsel %vm345, %v1906, %v1907
        %v1918 = vrot.slane %v1844, 1
        %v1919 = vrot.slane %v1852, 1
        %v1920 = vsel %vm320, %v1918, %v1919
        %v1929 = vrot.slane %v1844, 2
        %v1930 = vrot.slane %v1852, 2
        %v1931 = vsel %vm345, %v1929, %v1930
        %1933 = vrot.lane.b32.xlu0 %v1869, 64
        %v1934 = vpop.permute.xlu0 %1933
        %1935 = vrot.lane.b32.xlu0 %v1872, 64
        %v1936 = vpop.permute.xlu0 %1935
        %1937 = vrot.lane.b32.xlu0 %v1875, 64
        %v1938 = vpop.permute.xlu0 %1937
        %1939 = vrot.lane.b32.xlu0 %v1878, 64
        %v1940 = vpop.permute.xlu0 %1939
        %1941 = vrot.lane.b32.xlu0 %v1881, 64
        %v1942 = vpop.permute.xlu0 %1941
        %1943 = vrot.lane.b32.xlu0 %v1884, 64
        %v1944 = vpop.permute.xlu0 %1943
        %1945 = vrot.lane.b32.xlu0 %v1887, 64
        %v1946 = vpop.permute.xlu0 %1945
        %1954 = vrot.lane.b32.xlu0 %v1837, 64
        %v1955 = vpop.permute.xlu0 %1954
        %1956 = vrot.lane.b32.xlu0 %v1838, 64
        %v1957 = vpop.permute.xlu0 %1956
        %1958 = vrot.lane.b32.xlu0 %v1839, 64
        %v1959 = vpop.permute.xlu0 %1958
        %1960 = vrot.lane.b32.xlu0 %v1840, 64
        %v1961 = vpop.permute.xlu0 %1960
        %1962 = vrot.lane.b32.xlu0 %v1841, 64
        %v1963 = vpop.permute.xlu0 %1962
        %1964 = vrot.lane.b32.xlu0 %v1842, 64
        %v1965 = vpop.permute.xlu0 %1964
        %1966 = vrot.lane.b32.xlu0 %v1843, 64
        %v1967 = vpop.permute.xlu0 %1966
        %1968 = vrot.lane.b32.xlu0 %v1844, 64
        %v1969 = vpop.permute.xlu0 %1968
        %1978 = vrot.lane.b32.xlu0 %v1890, 64
        %v1979 = vpop.permute.xlu0 %1978
        %1980 = vrot.lane.b32.xlu0 %v1893, 64
        %v1981 = vpop.permute.xlu0 %1980
        %1982 = vrot.lane.b32.xlu0 %v1896, 64
        %v1983 = vpop.permute.xlu0 %1982
        %1984 = vrot.lane.b32.xlu0 %v1899, 64
        %v1985 = vpop.permute.xlu0 %1984
        %1986 = vrot.lane.b32.xlu0 %v1902, 64
        %v1987 = vpop.permute.xlu0 %1986
        %1988 = vrot.lane.b32.xlu0 %v1905, 64
        %v1989 = vpop.permute.xlu0 %1988
        %1990 = vrot.lane.b32.xlu0 %v1908, 64
        %v1991 = vpop.permute.xlu0 %1990
        %1992 = vrot.lane.b32.xlu0 %v1931, 64
        %v1993 = vpop.permute.xlu0 %1992
        %2002 = vrot.lane.b32.xlu0 %v1920, 64
        %v2003 = vpop.permute.xlu0 %2002
        %v2005 = vsel %vm470, %v1837, %v1934
        %v2006 = vsel %vm470, %v1838, %v1936
        %v2007 = vsel %vm470, %v1839, %v1938
        %v2008 = vsel %vm470, %v1840, %v1940
        %v2009 = vsel %vm470, %v1841, %v1942
        %v2010 = vsel %vm470, %v1842, %v1944
        %v2011 = vsel %vm470, %v1843, %v1946
        %v2012 = vsel %vm470, %v348, %v1955
        %v2013 = vsel %vm470, %v1890, %v1957
        %v2014 = vsel %vm470, %v1893, %v1959
        %v2015 = vsel %vm470, %v1896, %v1961
        %v2016 = vsel %vm470, %v1899, %v1963
        %v2017 = vsel %vm470, %v1902, %v1965
        %v2018 = vsel %vm470, %v1905, %v1967
        %v2019 = vsel %vm470, %v1908, %v1969
        %v2020 = vsel %vm470, %v1869, %v1979
        %v2021 = vsel %vm470, %v1872, %v1981
        %v2022 = vsel %vm470, %v1875, %v1983
        %v2023 = vsel %vm470, %v1878, %v1985
        %v2024 = vsel %vm470, %v1881, %v1987
        %v2025 = vsel %vm470, %v1884, %v1989
        %v2026 = vsel %vm470, %v1887, %v1991
        %v2027 = vsel %vm470, %v1920, %v1993
        %v2028 = vsel %vm470, %v1844, %v2003
        %v2029 = vpack.c.bf16 %v2005, %v471
        %v2030 = vpack.c.bf16 %v2013, %v2012
        %v2031 = vpack.c.bf16 %v2021, %v2020
        %v2032 = vpack.c.bf16 %v2007, %v2006
        %v2033 = vpack.c.bf16 %v1896, %v1893
        %v2034 = vpack.c.bf16 %v2015, %v2014
        %v2035 = vpack.c.bf16 %v2023, %v2022
        %v2036 = vpack.c.bf16 %v2009, %v2008
        %v2037 = vpack.c.bf16 %v1902, %v1899
        %v2038 = vpack.c.bf16 %v2017, %v2016
        %v2039 = vpack.c.bf16 %v2025, %v2024
        %v2040 = vpack.c.bf16 %v2011, %v2010
        %v2041 = vpack.c.bf16 %v1908, %v1905
        %v2042 = vpack.c.bf16 %v2019, %v2018
        %v2043 = vpack.c.bf16 %v2027, %v2026
        %v2044 = vpack.c.bf16 %v471, %v2028
        %v2045 = vpack.c.bf16 %v348, %v1931
        %s2046 = scalar_lea.vmem %s1, 576
        %v2047 = vld [vmem:[%s2046] sm:$0xf]
        %v2048 = vld [vmem:[%s2046 + $0x4] sm:$0xf]
        %v2049 = vld [vmem:[%s2046 + $0x8] sm:$0xf]
        %v2050 = vld [vmem:[%s2046 + $0xc] sm:$0xf]
        %v2051 = vld [vmem:[%s2046 + $0x10] sm:$0xf]
        %v2052 = vld [vmem:[%s2046 + $0x14] sm:$0xf]
        %v2053 = vld [vmem:[%s2046 + $0x18] sm:$0xf]
        %v2054 = vld [vmem:[%s2046 + $0x1c] sm:$0xf]
        %v2055 = vld [vmem:[%s2046 + $0x20] sm:$0xf]
        %v2056 = vld [vmem:[%s2046 + $0x24] sm:$0xf]
        %v2057 = vld [vmem:[%s2046 + $0x28] sm:$0xf]
        %v2058 = vld [vmem:[%s2046 + $0x2c] sm:$0xf]
        %v2059 = vld [vmem:[%s2046 + $0x30] sm:$0xf]
        %v2060 = vld [vmem:[%s2046 + $0x34] sm:$0xf]
        %v2061 = vld [vmem:[%s2046 + $0x38] sm:$0xf]
        %v2062 = vld [vmem:[%s2046 + $0x3c] sm:$0xf]
        %v2063 = vld [vmem:[%s2046 + $0x40] sm:$0xf]
        %v2064 = vld [vmem:[%s2046 + $0x44] sm:$0xf]
        %v2065 = vld [vmem:[%s2046 + $0x48] sm:$0xf]
        %v2066 = vld [vmem:[%s2046 + $0x4c] sm:$0xf]
        %v2067 = vld [vmem:[%s2046 + $0x50] sm:$0xf]
        %v2068 = vld [vmem:[%s2046 + $0x54] sm:$0xf]
        %v2069 = vld [vmem:[%s2046 + $0x58] sm:$0xf]
        %v2070 = vld [vmem:[%s2046 + $0x5c] sm:$0xf]
        %v2071 = vld [vmem:[%s2046 + $0x60] sm:$0xf]
        %v2072 = vld [vmem:[%s2046 + $0x64] sm:$0xf]
        %v2073 = vld [vmem:[%s2046 + $0x68] sm:$0xf]
        %v2074 = vld [vmem:[%s2046 + $0x6c] sm:$0xf]
        %v2075 = vld [vmem:[%s2046 + $0x70] sm:$0xf]
        %v2076 = vld [vmem:[%s2046 + $0x74] sm:$0xf]
        %v2077 = vld [vmem:[%s2046 + $0x78] sm:$0xf]
        %v2078 = vld [vmem:[%s2046 + $0x7c] sm:$0xf]
        %v2079 = vld [vmem:[%s2046 + $0x80] sm:$0xf]
        %v2080 = vld [vmem:[%s2046 + $0x84] sm:$0xf]
        %v2081 = vld [vmem:[%s2046 + $0x88] sm:$0xf]
        %v2082 = vld [vmem:[%s2046 + $0x8c] sm:$0xf]
        %v2083 = vld [vmem:[%s2046 + $0x90] sm:$0xf]
        %v2084 = vld [vmem:[%s2046 + $0x94] sm:$0xf]
        %v2085 = vld [vmem:[%s2046 + $0x98] sm:$0xf]
        %v2086 = vld [vmem:[%s2046 + $0x9c] sm:$0xf]
        %v2087 = vld [vmem:[%s2046 + $0xa0] sm:$0xf]
        %v2088 = vld [vmem:[%s2046 + $0xa4] sm:$0xf]
        %v2089 = vld [vmem:[%s2046 + $0xa8] sm:$0xf]
        %v2090 = vld [vmem:[%s2046 + $0xac] sm:$0xf]
        %v2091 = vld [vmem:[%s2046 + $0xb0] sm:$0xf]
        %v2092 = vld [vmem:[%s2046 + $0xb4] sm:$0xf]
        %v2093 = vld [vmem:[%s2046 + $0xb8] sm:$0xf]
        %v2094 = vld [vmem:[%s2046 + $0xbc] sm:$0xf]
        %v2095 = vld [vmem:[%s2046 + $0xc0] sm:$0xf]
        %v2096 = vld [vmem:[%s2046 + $0xc4] sm:$0xf]
        %v2097 = vld [vmem:[%s2046 + $0xc8] sm:$0xf]
        %v2098 = vld [vmem:[%s2046 + $0xcc] sm:$0xf]
        %v2099 = vld [vmem:[%s2046 + $0xd0] sm:$0xf]
        %v2100 = vld [vmem:[%s2046 + $0xd4] sm:$0xf]
        %v2101 = vld [vmem:[%s2046 + $0xd8] sm:$0xf]
        %v2102 = vld [vmem:[%s2046 + $0xdc] sm:$0xf]
        %v2103 = vld [vmem:[%s2046 + $0xe0] sm:$0xf]
        %v2104 = vld [vmem:[%s2046 + $0xe4] sm:$0xf]
        %v2105 = vld [vmem:[%s2046 + $0xe8] sm:$0xf]
        %v2106 = vld [vmem:[%s2046 + $0xec] sm:$0xf]
        %v2107 = vld [vmem:[%s2046 + $0xf0] sm:$0xf]
        %v2108 = vld [vmem:[%s2046 + $0xf4] sm:$0xf]
        %v2109 = vld [vmem:[%s2046 + $0xf8] sm:$0xf]
        %v2110 = vld [vmem:[%s2046 + $0xfc] sm:$0xf]
        %v2111 = vld [vmem:[%s2046 + $0x100] sm:$0xf]
        %v2112 = vld [vmem:[%s2046 + $0x104] sm:$0xf]
        %v2113 = vld [vmem:[%s2046 + $0x108] sm:$0xf]
        %v2114 = vld [vmem:[%s2046 + $0x10c] sm:$0xf]
        %v2115 = vld [vmem:[%s2046 + $0x110] sm:$0xf]
        %v2116 = vld [vmem:[%s2046 + $0x114] sm:$0xf]
        %v2117 = vld [vmem:[%s2046 + $0x118] sm:$0xf]
        %v2118 = vld [vmem:[%s2046 + $0x11c] sm:$0xf]
        %v2191 = vunpack.c.l.b16 %v2047
        %v2192 = vunpack.c.l.b16 %v2048
        %v2193 = vunpack.c.l.b16 %v2049
        %v2194 = vunpack.c.l.b16 %v2050
        %v2195 = vunpack.c.l.b16 %v2051
        %v2196 = vunpack.c.l.b16 %v2052
        %v2197 = vunpack.c.l.b16 %v2053
        %v2198 = vunpack.c.l.b16 %v2054
        %v2199 = vunpack.c.l.b16 %v2055
        %v2200 = vunpack.c.l.b16 %v2056
        %v2201 = vunpack.c.l.b16 %v2057
        %v2202 = vunpack.c.l.b16 %v2058
        %v2203 = vunpack.c.l.b16 %v2059
        %v2204 = vunpack.c.l.b16 %v2060
        %v2205 = vunpack.c.l.b16 %v2061
        %v2206 = vunpack.c.l.b16 %v2062
        %v2207 = vunpack.c.l.b16 %v2063
        %v2208 = vunpack.c.l.b16 %v2064
        %v2209 = vunpack.c.l.b16 %v2065
        %v2210 = vunpack.c.l.b16 %v2066
        %v2211 = vunpack.c.l.b16 %v2067
        %v2212 = vunpack.c.l.b16 %v2068
        %v2213 = vunpack.c.l.b16 %v2069
        %v2214 = vunpack.c.l.b16 %v2070
        %v2215 = vunpack.c.l.b16 %v2071
        %v2216 = vunpack.c.l.b16 %v2072
        %v2217 = vunpack.c.l.b16 %v2073
        %v2218 = vunpack.c.l.b16 %v2074
        %v2219 = vunpack.c.l.b16 %v2075
        %v2220 = vunpack.c.l.b16 %v2076
        %v2221 = vunpack.c.l.b16 %v2077
        %v2222 = vunpack.c.l.b16 %v2078
        %v2223 = vunpack.c.l.b16 %v2079
        %v2224 = vunpack.c.l.b16 %v2080
        %v2225 = vunpack.c.l.b16 %v2081
        %v2226 = vunpack.c.l.b16 %v2082
        %v2227 = vunpack.c.l.b16 %v2083
        %v2228 = vunpack.c.l.b16 %v2084
        %v2229 = vunpack.c.l.b16 %v2085
        %v2230 = vunpack.c.l.b16 %v2086
        %v2231 = vunpack.c.l.b16 %v2087
        %v2232 = vunpack.c.l.b16 %v2088
        %v2233 = vunpack.c.l.b16 %v2089
        %v2234 = vunpack.c.l.b16 %v2090
        %v2235 = vunpack.c.l.b16 %v2091
        %v2236 = vunpack.c.l.b16 %v2092
        %v2237 = vunpack.c.l.b16 %v2093
        %v2238 = vunpack.c.l.b16 %v2094
        %v2239 = vunpack.c.l.b16 %v2095
        %v2240 = vunpack.c.l.b16 %v2096
        %v2241 = vunpack.c.l.b16 %v2097
        %v2242 = vunpack.c.l.b16 %v2098
        %v2243 = vunpack.c.l.b16 %v2099
        %v2244 = vunpack.c.l.b16 %v2100
        %v2245 = vunpack.c.l.b16 %v2101
        %v2246 = vunpack.c.l.b16 %v2102
        %v2247 = vunpack.c.l.b16 %v2103
        %v2248 = vunpack.c.l.b16 %v2104
        %v2249 = vunpack.c.l.b16 %v2105
        %v2250 = vunpack.c.l.b16 %v2106
        %v2251 = vunpack.c.l.b16 %v2107
        %v2252 = vunpack.c.l.b16 %v2108
        %v2253 = vunpack.c.l.b16 %v2109
        %v2254 = vunpack.c.l.b16 %v2110
        %v2255 = vunpack.c.l.b16 %v2111
        %v2256 = vunpack.c.l.b16 %v2112
        %v2257 = vunpack.c.l.b16 %v2113
        %v2258 = vunpack.c.l.b16 %v2114
        %v2259 = vunpack.c.l.b16 %v2115
        %v2260 = vunpack.c.l.b16 %v2116
        %v2261 = vunpack.c.l.b16 %v2117
        %v2262 = vunpack.c.l.b16 %v2118
        %v2263 = vpack.c.b16 %v2192, %v2191
        %v2264 = vpack.c.b16 %v2194, %v2193
        %v2265 = vpack.c.b16 %v2196, %v2195
        %v2266 = vpack.c.b16 %v2198, %v2197
        %v2267 = vpack.c.b16 %v2200, %v2199
        %v2268 = vpack.c.b16 %v2202, %v2201
        %v2269 = vpack.c.b16 %v2204, %v2203
        %v2270 = vpack.c.b16 %v2206, %v2205
        %v2271 = vpack.c.b16 %v2208, %v2207
        %v2272 = vpack.c.b16 %v2210, %v2209
        %v2273 = vpack.c.b16 %v2212, %v2211
        %v2274 = vpack.c.b16 %v2214, %v2213
        %v2275 = vpack.c.b16 %v2216, %v2215
        %v2276 = vpack.c.b16 %v2218, %v2217
        %v2277 = vpack.c.b16 %v2220, %v2219
        %v2278 = vpack.c.b16 %v2222, %v2221
        %v2279 = vpack.c.b16 %v2224, %v2223
        %v2280 = vpack.c.b16 %v2226, %v2225
        %v2281 = vpack.c.b16 %v2228, %v2227
        %v2282 = vpack.c.b16 %v2230, %v2229
        %v2283 = vpack.c.b16 %v2232, %v2231
        %v2284 = vpack.c.b16 %v2234, %v2233
        %v2285 = vpack.c.b16 %v2236, %v2235
        %v2286 = vpack.c.b16 %v2238, %v2237
        %v2287 = vpack.c.b16 %v2240, %v2239
        %v2288 = vpack.c.b16 %v2242, %v2241
        %v2289 = vpack.c.b16 %v2244, %v2243
        %v2290 = vpack.c.b16 %v2246, %v2245
        %v2291 = vpack.c.b16 %v2248, %v2247
        %v2292 = vpack.c.b16 %v2250, %v2249
        %v2293 = vpack.c.b16 %v2252, %v2251
        %v2294 = vpack.c.b16 %v2254, %v2253
        %v2295 = vpack.c.b16 %v2256, %v2255
        %v2296 = vpack.c.b16 %v2258, %v2257
        %v2297 = vpack.c.b16 %v2260, %v2259
        %v2298 = vpack.c.b16 %v2262, %v2261
        %v2336 = vsel %vm470, %v2033, 0
        %v2339 = vsel %vm470, %v2037, 0
        %v2342 = vsel %vm470, %v2041, 0
        %v2345 = vsel %vm470, %v2045, 0
        %2347 = vmatprep.subr.bf16.mxu0 0
        %2348 = vmatpush1.bf16.msra.mxu0 %v2270
        %2349 = vmatprep.subr.bf16.mxu0 0
        %2350 = vmatpush1.bf16.msra.mxu0 %v2269
        %2351 = vmatprep.subr.bf16.mxu0 0
        %2352 = vmatpush1.bf16.msra.mxu0 %v2268
        %2353 = vmatprep.subr.bf16.mxu0 0
        %2354 = vmatpush1.bf16.msra.mxu0 %v2267
        %2355 = vmatprep.subr.bf16.mxu0 0
        %2356 = vmatpush1.bf16.msra.mxu0 %v2266
        %2357 = vmatprep.subr.bf16.mxu0 0
        %2358 = vmatpush1.bf16.msra.mxu0 %v2265
        %2359 = vmatprep.subr.bf16.mxu0 0
        %2360 = vmatpush1.bf16.msra.mxu0 %v2264
        %2361 = vmatprep.subr.bf16.mxu0 0
        %2362 = vmatpush1.bf16.msra.mxu0 %v2263
        %2363 = vmatprep.subr.bf16.mxu0 0
        %2364 = vmatpush2.bf16.msra.mxu0 %v2278
        %2365 = vmatprep.subr.bf16.mxu0 0
        %2366 = vmatpush2.bf16.msra.mxu0 %v2277
        %2367 = vmatprep.subr.bf16.mxu0 0
        %2368 = vmatpush2.bf16.msra.mxu0 %v2276
        %2369 = vmatprep.subr.bf16.mxu0 0
        %2370 = vmatpush2.bf16.msra.mxu0 %v2275
        %2371 = vmatprep.subr.bf16.mxu0 0
        %2372 = vmatpush2.bf16.msra.mxu0 %v2274
        %2373 = vmatprep.subr.bf16.mxu0 0
        %2374 = vmatpush2.bf16.msra.mxu0 %v2273
        %2375 = vmatprep.subr.bf16.mxu0 0
        %2376 = vmatpush2.bf16.msra.mxu0 %v2272
        %2377 = vmatprep.subr.bf16.mxu0 0
        %2378 = vmatpush2.bf16.msra.mxu0 %v2271
        %2379 = vmatprep.mubr.bf16.mxu0 %v2030
        %2380 = vmatmul.mubr.bf16.gmra.mxu0 %v2029
        %v2381 = vpop.f32.mrf.mxu0
        %v2382 = vadd.f32 0.0, %v2381
        %v2383 = vpop.f32.mrf.mxu0
        %v2384 = vpop.f32.mrf.mxu0
        %v2385 = vadd.f32 0.0, %v2384
        %v2386 = vpop.f32.mrf.mxu0
        %2387 = vmatprep.mubr.bf16.mxu0 %v2034
        %2388 = vmatmul.mubr.bf16.gmra.mxu0 %v2032
        %v2389 = vpop.f32.mrf.mxu0
        %v2390 = vadd.f32 0.0, %v2389
        %v2391 = vpop.f32.mrf.mxu0
        %v2392 = vpop.f32.mrf.mxu0
        %v2393 = vadd.f32 0.0, %v2392
        %v2394 = vpop.f32.mrf.mxu0
        %2395 = vmatprep.mubr.bf16.mxu0 %v2038
        %2396 = vmatmul.mubr.bf16.gmra.mxu0 %v2036
        %v2397 = vpop.f32.mrf.mxu0
        %v2398 = vadd.f32 0.0, %v2397
        %v2399 = vpop.f32.mrf.mxu0
        %v2400 = vpop.f32.mrf.mxu0
        %v2401 = vadd.f32 0.0, %v2400
        %v2402 = vpop.f32.mrf.mxu0
        %2403 = vmatprep.mubr.bf16.mxu0 %v2042
        %2404 = vmatmul.mubr.bf16.gmra.mxu0 %v2040
        %v2405 = vpop.f32.mrf.mxu0
        %v2406 = vadd.f32 0.0, %v2405
        %v2407 = vpop.f32.mrf.mxu0
        %v2408 = vpop.f32.mrf.mxu0
        %v2409 = vadd.f32 0.0, %v2408
        %v2410 = vpop.f32.mrf.mxu0
        %2411 = vdwg.mxu0
        %2412 = vmatprep.subr.bf16.mxu0 0
        %2413 = vmatpush1.bf16.msra.mxu0 %v2286
        %2414 = vmatprep.subr.bf16.mxu0 0
        %2415 = vmatpush1.bf16.msra.mxu0 %v2285
        %2416 = vmatprep.subr.bf16.mxu0 0
        %2417 = vmatpush1.bf16.msra.mxu0 %v2284
        %2418 = vmatprep.subr.bf16.mxu0 0
        %2419 = vmatpush1.bf16.msra.mxu0 %v2283
        %2420 = vmatprep.subr.bf16.mxu0 0
        %2421 = vmatpush1.bf16.msra.mxu0 %v2282
        %2422 = vmatprep.subr.bf16.mxu0 0
        %2423 = vmatpush1.bf16.msra.mxu0 %v2281
        %2424 = vmatprep.subr.bf16.mxu0 0
        %2425 = vmatpush1.bf16.msra.mxu0 %v2280
        %2426 = vmatprep.subr.bf16.mxu0 0
        %2427 = vmatpush1.bf16.msra.mxu0 %v2279
        %2428 = vmatprep.subr.bf16.mxu0 0
        %2429 = vmatpush2.bf16.msra.mxu0 %v2294
        %2430 = vmatprep.subr.bf16.mxu0 0
        %2431 = vmatpush2.bf16.msra.mxu0 %v2293
        %2432 = vmatprep.subr.bf16.mxu0 0
        %2433 = vmatpush2.bf16.msra.mxu0 %v2292
        %2434 = vmatprep.subr.bf16.mxu0 0
        %2435 = vmatpush2.bf16.msra.mxu0 %v2291
        %2436 = vmatprep.subr.bf16.mxu0 0
        %2437 = vmatpush2.bf16.msra.mxu0 %v2290
        %2438 = vmatprep.subr.bf16.mxu0 0
        %2439 = vmatpush2.bf16.msra.mxu0 %v2289
        %2440 = vmatprep.subr.bf16.mxu0 0
        %2441 = vmatpush2.bf16.msra.mxu0 %v2288
        %2442 = vmatprep.subr.bf16.mxu0 0
        %2443 = vmatpush2.bf16.msra.mxu0 %v2287
        %2444 = vmatprep.mubr.bf16.mxu0 %v2032
        %2445 = vmatmul.mubr.bf16.gmra.mxu0 %v2031
        %v2446 = vpop.f32.mrf.mxu0
        %v2447 = vadd.f32 %v2382, %v2446
        %v2448 = vpop.f32.mrf.mxu0
        %v2449 = vpop.f32.mrf.mxu0
        %v2450 = vadd.f32 %v2385, %v2449
        %v2451 = vpop.f32.mrf.mxu0
        %2452 = vmatprep.mubr.bf16.mxu0 %v2036
        %2453 = vmatmul.mubr.bf16.gmra.mxu0 %v2035
        %v2454 = vpop.f32.mrf.mxu0
        %v2455 = vadd.f32 %v2390, %v2454
        %v2456 = vpop.f32.mrf.mxu0
        %v2457 = vpop.f32.mrf.mxu0
        %v2458 = vadd.f32 %v2393, %v2457
        %v2459 = vpop.f32.mrf.mxu0
        %2460 = vmatprep.mubr.bf16.mxu0 %v2040
        %2461 = vmatmul.mubr.bf16.gmra.mxu0 %v2039
        %v2462 = vpop.f32.mrf.mxu0
        %v2463 = vadd.f32 %v2398, %v2462
        %v2464 = vpop.f32.mrf.mxu0
        %v2465 = vpop.f32.mrf.mxu0
        %v2466 = vadd.f32 %v2401, %v2465
        %v2467 = vpop.f32.mrf.mxu0
        %2468 = vmatprep.mubr.bf16.mxu0 %v2044
        %2469 = vmatmul.mubr.bf16.gmra.mxu0 %v2043
        %v2470 = vpop.f32.mrf.mxu0
        %v2471 = vadd.f32 %v2406, %v2470
        %v2472 = vpop.f32.mrf.mxu0
        %v2473 = vpop.f32.mrf.mxu0
        %v2474 = vadd.f32 %v2409, %v2473
        %v2475 = vpop.f32.mrf.mxu0
        %2476 = vdwg.mxu0
        %2477 = vmatprep.subr.bf16.mxu0 0
        %2478 = vmatpush1.bf16.msra.mxu0 0
        %2479 = vmatprep.subr.bf16.mxu0 0
        %2480 = vmatpush1.bf16.msra.mxu0 0
        %2481 = vmatprep.subr.bf16.mxu0 0
        %2482 = vmatpush1.bf16.msra.mxu0 0
        %2483 = vmatprep.subr.bf16.mxu0 0
        %2484 = vmatpush1.bf16.msra.mxu0 0
        %2485 = vmatprep.subr.bf16.mxu0 0
        %2486 = vmatpush1.bf16.msra.mxu0 %v2298
        %2487 = vmatprep.subr.bf16.mxu0 0
        %2488 = vmatpush1.bf16.msra.mxu0 %v2297
        %2489 = vmatprep.subr.bf16.mxu0 0
        %2490 = vmatpush1.bf16.msra.mxu0 %v2296
        %2491 = vmatprep.subr.bf16.mxu0 0
        %2492 = vmatpush1.bf16.msra.mxu0 %v2295
        %2493 = vmatprep.subr.bf16.mxu0 0
        %2494 = vmatpush2.bf16.msra.mxu0 0
        %2495 = vmatprep.subr.bf16.mxu0 0
        %2496 = vmatpush2.bf16.msra.mxu0 0
        %2497 = vmatprep.subr.bf16.mxu0 0
        %2498 = vmatpush2.bf16.msra.mxu0 0
        %2499 = vmatprep.subr.bf16.mxu0 0
        %2500 = vmatpush2.bf16.msra.mxu0 0
        %2501 = vmatprep.subr.bf16.mxu0 0
        %2502 = vmatpush2.bf16.msra.mxu0 0
        %2503 = vmatprep.subr.bf16.mxu0 0
        %2504 = vmatpush2.bf16.msra.mxu0 0
        %2505 = vmatprep.subr.bf16.mxu0 0
        %2506 = vmatpush2.bf16.msra.mxu0 0
        %2507 = vmatprep.subr.bf16.mxu0 0
        %2508 = vmatpush2.bf16.msra.mxu0 0
        %2509 = vmatprep.mubr.bf16.mxu0 0
        %2510 = vmatmul.mubr.bf16.gmra.mxu0 %v2336
        %v2511 = vpop.f32.mrf.mxu0
        %v2512 = vadd.f32 %v2447, %v2511
        %v2513 = vpop.f32.mrf.mxu0
        %v2514 = vpop.f32.mrf.mxu0
        %v2515 = vadd.f32 %v2450, %v2514
        %v2516 = vpop.f32.mrf.mxu0
        %2517 = vmatprep.mubr.bf16.mxu0 0
        %2518 = vmatmul.mubr.bf16.gmra.mxu0 %v2339
        %v2519 = vpop.f32.mrf.mxu0
        %v2520 = vadd.f32 %v2455, %v2519
        %v2521 = vpop.f32.mrf.mxu0
        %v2522 = vpop.f32.mrf.mxu0
        %v2523 = vadd.f32 %v2458, %v2522
        %v2524 = vpop.f32.mrf.mxu0
        %2525 = vmatprep.mubr.bf16.mxu0 0
        %2526 = vmatmul.mubr.bf16.gmra.mxu0 %v2342
        %v2527 = vpop.f32.mrf.mxu0
        %v2528 = vadd.f32 %v2463, %v2527
        %v2529 = vpop.f32.mrf.mxu0
        %v2530 = vpop.f32.mrf.mxu0
        %v2531 = vadd.f32 %v2466, %v2530
        %v2532 = vpop.f32.mrf.mxu0
        %2533 = vmatprep.mubr.bf16.mxu0 0
        %2534 = vmatmul.mubr.bf16.gmra.mxu0 %v2345
        %v2535 = vpop.f32.mrf.mxu0
        %v2536 = vadd.f32 %v2471, %v2535
        %v2537 = vpop.f32.mrf.mxu0
        %v2538 = vpop.f32.mrf.mxu0
        %v2539 = vadd.f32 %v2474, %v2538
        %v2540 = vpop.f32.mrf.mxu0
        %2541 = vdwg.mxu0
        %v2542 = vld [vmem:[%s2 + $0x2] sm:$0x1]
        %v2543 = vlaneseq
        %v2544 = vshrl.u32 %v2543, 7
        %v2545 = vsub.s32 0, %v2544
        %v2546 = vrot.slane %v2542, %v2545
        %v2547 = vmul.f32 %v2512, %v2546
        %v2548 = vmul.f32 %v2515, %v2546
        %v2549 = vmul.f32 %v2520, %v2546
        %v2550 = vmul.f32 %v2523, %v2546
        %v2551 = vmul.f32 %v2528, %v2546
        %v2552 = vmul.f32 %v2531, %v2546
        %v2553 = vmul.f32 %v2536, %v2546
        %v2554 = vmul.f32 %v2539, %v2546
        %v2555 = vld [vmem:[%s3 + $0x2] sm:$0x1]
        %v2556 = vlaneseq
        %v2557 = vshrl.u32 %v2556, 7
        %v2558 = vsub.s32 0, %v2557
        %v2559 = vrot.slane %v2555, %v2558
        %v2560 = vadd.f32 %v2547, %v2559
        %v2561 = vadd.f32 %v2548, %v2559
        %v2562 = vadd.f32 %v2549, %v2559
        %v2563 = vadd.f32 %v2550, %v2559
        %v2564 = vadd.f32 %v2551, %v2559
        %v2565 = vadd.f32 %v2552, %v2559
        %v2566 = vadd.f32 %v2553, %v2559
        %v2567 = vadd.f32 %v2554, %v2559
        %v2568 = vmax.f32 %v2560, 0.0
        %v2569 = vmax.f32 %v2561, 0.0
        %v2570 = vmax.f32 %v2562, 0.0
        %v2571 = vmax.f32 %v2563, 0.0
        %v2572 = vmax.f32 %v2564, 0.0
        %v2573 = vmax.f32 %v2565, 0.0
        %v2574 = vmax.f32 %v2566, 0.0
        %v2575 = vmax.f32 %v2567, 0.0
        %v2584 = vrot.slane %v2568, 7
        %v2585 = vrot.slane %v2569, 7
        %v2586 = vrot.slane %v2570, 7
        %v2587 = vrot.slane %v2571, 7
        %v2588 = vrot.slane %v2572, 7
        %v2589 = vrot.slane %v2573, 7
        %v2590 = vrot.slane %v2574, 7
        %v2591 = vrot.slane %v2575, 7
        %v2600 = vsel %vm285, 0.0, %v2584
        %v2601 = vsel %vm285, 0.0, %v2585
        %v2602 = vsel %vm285, 0.0, %v2586
        %v2603 = vsel %vm285, 0.0, %v2587
        %v2604 = vsel %vm285, 0.0, %v2588
        %v2605 = vsel %vm285, 0.0, %v2589
        %v2606 = vsel %vm285, 0.0, %v2590
        %v2607 = vsel %vm285, 0.0, %v2591
        %v2608 = vsel %vm285, %v2584, 0.0
        %v2609 = vsel %vm285, %v2585, 0.0
        %v2610 = vsel %vm285, %v2586, 0.0
        %v2611 = vsel %vm285, %v2587, 0.0
        %v2612 = vsel %vm285, %v2588, 0.0
        %v2613 = vsel %vm285, %v2589, 0.0
        %v2614 = vsel %vm285, %v2590, 0.0
        %v2615 = vsel %vm285, %v2591, 0.0
        %v2630 = vrot.slane %v2600, 1
        %v2631 = vrot.slane %v2608, 1
        %v2632 = vsel %vm320, %v2630, %v2631
        %v2633 = vrot.slane %v2601, 1
        %v2634 = vrot.slane %v2609, 1
        %v2635 = vsel %vm320, %v2633, %v2634
        %v2636 = vrot.slane %v2602, 1
        %v2637 = vrot.slane %v2610, 1
        %v2638 = vsel %vm320, %v2636, %v2637
        %v2639 = vrot.slane %v2603, 1
        %v2640 = vrot.slane %v2611, 1
        %v2641 = vsel %vm320, %v2639, %v2640
        %v2642 = vrot.slane %v2604, 1
        %v2643 = vrot.slane %v2612, 1
        %v2644 = vsel %vm320, %v2642, %v2643
        %v2645 = vrot.slane %v2605, 1
        %v2646 = vrot.slane %v2613, 1
        %v2647 = vsel %vm320, %v2645, %v2646
        %v2648 = vrot.slane %v2606, 1
        %v2649 = vrot.slane %v2614, 1
        %v2650 = vsel %vm320, %v2648, %v2649
        %v2651 = vrot.slane %v2600, 2
        %v2652 = vrot.slane %v2608, 2
        %v2653 = vsel %vm345, %v2651, %v2652
        %v2654 = vrot.slane %v2601, 2
        %v2655 = vrot.slane %v2609, 2
        %v2656 = vsel %vm345, %v2654, %v2655
        %v2657 = vrot.slane %v2602, 2
        %v2658 = vrot.slane %v2610, 2
        %v2659 = vsel %vm345, %v2657, %v2658
        %v2660 = vrot.slane %v2603, 2
        %v2661 = vrot.slane %v2611, 2
        %v2662 = vsel %vm345, %v2660, %v2661
        %v2663 = vrot.slane %v2604, 2
        %v2664 = vrot.slane %v2612, 2
        %v2665 = vsel %vm345, %v2663, %v2664
        %v2666 = vrot.slane %v2605, 2
        %v2667 = vrot.slane %v2613, 2
        %v2668 = vsel %vm345, %v2666, %v2667
        %v2669 = vrot.slane %v2606, 2
        %v2670 = vrot.slane %v2614, 2
        %v2671 = vsel %vm345, %v2669, %v2670
        %v2681 = vrot.slane %v2607, 1
        %v2682 = vrot.slane %v2615, 1
        %v2683 = vsel %vm320, %v2681, %v2682
        %v2692 = vrot.slane %v2607, 2
        %v2693 = vrot.slane %v2615, 2
        %v2694 = vsel %vm345, %v2692, %v2693
        %2696 = vrot.lane.b32.xlu0 %v2632, 64
        %v2697 = vpop.permute.xlu0 %2696
        %2698 = vrot.lane.b32.xlu0 %v2635, 64
        %v2699 = vpop.permute.xlu0 %2698
        %2700 = vrot.lane.b32.xlu0 %v2638, 64
        %v2701 = vpop.permute.xlu0 %2700
        %2702 = vrot.lane.b32.xlu0 %v2641, 64
        %v2703 = vpop.permute.xlu0 %2702
        %2704 = vrot.lane.b32.xlu0 %v2644, 64
        %v2705 = vpop.permute.xlu0 %2704
        %2706 = vrot.lane.b32.xlu0 %v2647, 64
        %v2707 = vpop.permute.xlu0 %2706
        %2708 = vrot.lane.b32.xlu0 %v2650, 64
        %v2709 = vpop.permute.xlu0 %2708
        %2717 = vrot.lane.b32.xlu0 %v2600, 64
        %v2718 = vpop.permute.xlu0 %2717
        %2719 = vrot.lane.b32.xlu0 %v2601, 64
        %v2720 = vpop.permute.xlu0 %2719
        %2721 = vrot.lane.b32.xlu0 %v2602, 64
        %v2722 = vpop.permute.xlu0 %2721
        %2723 = vrot.lane.b32.xlu0 %v2603, 64
        %v2724 = vpop.permute.xlu0 %2723
        %2725 = vrot.lane.b32.xlu0 %v2604, 64
        %v2726 = vpop.permute.xlu0 %2725
        %2727 = vrot.lane.b32.xlu0 %v2605, 64
        %v2728 = vpop.permute.xlu0 %2727
        %2729 = vrot.lane.b32.xlu0 %v2606, 64
        %v2730 = vpop.permute.xlu0 %2729
        %2731 = vrot.lane.b32.xlu0 %v2607, 64
        %v2732 = vpop.permute.xlu0 %2731
        %2741 = vrot.lane.b32.xlu0 %v2653, 64
        %v2742 = vpop.permute.xlu0 %2741
        %2743 = vrot.lane.b32.xlu0 %v2656, 64
        %v2744 = vpop.permute.xlu0 %2743
        %2745 = vrot.lane.b32.xlu0 %v2659, 64
        %v2746 = vpop.permute.xlu0 %2745
        %2747 = vrot.lane.b32.xlu0 %v2662, 64
        %v2748 = vpop.permute.xlu0 %2747
        %2749 = vrot.lane.b32.xlu0 %v2665, 64
        %v2750 = vpop.permute.xlu0 %2749
        %2751 = vrot.lane.b32.xlu0 %v2668, 64
        %v2752 = vpop.permute.xlu0 %2751
        %2753 = vrot.lane.b32.xlu0 %v2671, 64
        %v2754 = vpop.permute.xlu0 %2753
        %2755 = vrot.lane.b32.xlu0 %v2694, 64
        %v2756 = vpop.permute.xlu0 %2755
        %2765 = vrot.lane.b32.xlu0 %v2683, 64
        %v2766 = vpop.permute.xlu0 %2765
        %v2768 = vsel %vm470, %v2600, %v2697
        %v2769 = vsel %vm470, %v2601, %v2699
        %v2770 = vsel %vm470, %v2602, %v2701
        %v2771 = vsel %vm470, %v2603, %v2703
        %v2772 = vsel %vm470, %v2604, %v2705
        %v2773 = vsel %vm470, %v2605, %v2707
        %v2774 = vsel %vm470, %v2606, %v2709
        %v2775 = vsel %vm470, %v348, %v2718
        %v2776 = vsel %vm470, %v2653, %v2720
        %v2777 = vsel %vm470, %v2656, %v2722
        %v2778 = vsel %vm470, %v2659, %v2724
        %v2779 = vsel %vm470, %v2662, %v2726
        %v2780 = vsel %vm470, %v2665, %v2728
        %v2781 = vsel %vm470, %v2668, %v2730
        %v2782 = vsel %vm470, %v2671, %v2732
        %v2783 = vsel %vm470, %v2632, %v2742
        %v2784 = vsel %vm470, %v2635, %v2744
        %v2785 = vsel %vm470, %v2638, %v2746
        %v2786 = vsel %vm470, %v2641, %v2748
        %v2787 = vsel %vm470, %v2644, %v2750
        %v2788 = vsel %vm470, %v2647, %v2752
        %v2789 = vsel %vm470, %v2650, %v2754
        %v2790 = vsel %vm470, %v2683, %v2756
        %v2791 = vsel %vm470, %v2607, %v2766
        %v2792 = vpack.c.bf16 %v2768, %v471
        %v2793 = vpack.c.bf16 %v2776, %v2775
        %v2794 = vpack.c.bf16 %v2784, %v2783
        %v2795 = vpack.c.bf16 %v2770, %v2769
        %v2796 = vpack.c.bf16 %v2659, %v2656
        %v2797 = vpack.c.bf16 %v2778, %v2777
        %v2798 = vpack.c.bf16 %v2786, %v2785
        %v2799 = vpack.c.bf16 %v2772, %v2771
        %v2800 = vpack.c.bf16 %v2665, %v2662
        %v2801 = vpack.c.bf16 %v2780, %v2779
        %v2802 = vpack.c.bf16 %v2788, %v2787
        %v2803 = vpack.c.bf16 %v2774, %v2773
        %v2804 = vpack.c.bf16 %v2671, %v2668
        %v2805 = vpack.c.bf16 %v2782, %v2781
        %v2806 = vpack.c.bf16 %v2790, %v2789
        %v2807 = vpack.c.bf16 %v471, %v2791
        %v2808 = vpack.c.bf16 %v348, %v2694
        %s2809 = scalar_lea.vmem %s1, 864
        %v2810 = vld [vmem:[%s2809] sm:$0xf]
        %v2811 = vld [vmem:[%s2809 + $0x4] sm:$0xf]
        %v2812 = vld [vmem:[%s2809 + $0x8] sm:$0xf]
        %v2813 = vld [vmem:[%s2809 + $0xc] sm:$0xf]
        %v2814 = vld [vmem:[%s2809 + $0x10] sm:$0xf]
        %v2815 = vld [vmem:[%s2809 + $0x14] sm:$0xf]
        %v2816 = vld [vmem:[%s2809 + $0x18] sm:$0xf]
        %v2817 = vld [vmem:[%s2809 + $0x1c] sm:$0xf]
        %v2818 = vld [vmem:[%s2809 + $0x20] sm:$0xf]
        %v2819 = vld [vmem:[%s2809 + $0x24] sm:$0xf]
        %v2820 = vld [vmem:[%s2809 + $0x28] sm:$0xf]
        %v2821 = vld [vmem:[%s2809 + $0x2c] sm:$0xf]
        %v2822 = vld [vmem:[%s2809 + $0x30] sm:$0xf]
        %v2823 = vld [vmem:[%s2809 + $0x34] sm:$0xf]
        %v2824 = vld [vmem:[%s2809 + $0x38] sm:$0xf]
        %v2825 = vld [vmem:[%s2809 + $0x3c] sm:$0xf]
        %v2826 = vld [vmem:[%s2809 + $0x40] sm:$0xf]
        %v2827 = vld [vmem:[%s2809 + $0x44] sm:$0xf]
        %v2828 = vld [vmem:[%s2809 + $0x48] sm:$0xf]
        %v2829 = vld [vmem:[%s2809 + $0x4c] sm:$0xf]
        %v2830 = vld [vmem:[%s2809 + $0x50] sm:$0xf]
        %v2831 = vld [vmem:[%s2809 + $0x54] sm:$0xf]
        %v2832 = vld [vmem:[%s2809 + $0x58] sm:$0xf]
        %v2833 = vld [vmem:[%s2809 + $0x5c] sm:$0xf]
        %v2834 = vld [vmem:[%s2809 + $0x60] sm:$0xf]
        %v2835 = vld [vmem:[%s2809 + $0x64] sm:$0xf]
        %v2836 = vld [vmem:[%s2809 + $0x68] sm:$0xf]
        %v2837 = vld [vmem:[%s2809 + $0x6c] sm:$0xf]
        %v2838 = vld [vmem:[%s2809 + $0x70] sm:$0xf]
        %v2839 = vld [vmem:[%s2809 + $0x74] sm:$0xf]
        %v2840 = vld [vmem:[%s2809 + $0x78] sm:$0xf]
        %v2841 = vld [vmem:[%s2809 + $0x7c] sm:$0xf]
        %v2842 = vld [vmem:[%s2809 + $0x80] sm:$0xf]
        %v2843 = vld [vmem:[%s2809 + $0x84] sm:$0xf]
        %v2844 = vld [vmem:[%s2809 + $0x88] sm:$0xf]
        %v2845 = vld [vmem:[%s2809 + $0x8c] sm:$0xf]
        %v2846 = vld [vmem:[%s2809 + $0x90] sm:$0xf]
        %v2847 = vld [vmem:[%s2809 + $0x94] sm:$0xf]
        %v2848 = vld [vmem:[%s2809 + $0x98] sm:$0xf]
        %v2849 = vld [vmem:[%s2809 + $0x9c] sm:$0xf]
        %v2850 = vld [vmem:[%s2809 + $0xa0] sm:$0xf]
        %v2851 = vld [vmem:[%s2809 + $0xa4] sm:$0xf]
        %v2852 = vld [vmem:[%s2809 + $0xa8] sm:$0xf]
        %v2853 = vld [vmem:[%s2809 + $0xac] sm:$0xf]
        %v2854 = vld [vmem:[%s2809 + $0xb0] sm:$0xf]
        %v2855 = vld [vmem:[%s2809 + $0xb4] sm:$0xf]
        %v2856 = vld [vmem:[%s2809 + $0xb8] sm:$0xf]
        %v2857 = vld [vmem:[%s2809 + $0xbc] sm:$0xf]
        %v2858 = vld [vmem:[%s2809 + $0xc0] sm:$0xf]
        %v2859 = vld [vmem:[%s2809 + $0xc4] sm:$0xf]
        %v2860 = vld [vmem:[%s2809 + $0xc8] sm:$0xf]
        %v2861 = vld [vmem:[%s2809 + $0xcc] sm:$0xf]
        %v2862 = vld [vmem:[%s2809 + $0xd0] sm:$0xf]
        %v2863 = vld [vmem:[%s2809 + $0xd4] sm:$0xf]
        %v2864 = vld [vmem:[%s2809 + $0xd8] sm:$0xf]
        %v2865 = vld [vmem:[%s2809 + $0xdc] sm:$0xf]
        %v2866 = vld [vmem:[%s2809 + $0xe0] sm:$0xf]
        %v2867 = vld [vmem:[%s2809 + $0xe4] sm:$0xf]
        %v2868 = vld [vmem:[%s2809 + $0xe8] sm:$0xf]
        %v2869 = vld [vmem:[%s2809 + $0xec] sm:$0xf]
        %v2870 = vld [vmem:[%s2809 + $0xf0] sm:$0xf]
        %v2871 = vld [vmem:[%s2809 + $0xf4] sm:$0xf]
        %v2872 = vld [vmem:[%s2809 + $0xf8] sm:$0xf]
        %v2873 = vld [vmem:[%s2809 + $0xfc] sm:$0xf]
        %v2874 = vld [vmem:[%s2809 + $0x100] sm:$0xf]
        %v2875 = vld [vmem:[%s2809 + $0x104] sm:$0xf]
        %v2876 = vld [vmem:[%s2809 + $0x108] sm:$0xf]
        %v2877 = vld [vmem:[%s2809 + $0x10c] sm:$0xf]
        %v2878 = vld [vmem:[%s2809 + $0x110] sm:$0xf]
        %v2879 = vld [vmem:[%s2809 + $0x114] sm:$0xf]
        %v2880 = vld [vmem:[%s2809 + $0x118] sm:$0xf]
        %v2881 = vld [vmem:[%s2809 + $0x11c] sm:$0xf]
        %v2954 = vunpack.c.l.b16 %v2810
        %v2955 = vunpack.c.l.b16 %v2811
        %v2956 = vunpack.c.l.b16 %v2812
        %v2957 = vunpack.c.l.b16 %v2813
        %v2958 = vunpack.c.l.b16 %v2814
        %v2959 = vunpack.c.l.b16 %v2815
        %v2960 = vunpack.c.l.b16 %v2816
        %v2961 = vunpack.c.l.b16 %v2817
        %v2962 = vunpack.c.l.b16 %v2818
        %v2963 = vunpack.c.l.b16 %v2819
        %v2964 = vunpack.c.l.b16 %v2820
        %v2965 = vunpack.c.l.b16 %v2821
        %v2966 = vunpack.c.l.b16 %v2822
        %v2967 = vunpack.c.l.b16 %v2823
        %v2968 = vunpack.c.l.b16 %v2824
        %v2969 = vunpack.c.l.b16 %v2825
        %v2970 = vunpack.c.l.b16 %v2826
        %v2971 = vunpack.c.l.b16 %v2827
        %v2972 = vunpack.c.l.b16 %v2828
        %v2973 = vunpack.c.l.b16 %v2829
        %v2974 = vunpack.c.l.b16 %v2830
        %v2975 = vunpack.c.l.b16 %v2831
        %v2976 = vunpack.c.l.b16 %v2832
        %v2977 = vunpack.c.l.b16 %v2833
        %v2978 = vunpack.c.l.b16 %v2834
        %v2979 = vunpack.c.l.b16 %v2835
        %v2980 = vunpack.c.l.b16 %v2836
        %v2981 = vunpack.c.l.b16 %v2837
        %v2982 = vunpack.c.l.b16 %v2838
        %v2983 = vunpack.c.l.b16 %v2839
        %v2984 = vunpack.c.l.b16 %v2840
        %v2985 = vunpack.c.l.b16 %v2841
        %v2986 = vunpack.c.l.b16 %v2842
        %v2987 = vunpack.c.l.b16 %v2843
        %v2988 = vunpack.c.l.b16 %v2844
        %v2989 = vunpack.c.l.b16 %v2845
        %v2990 = vunpack.c.l.b16 %v2846
        %v2991 = vunpack.c.l.b16 %v2847
        %v2992 = vunpack.c.l.b16 %v2848
        %v2993 = vunpack.c.l.b16 %v2849
        %v2994 = vunpack.c.l.b16 %v2850
        %v2995 = vunpack.c.l.b16 %v2851
        %v2996 = vunpack.c.l.b16 %v2852
        %v2997 = vunpack.c.l.b16 %v2853
        %v2998 = vunpack.c.l.b16 %v2854
        %v2999 = vunpack.c.l.b16 %v2855
        %v3000 = vunpack.c.l.b16 %v2856
        %v3001 = vunpack.c.l.b16 %v2857
        %v3002 = vunpack.c.l.b16 %v2858
        %v3003 = vunpack.c.l.b16 %v2859
        %v3004 = vunpack.c.l.b16 %v2860
        %v3005 = vunpack.c.l.b16 %v2861
        %v3006 = vunpack.c.l.b16 %v2862
        %v3007 = vunpack.c.l.b16 %v2863
        %v3008 = vunpack.c.l.b16 %v2864
        %v3009 = vunpack.c.l.b16 %v2865
        %v3010 = vunpack.c.l.b16 %v2866
        %v3011 = vunpack.c.l.b16 %v2867
        %v3012 = vunpack.c.l.b16 %v2868
        %v3013 = vunpack.c.l.b16 %v2869
        %v3014 = vunpack.c.l.b16 %v2870
        %v3015 = vunpack.c.l.b16 %v2871
        %v3016 = vunpack.c.l.b16 %v2872
        %v3017 = vunpack.c.l.b16 %v2873
        %v3018 = vunpack.c.l.b16 %v2874
        %v3019 = vunpack.c.l.b16 %v2875
        %v3020 = vunpack.c.l.b16 %v2876
        %v3021 = vunpack.c.l.b16 %v2877
        %v3022 = vunpack.c.l.b16 %v2878
        %v3023 = vunpack.c.l.b16 %v2879
        %v3024 = vunpack.c.l.b16 %v2880
        %v3025 = vunpack.c.l.b16 %v2881
        %v3026 = vpack.c.b16 %v2955, %v2954
        %v3027 = vpack.c.b16 %v2957, %v2956
        %v3028 = vpack.c.b16 %v2959, %v2958
        %v3029 = vpack.c.b16 %v2961, %v2960
        %v3030 = vpack.c.b16 %v2963, %v2962
        %v3031 = vpack.c.b16 %v2965, %v2964
        %v3032 = vpack.c.b16 %v2967, %v2966
        %v3033 = vpack.c.b16 %v2969, %v2968
        %v3034 = vpack.c.b16 %v2971, %v2970
        %v3035 = vpack.c.b16 %v2973, %v2972
        %v3036 = vpack.c.b16 %v2975, %v2974
        %v3037 = vpack.c.b16 %v2977, %v2976
        %v3038 = vpack.c.b16 %v2979, %v2978
        %v3039 = vpack.c.b16 %v2981, %v2980
        %v3040 = vpack.c.b16 %v2983, %v2982
        %v3041 = vpack.c.b16 %v2985, %v2984
        %v3042 = vpack.c.b16 %v2987, %v2986
        %v3043 = vpack.c.b16 %v2989, %v2988
        %v3044 = vpack.c.b16 %v2991, %v2990
        %v3045 = vpack.c.b16 %v2993, %v2992
        %v3046 = vpack.c.b16 %v2995, %v2994
        %v3047 = vpack.c.b16 %v2997, %v2996
        %v3048 = vpack.c.b16 %v2999, %v2998
        %v3049 = vpack.c.b16 %v3001, %v3000
        %v3050 = vpack.c.b16 %v3003, %v3002
        %v3051 = vpack.c.b16 %v3005, %v3004
        %v3052 = vpack.c.b16 %v3007, %v3006
        %v3053 = vpack.c.b16 %v3009, %v3008
        %v3054 = vpack.c.b16 %v3011, %v3010
        %v3055 = vpack.c.b16 %v3013, %v3012
        %v3056 = vpack.c.b16 %v3015, %v3014
        %v3057 = vpack.c.b16 %v3017, %v3016
        %v3058 = vpack.c.b16 %v3019, %v3018
        %v3059 = vpack.c.b16 %v3021, %v3020
        %v3060 = vpack.c.b16 %v3023, %v3022
        %v3061 = vpack.c.b16 %v3025, %v3024
        %v3099 = vsel %vm470, %v2796, 0
        %v3102 = vsel %vm470, %v2800, 0
        %v3105 = vsel %vm470, %v2804, 0
        %v3108 = vsel %vm470, %v2808, 0
        %3110 = vmatprep.subr.bf16.mxu0 0
        %3111 = vmatpush1.bf16.msra.mxu0 %v3033
        %3112 = vmatprep.subr.bf16.mxu0 0
        %3113 = vmatpush1.bf16.msra.mxu0 %v3032
        %3114 = vmatprep.subr.bf16.mxu0 0
        %3115 = vmatpush1.bf16.msra.mxu0 %v3031
        %3116 = vmatprep.subr.bf16.mxu0 0
        %3117 = vmatpush1.bf16.msra.mxu0 %v3030
        %3118 = vmatprep.subr.bf16.mxu0 0
        %3119 = vmatpush1.bf16.msra.mxu0 %v3029
        %3120 = vmatprep.subr.bf16.mxu0 0
        %3121 = vmatpush1.bf16.msra.mxu0 %v3028
        %3122 = vmatprep.subr.bf16.mxu0 0
        %3123 = vmatpush1.bf16.msra.mxu0 %v3027
        %3124 = vmatprep.subr.bf16.mxu0 0
        %3125 = vmatpush1.bf16.msra.mxu0 %v3026
        %3126 = vmatprep.subr.bf16.mxu0 0
        %3127 = vmatpush2.bf16.msra.mxu0 %v3041
        %3128 = vmatprep.subr.bf16.mxu0 0
        %3129 = vmatpush2.bf16.msra.mxu0 %v3040
        %3130 = vmatprep.subr.bf16.mxu0 0
        %3131 = vmatpush2.bf16.msra.mxu0 %v3039
        %3132 = vmatprep.subr.bf16.mxu0 0
        %3133 = vmatpush2.bf16.msra.mxu0 %v3038
        %3134 = vmatprep.subr.bf16.mxu0 0
        %3135 = vmatpush2.bf16.msra.mxu0 %v3037
        %3136 = vmatprep.subr.bf16.mxu0 0
        %3137 = vmatpush2.bf16.msra.mxu0 %v3036
        %3138 = vmatprep.subr.bf16.mxu0 0
        %3139 = vmatpush2.bf16.msra.mxu0 %v3035
        %3140 = vmatprep.subr.bf16.mxu0 0
        %3141 = vmatpush2.bf16.msra.mxu0 %v3034
        %3142 = vmatprep.mubr.bf16.mxu0 %v2793
        %3143 = vmatmul.mubr.bf16.gmra.mxu0 %v2792
        %v3144 = vpop.f32.mrf.mxu0
        %v3145 = vadd.f32 0.0, %v3144
        %v3146 = vpop.f32.mrf.mxu0
        %v3147 = vpop.f32.mrf.mxu0
        %v3148 = vadd.f32 0.0, %v3147
        %v3149 = vpop.f32.mrf.mxu0
        %3150 = vmatprep.mubr.bf16.mxu0 %v2797
        %3151 = vmatmul.mubr.bf16.gmra.mxu0 %v2795
        %v3152 = vpop.f32.mrf.mxu0
        %v3153 = vadd.f32 0.0, %v3152
        %v3154 = vpop.f32.mrf.mxu0
        %v3155 = vpop.f32.mrf.mxu0
        %v3156 = vadd.f32 0.0, %v3155
        %v3157 = vpop.f32.mrf.mxu0
        %3158 = vmatprep.mubr.bf16.mxu0 %v2801
        %3159 = vmatmul.mubr.bf16.gmra.mxu0 %v2799
        %v3160 = vpop.f32.mrf.mxu0
        %v3161 = vadd.f32 0.0, %v3160
        %v3162 = vpop.f32.mrf.mxu0
        %v3163 = vpop.f32.mrf.mxu0
        %v3164 = vadd.f32 0.0, %v3163
        %v3165 = vpop.f32.mrf.mxu0
        %3166 = vmatprep.mubr.bf16.mxu0 %v2805
        %3167 = vmatmul.mubr.bf16.gmra.mxu0 %v2803
        %v3168 = vpop.f32.mrf.mxu0
        %v3169 = vadd.f32 0.0, %v3168
        %v3170 = vpop.f32.mrf.mxu0
        %v3171 = vpop.f32.mrf.mxu0
        %v3172 = vadd.f32 0.0, %v3171
        %v3173 = vpop.f32.mrf.mxu0
        %3174 = vdwg.mxu0
        %3175 = vmatprep.subr.bf16.mxu0 0
        %3176 = vmatpush1.bf16.msra.mxu0 %v3049
        %3177 = vmatprep.subr.bf16.mxu0 0
        %3178 = vmatpush1.bf16.msra.mxu0 %v3048
        %3179 = vmatprep.subr.bf16.mxu0 0
        %3180 = vmatpush1.bf16.msra.mxu0 %v3047
        %3181 = vmatprep.subr.bf16.mxu0 0
        %3182 = vmatpush1.bf16.msra.mxu0 %v3046
        %3183 = vmatprep.subr.bf16.mxu0 0
        %3184 = vmatpush1.bf16.msra.mxu0 %v3045
        %3185 = vmatprep.subr.bf16.mxu0 0
        %3186 = vmatpush1.bf16.msra.mxu0 %v3044
        %3187 = vmatprep.subr.bf16.mxu0 0
        %3188 = vmatpush1.bf16.msra.mxu0 %v3043
        %3189 = vmatprep.subr.bf16.mxu0 0
        %3190 = vmatpush1.bf16.msra.mxu0 %v3042
        %3191 = vmatprep.subr.bf16.mxu0 0
        %3192 = vmatpush2.bf16.msra.mxu0 %v3057
        %3193 = vmatprep.subr.bf16.mxu0 0
        %3194 = vmatpush2.bf16.msra.mxu0 %v3056
        %3195 = vmatprep.subr.bf16.mxu0 0
        %3196 = vmatpush2.bf16.msra.mxu0 %v3055
        %3197 = vmatprep.subr.bf16.mxu0 0
        %3198 = vmatpush2.bf16.msra.mxu0 %v3054
        %3199 = vmatprep.subr.bf16.mxu0 0
        %3200 = vmatpush2.bf16.msra.mxu0 %v3053
        %3201 = vmatprep.subr.bf16.mxu0 0
        %3202 = vmatpush2.bf16.msra.mxu0 %v3052
        %3203 = vmatprep.subr.bf16.mxu0 0
        %3204 = vmatpush2.bf16.msra.mxu0 %v3051
        %3205 = vmatprep.subr.bf16.mxu0 0
        %3206 = vmatpush2.bf16.msra.mxu0 %v3050
        %3207 = vmatprep.mubr.bf16.mxu0 %v2795
        %3208 = vmatmul.mubr.bf16.gmra.mxu0 %v2794
        %v3209 = vpop.f32.mrf.mxu0
        %v3210 = vadd.f32 %v3145, %v3209
        %v3211 = vpop.f32.mrf.mxu0
        %v3212 = vpop.f32.mrf.mxu0
        %v3213 = vadd.f32 %v3148, %v3212
        %v3214 = vpop.f32.mrf.mxu0
        %3215 = vmatprep.mubr.bf16.mxu0 %v2799
        %3216 = vmatmul.mubr.bf16.gmra.mxu0 %v2798
        %v3217 = vpop.f32.mrf.mxu0
        %v3218 = vadd.f32 %v3153, %v3217
        %v3219 = vpop.f32.mrf.mxu0
        %v3220 = vpop.f32.mrf.mxu0
        %v3221 = vadd.f32 %v3156, %v3220
        %v3222 = vpop.f32.mrf.mxu0
        %3223 = vmatprep.mubr.bf16.mxu0 %v2803
        %3224 = vmatmul.mubr.bf16.gmra.mxu0 %v2802
        %v3225 = vpop.f32.mrf.mxu0
        %v3226 = vadd.f32 %v3161, %v3225
        %v3227 = vpop.f32.mrf.mxu0
        %v3228 = vpop.f32.mrf.mxu0
        %v3229 = vadd.f32 %v3164, %v3228
        %v3230 = vpop.f32.mrf.mxu0
        %3231 = vmatprep.mubr.bf16.mxu0 %v2807
        %3232 = vmatmul.mubr.bf16.gmra.mxu0 %v2806
        %v3233 = vpop.f32.mrf.mxu0
        %v3234 = vadd.f32 %v3169, %v3233
        %v3235 = vpop.f32.mrf.mxu0
        %v3236 = vpop.f32.mrf.mxu0
        %v3237 = vadd.f32 %v3172, %v3236
        %v3238 = vpop.f32.mrf.mxu0
        %3239 = vdwg.mxu0
        %3240 = vmatprep.subr.bf16.mxu0 0
        %3241 = vmatpush1.bf16.msra.mxu0 0
        %3242 = vmatprep.subr.bf16.mxu0 0
        %3243 = vmatpush1.bf16.msra.mxu0 0
        %3244 = vmatprep.subr.bf16.mxu0 0
        %3245 = vmatpush1.bf16.msra.mxu0 0
        %3246 = vmatprep.subr.bf16.mxu0 0
        %3247 = vmatpush1.bf16.msra.mxu0 0
        %3248 = vmatprep.subr.bf16.mxu0 0
        %3249 = vmatpush1.bf16.msra.mxu0 %v3061
        %3250 = vmatprep.subr.bf16.mxu0 0
        %3251 = vmatpush1.bf16.msra.mxu0 %v3060
        %3252 = vmatprep.subr.bf16.mxu0 0
        %3253 = vmatpush1.bf16.msra.mxu0 %v3059
        %3254 = vmatprep.subr.bf16.mxu0 0
        %3255 = vmatpush1.bf16.msra.mxu0 %v3058
        %3256 = vmatprep.subr.bf16.mxu0 0
        %3257 = vmatpush2.bf16.msra.mxu0 0
        %3258 = vmatprep.subr.bf16.mxu0 0
        %3259 = vmatpush2.bf16.msra.mxu0 0
        %3260 = vmatprep.subr.bf16.mxu0 0
        %3261 = vmatpush2.bf16.msra.mxu0 0
        %3262 = vmatprep.subr.bf16.mxu0 0
        %3263 = vmatpush2.bf16.msra.mxu0 0
        %3264 = vmatprep.subr.bf16.mxu0 0
        %3265 = vmatpush2.bf16.msra.mxu0 0
        %3266 = vmatprep.subr.bf16.mxu0 0
        %3267 = vmatpush2.bf16.msra.mxu0 0
        %3268 = vmatprep.subr.bf16.mxu0 0
        %3269 = vmatpush2.bf16.msra.mxu0 0
        %3270 = vmatprep.subr.bf16.mxu0 0
        %3271 = vmatpush2.bf16.msra.mxu0 0
        %3272 = vmatprep.mubr.bf16.mxu0 0
        %3273 = vmatmul.mubr.bf16.gmra.mxu0 %v3099
        %v3274 = vpop.f32.mrf.mxu0
        %v3275 = vadd.f32 %v3210, %v3274
        %v3276 = vpop.f32.mrf.mxu0
        %v3277 = vpop.f32.mrf.mxu0
        %v3278 = vadd.f32 %v3213, %v3277
        %v3279 = vpop.f32.mrf.mxu0
        %3280 = vmatprep.mubr.bf16.mxu0 0
        %3281 = vmatmul.mubr.bf16.gmra.mxu0 %v3102
        %v3282 = vpop.f32.mrf.mxu0
        %v3283 = vadd.f32 %v3218, %v3282
        %v3284 = vpop.f32.mrf.mxu0
        %v3285 = vpop.f32.mrf.mxu0
        %v3286 = vadd.f32 %v3221, %v3285
        %v3287 = vpop.f32.mrf.mxu0
        %3288 = vmatprep.mubr.bf16.mxu0 0
        %3289 = vmatmul.mubr.bf16.gmra.mxu0 %v3105
        %v3290 = vpop.f32.mrf.mxu0
        %v3291 = vadd.f32 %v3226, %v3290
        %v3292 = vpop.f32.mrf.mxu0
        %v3293 = vpop.f32.mrf.mxu0
        %v3294 = vadd.f32 %v3229, %v3293
        %v3295 = vpop.f32.mrf.mxu0
        %3296 = vmatprep.mubr.bf16.mxu0 0
        %3297 = vmatmul.mubr.bf16.gmra.mxu0 %v3108
        %v3298 = vpop.f32.mrf.mxu0
        %v3299 = vadd.f32 %v3234, %v3298
        %v3300 = vpop.f32.mrf.mxu0
        %v3301 = vpop.f32.mrf.mxu0
        %v3302 = vadd.f32 %v3237, %v3301
        %v3303 = vpop.f32.mrf.mxu0
        %3304 = vdwg.mxu0
        %v3305 = vld [vmem:[%s2 + $0x3] sm:$0x1]
        %v3306 = vlaneseq
        %v3307 = vshrl.u32 %v3306, 7
        %v3308 = vsub.s32 0, %v3307
        %v3309 = vrot.slane %v3305, %v3308
        %v3310 = vmul.f32 %v3275, %v3309
        %v3311 = vmul.f32 %v3278, %v3309
        %v3312 = vmul.f32 %v3283, %v3309
        %v3313 = vmul.f32 %v3286, %v3309
        %v3314 = vmul.f32 %v3291, %v3309
        %v3315 = vmul.f32 %v3294, %v3309
        %v3316 = vmul.f32 %v3299, %v3309
        %v3317 = vmul.f32 %v3302, %v3309
        %v3318 = vld [vmem:[%s3 + $0x3] sm:$0x1]
        %v3319 = vlaneseq
        %v3320 = vshrl.u32 %v3319, 7
        %v3321 = vsub.s32 0, %v3320
        %v3322 = vrot.slane %v3318, %v3321
        %v3323 = vadd.f32 %v3310, %v3322
        %v3324 = vadd.f32 %v3311, %v3322
        %v3325 = vadd.f32 %v3312, %v3322
        %v3326 = vadd.f32 %v3313, %v3322
        %v3327 = vadd.f32 %v3314, %v3322
        %v3328 = vadd.f32 %v3315, %v3322
        %v3329 = vadd.f32 %v3316, %v3322
        %v3330 = vadd.f32 %v3317, %v3322
        %v3331 = vadd.f32 %v3323, %v1805
        %v3332 = vadd.f32 %v3324, %v1806
        %v3333 = vadd.f32 %v3325, %v1807
        %v3334 = vadd.f32 %v3326, %v1808
        %v3335 = vadd.f32 %v3327, %v1809
        %v3336 = vadd.f32 %v3328, %v1810
        %v3337 = vadd.f32 %v3329, %v1811
        %v3338 = vadd.f32 %v3330, %v1812
        %v3339 = vmax.f32 %v3331, 0.0
        %v3340 = vmax.f32 %v3332, 0.0
        %v3341 = vmax.f32 %v3333, 0.0
        %v3342 = vmax.f32 %v3334, 0.0
        %v3343 = vmax.f32 %v3335, 0.0
        %v3344 = vmax.f32 %v3336, 0.0
        %v3345 = vmax.f32 %v3337, 0.0
        %v3346 = vmax.f32 %v3338, 0.0
        %v3348 = vsel %vm470, 0.015625, 0
        %3350 = vmatprep.subr.mxu0 0.0
        %3351 = vmatpush1.msra.mxu0 0.0
        %3352 = vmatprep.subr.mxu0 0.0
        %3353 = vmatpush1.msra.mxu0 0.0
        %3354 = vmatprep.subr.mxu0 0.0
        %3355 = vmatpush1.msra.mxu0 0.0
        %3356 = vmatprep.subr.mxu0 0.0
        %3357 = vmatpush1.msra.mxu0 0.0
        %3358 = vmatprep.subr.mxu0 0.0
        %3359 = vmatpush1.msra.mxu0 0.0
        %3360 = vmatprep.subr.mxu0 0.0
        %3361 = vmatpush1.msra.mxu0 0.0
        %3362 = vmatprep.subr.mxu0 0.0
        %3363 = vmatpush1.msra.mxu0 0.0
        %3364 = vmatprep.subr.mxu0 0.0
        %3365 = vmatpush1.msra.mxu0 0.0
        %3366 = vmatprep.subr.mxu0 0.0
        %3367 = vmatpush1.msra.mxu0 %v3346
        %3368 = vmatprep.subr.mxu0 0.0
        %3369 = vmatpush1.msra.mxu0 %v3345
        %3370 = vmatprep.subr.mxu0 0.0
        %3371 = vmatpush1.msra.mxu0 %v3344
        %3372 = vmatprep.subr.mxu0 0.0
        %3373 = vmatpush1.msra.mxu0 %v3343
        %3374 = vmatprep.subr.mxu0 0.0
        %3375 = vmatpush1.msra.mxu0 %v3342
        %3376 = vmatprep.subr.mxu0 0.0
        %3377 = vmatpush1.msra.mxu0 %v3341
        %3378 = vmatprep.subr.mxu0 0.0
        %3379 = vmatpush1.msra.mxu0 %v3340
        %3380 = vmatprep.subr.mxu0 0.0
        %3381 = vmatpush1.msra.mxu0 %v3339
        %3382 = vmatprep.subr.mxu0 0.0
        %3383 = vmatpush2.msra.mxu0 0.0
        %3384 = vmatprep.subr.mxu0 0.0
        %3385 = vmatpush2.msra.mxu0 0.0
        %3386 = vmatprep.subr.mxu0 0.0
        %3387 = vmatpush2.msra.mxu0 0.0
        %3388 = vmatprep.subr.mxu0 0.0
        %3389 = vmatpush2.msra.mxu0 0.0
        %3390 = vmatprep.subr.mxu0 0.0
        %3391 = vmatpush2.msra.mxu0 0.0
        %3392 = vmatprep.subr.mxu0 0.0
        %3393 = vmatpush2.msra.mxu0 0.0
        %3394 = vmatprep.subr.mxu0 0.0
        %3395 = vmatpush2.msra.mxu0 0.0
        %3396 = vmatprep.subr.mxu0 0.0
        %3397 = vmatpush2.msra.mxu0 0.0
        %3398 = vmatprep.subr.mxu0 0.0
        %3399 = vmatpush2.msra.mxu0 0.0
        %3400 = vmatprep.subr.mxu0 0.0
        %3401 = vmatpush2.msra.mxu0 0.0
        %3402 = vmatprep.subr.mxu0 0.0
        %3403 = vmatpush2.msra.mxu0 0.0
        %3404 = vmatprep.subr.mxu0 0.0
        %3405 = vmatpush2.msra.mxu0 0.0
        %3406 = vmatprep.subr.mxu0 0.0
        %3407 = vmatpush2.msra.mxu0 0.0
        %3408 = vmatprep.subr.mxu0 0.0
        %3409 = vmatpush2.msra.mxu0 0.0
        %3410 = vmatprep.subr.mxu0 0.0
        %3411 = vmatpush2.msra.mxu0 0.0
        %3412 = vmatprep.subr.mxu0 0.0
        %3413 = vmatpush2.msra.mxu0 0.0
        %3414 = vmatprep.mubr.f32.mxu0 0.0
        %3415 = vmatmul.mubr.f32.gmra.mxu0 %v3348
        %v3416 = vpop.f32.mrf.mxu0
        %v3417 = vadd.f32 0.0, %v3416
        %v3418 = vpop.f32.mrf.mxu0
        %3419 = vdwg.mxu0
        %v3420 = vld [vmem:[%s4] sm:$0xff]
        %v3421 = vld [vmem:[%s4 + $0x8] sm:$0xff]
        %v3422 = vld [vmem:[%s4 + $0x10] sm:$0xff]
        %v3423 = vld [vmem:[%s4 + $0x18] sm:$0xff]
        %v3424 = vld [vmem:[%s4 + $0x20] sm:$0xff]
        %v3425 = vld [vmem:[%s4 + $0x28] sm:$0xff]
        %v3426 = vld [vmem:[%s4 + $0x30] sm:$0xff]
        %v3427 = vld [vmem:[%s4 + $0x38] sm:$0xff]
        %v3428 = vld [vmem:[%s5] sm:$0x1]
        %v3430 = vsel %vm470, %v3417, 0
        %3432 = vmatprep.subr.mxu0 0.0
        %3433 = vmatpush1.msra.mxu0 0.0
        %3434 = vmatprep.subr.mxu0 0.0
        %3435 = vmatpush1.msra.mxu0 0.0
        %3436 = vmatprep.subr.mxu0 0.0
        %3437 = vmatpush1.msra.mxu0 0.0
        %3438 = vmatprep.subr.mxu0 0.0
        %3439 = vmatpush1.msra.mxu0 0.0
        %3440 = vmatprep.subr.mxu0 0.0
        %3441 = vmatpush1.msra.mxu0 0.0
        %3442 = vmatprep.subr.mxu0 0.0
        %3443 = vmatpush1.msra.mxu0 0.0
        %3444 = vmatprep.subr.mxu0 0.0
        %3445 = vmatpush1.msra.mxu0 0.0
        %3446 = vmatprep.subr.mxu0 0.0
        %3447 = vmatpush1.msra.mxu0 0.0
        %3448 = vmatprep.subr.mxu0 0.0
        %3449 = vmatpush1.msra.mxu0 %v3427
        %3450 = vmatprep.subr.mxu0 0.0
        %3451 = vmatpush1.msra.mxu0 %v3426
        %3452 = vmatprep.subr.mxu0 0.0
        %3453 = vmatpush1.msra.mxu0 %v3425
        %3454 = vmatprep.subr.mxu0 0.0
        %3455 = vmatpush1.msra.mxu0 %v3424
        %3456 = vmatprep.subr.mxu0 0.0
        %3457 = vmatpush1.msra.mxu0 %v3423
        %3458 = vmatprep.subr.mxu0 0.0
        %3459 = vmatpush1.msra.mxu0 %v3422
        %3460 = vmatprep.subr.mxu0 0.0
        %3461 = vmatpush1.msra.mxu0 %v3421
        %3462 = vmatprep.subr.mxu0 0.0
        %3463 = vmatpush1.msra.mxu0 %v3420
        %3464 = vmatprep.subr.mxu0 0.0
        %3465 = vmatpush2.msra.mxu0 0.0
        %3466 = vmatprep.subr.mxu0 0.0
        %3467 = vmatpush2.msra.mxu0 0.0
        %3468 = vmatprep.subr.mxu0 0.0
        %3469 = vmatpush2.msra.mxu0 0.0
        %3470 = vmatprep.subr.mxu0 0.0
        %3471 = vmatpush2.msra.mxu0 0.0
        %3472 = vmatprep.subr.mxu0 0.0
        %3473 = vmatpush2.msra.mxu0 0.0
        %3474 = vmatprep.subr.mxu0 0.0
        %3475 = vmatpush2.msra.mxu0 0.0
        %3476 = vmatprep.subr.mxu0 0.0
        %3477 = vmatpush2.msra.mxu0 0.0
        %3478 = vmatprep.subr.mxu0 0.0
        %3479 = vmatpush2.msra.mxu0 0.0
        %3480 = vmatprep.subr.mxu0 0.0
        %3481 = vmatpush2.msra.mxu0 0.0
        %3482 = vmatprep.subr.mxu0 0.0
        %3483 = vmatpush2.msra.mxu0 0.0
        %3484 = vmatprep.subr.mxu0 0.0
        %3485 = vmatpush2.msra.mxu0 0.0
        %3486 = vmatprep.subr.mxu0 0.0
        %3487 = vmatpush2.msra.mxu0 0.0
        %3488 = vmatprep.subr.mxu0 0.0
        %3489 = vmatpush2.msra.mxu0 0.0
        %3490 = vmatprep.subr.mxu0 0.0
        %3491 = vmatpush2.msra.mxu0 0.0
        %3492 = vmatprep.subr.mxu0 0.0
        %3493 = vmatpush2.msra.mxu0 0.0
        %3494 = vmatprep.subr.mxu0 0.0
        %3495 = vmatpush2.msra.mxu0 0.0
        %3496 = vmatprep.mubr.f32.mxu0 0.0
        %3497 = vmatmul.mubr.f32.gmra.mxu0 %v3430
        %v3498 = vpop.f32.mrf.mxu0
        %v3499 = vadd.f32 %v3428, %v3498
        %v3500 = vpop.f32.mrf.mxu0
        %3501 = vdwg.mxu0
        %3502 = vst [vmem:[%s243] sm:$0x1] %v3499
        %s3503 = sand.u32 %s159, 1
        %s3504 = scalar_lea.sflag [#allocation3], %s3503
        %s3505 = sand.u32 %s159, 1
        %s3506 = scalar_lea.vmem [#allocation2], %s3505
        // Predicated region
        $region45: #{tpu_custom_call.1} parent=43 // pred_check
          %p3507 = pneg %p169
        $region46: #{tpu_custom_call.1} parent=43 // pred_check_branch
          %3509 = sbr.rel (%p3507) target = $region48
        $region47: #{tpu_custom_call.1} parent=43 // pred_region
          %s3511 = ssub.s32 16, 16
          %3512 = vsyncadd %s3504, %s3511
          %s3513 = smul.addr %s20, 16
          %s3514 = scalar_lea.hbm %s6, %s3513
          %s3516 = sshll.u32 %s3506, 4
          %s3517 = int_to_ptr.vmem [resolvable:$true] %s3516
          %3519 = dma.vmem_to_hbm [thread:$0]  %s3517, 16, %s3514, %s3504
        $region48: #{tpu_custom_call.1} parent=43 // pred_fallthru
          _
      $region44: #{tpu_custom_call.1} parent=5 // pred_fallthru
        _
      %p3520 = scmp.le.s32.totalorder 2, %s15
      // Predicated region
      $region49: #{tpu_custom_call.1} parent=5 // pred_check
        %p3521 = pneg %p3520
      $region50: #{tpu_custom_call.1} parent=5 // pred_check_branch
        %3523 = sbr.rel (%p3521) target = $region52
      $region51: #{tpu_custom_call.1} parent=5 // pred_region
        %s3524 = ssub.s32 %s15, 2
        // Predicated region
        $region53: #{tpu_custom_call.1} parent=51 // pred_check
          %p3525 = pneg %p175
        $region54: #{tpu_custom_call.1} parent=51 // pred_check_branch
          %3527 = sbr.rel (%p3525) target = $region56
        $region55: #{tpu_custom_call.1} parent=51 // pred_region
          %s3528 = sand.u32 %s160, 1
          %s3529 = scalar_lea.sflag [#allocation3], %s3528
          %s3530 = sand.u32 %s160, 1
          %s3531 = scalar_lea.vmem [#allocation2], %s3530
          %3532 = dma.done %s3529, 16
        $region56: #{tpu_custom_call.1} parent=51 // pred_fallthru
          _
      $region52: #{tpu_custom_call.1} parent=5 // pred_fallthru
        _
    $region6: #{tpu_custom_call.1} parent=1 // loop_footer
      %s19 = sadd.s32 1, %s15
    $region7: #{tpu_custom_call.1} parent=1 // loop_footer_branch
      %14 = sbr.rel target = $region3
    $region8: #{tpu_custom_call.1} parent=1 // loop_exit
      _
    %3533 = vsyncpa [#allocation3], 1
    %s3534 = scalar_lea.sflag [#allocation3], 1
    %3535 = vsyncpa %s3534, 1

</llo_original>
